<compile_context>
chip_gen: v7x
topology: tpu7x:2x2x1
jax: 0.10.0
libtpu: 0.0.40
codegen_flags: <defaults>
</compile_context>

<pallas_src>
import jax
import jax.numpy as jnp
from jax.experimental import pallas as pl
from jax.experimental.pallas import tpu as pltpu

F1 = [4, 3, 2, 1]
F2 = [1, 2, 2, 3]


# --------------------------- Pallas kernels ---------------------------------

def _conv_relu_kernel(w_ref, b_ref, p_ref, o_ref):
    # w: (Cout, K) bf16   b: (Cout, 1) f32   p: (K, Lp) bf16   o: (Cout, Lp) f32
    acc = jnp.dot(w_ref[...], p_ref[...], preferred_element_type=jnp.float32)
    o_ref[...] = jnp.maximum(acc + b_ref[...], 0.0)


def conv_relu_matmul(w, b, p):
    """relu(w @ p + b) as a single whole-batch MXU matmul (lane dim pre-padded)."""
    Cout, K = w.shape
    _, Lp = p.shape
    return pl.pallas_call(
        _conv_relu_kernel,
        out_shape=jax.ShapeDtypeStruct((Cout, Lp), jnp.float32),
        grid=(1,),
        in_specs=[
            pl.BlockSpec((Cout, K), lambda i: (0, 0)),
            pl.BlockSpec((Cout, 1), lambda i: (0, 0)),
            pl.BlockSpec((K, Lp), lambda i: (0, 0)),
        ],
        out_specs=pl.BlockSpec((Cout, Lp), lambda i: (0, 0)),
    )(w, b, p)


def _head_kernel(x_ref, m1_ref, w1_ref, b1_ref, m2_ref, w2_ref, b2_ref,
                 o_ref, acc_ref):
    # Streams the fc1 contraction dim; dropout masks (values in {0., 2.}) are inputs.
    k = pl.program_id(0)

    @pl.when(k == 0)
    def _():
        acc_ref[...] = jnp.zeros_like(acc_ref)

    # dropout1 applied in f32, cast to bf16 only for the MXU operand.
    xd = (x_ref[...] * m1_ref[...]).astype(jnp.bfloat16)
    acc_ref[...] += jnp.dot(xd, w1_ref[...], preferred_element_type=jnp.float32)

    @pl.when(k == pl.num_programs(0) - 1)
    def _():
        h = (acc_ref[...] + b1_ref[...]) * m2_ref[...]          # fc1 bias + dropout2
        o_ref[...] = (jnp.dot(h.astype(jnp.bfloat16), w2_ref[...],
                              preferred_element_type=jnp.float32)
                      + b2_ref[...])


def mlp_head(x, m1, w1, b1, m2, w2, b2, *, tk=3456):
    # x: (N, F) f32, m1: (N, F) f32, w1: (F, H) bf16, b1: (1, H) f32,
    # m2: (N, H) f32, w2: (H, C) bf16, b2: (1, C) f32
    N, F = x.shape
    H = w1.shape[1]
    C = w2.shape[1]
    nk = F // tk
    return pl.pallas_call(
        _head_kernel,
        out_shape=jax.ShapeDtypeStruct((N, C), jnp.float32),
        grid=(nk,),
        in_specs=[
            pl.BlockSpec((N, tk), lambda k: (0, k)),
            pl.BlockSpec((N, tk), lambda k: (0, k)),
            pl.BlockSpec((tk, H), lambda k: (k, 0)),
            pl.BlockSpec((1, H), lambda k: (0, 0)),
            pl.BlockSpec((N, H), lambda k: (0, 0)),
            pl.BlockSpec((H, C), lambda k: (0, 0)),
            pl.BlockSpec((1, C), lambda k: (0, 0)),
        ],
        out_specs=pl.BlockSpec((N, C), lambda k: (0, 0)),
        scratch_shapes=[pltpu.VMEM((N, H), jnp.float32)],
        compiler_params=pltpu.CompilerParams(
            dimension_semantics=("arbitrary",)),
    )(x, m1, w1, b1, m2, w2, b2)


# ------------------------------- JAX glue ------------------------------------

def _im2col_cf(y, kh, kw):
    # y: (C, N, H, W) -> patches (C*kh*kw, N*Ho*Wo); K ordering (c, dh, dw)
    # matches torch Conv2d weight (Cout, C, kh, kw) flattened over (C, kh, kw).
    C, N, H, W = y.shape
    Ho, Wo = H - kh + 1, W - kw + 1
    cols = [y[:, :, dh:dh + Ho, dw:dw + Wo]
            for dh in range(kh) for dw in range(kw)]
    p = jnp.stack(cols, axis=1)                       # (C, kh*kw, N, Ho, Wo)
    return p.reshape(C * kh * kw, N * Ho * Wo), (Ho, Wo)


def _pad_lanes(p, mult=128):
    L = p.shape[-1]
    Lp = ((L + mult - 1) // mult) * mult
    if Lp != L:
        p = jnp.pad(p, ((0, 0), (0, Lp - L)))
    return p


def _maxpool_h2_cf(y):
    # MaxPool2d(kernel_size=(2,1)) on (C, N, H, W), stride (2,1), floor mode.
    H2 = y.shape[2] // 2
    return jnp.maximum(y[:, :, 0:2 * H2:2, :], y[:, :, 1:2 * H2:2, :])


def _branch(x_cf, w1, b1, w2, b2, kh1, kh2, N):
    # Conv2d(in, 32, (kh1, 3)) + ReLU
    p1, (H1, W1) = _im2col_cf(x_cf, kh1, 3)
    L1 = p1.shape[1]
    y1 = conv_relu_matmul(w1, b1, _pad_lanes(p1).astype(jnp.bfloat16))
    y1 = y1[:, :L1].reshape(32, N, H1, W1)
    y1 = _maxpool_h2_cf(y1)                                   # MaxPool2d((2,1))
    # Conv2d(32, 64, (kh2, 3)) + ReLU
    p2, (H3, W3) = _im2col_cf(y1, kh2, 3)
    L2 = p2.shape[1]
    y2 = conv_relu_matmul(w2, b2, _pad_lanes(p2).astype(jnp.bfloat16))
    y2 = y2[:, :L2].reshape(64, N, H3, W3)
    y2 = _maxpool_h2_cf(y2)                                   # MaxPool2d((2,1))
    # Flatten() in PyTorch (c, h, w) per-sample order.
    return y2.transpose(1, 0, 2, 3).reshape(N, -1)


def init_params(key, input_channels, classes):
    params = {"branches": []}
    for i in range(4):
        key, k1, k2, k3, k4 = jax.random.split(key, 5)
        w1 = jax.random.normal(k1, (32, input_channels, F1[i], 3), jnp.float32) * 0.05
        b1 = jax.random.normal(k2, (32,), jnp.float32) * 0.05
        w2 = jax.random.normal(k3, (64, 32, F2[i], 3), jnp.float32) * 0.05
        b2 = jax.random.normal(k4, (64,), jnp.float32) * 0.05
        # Stored kernel-ready: flattened (Cout, Cin*kh*kw) bf16 weights, (Cout,1) f32 bias.
        params["branches"].append((
            w1.reshape(32, -1).astype(jnp.bfloat16), b1.reshape(32, 1),
            w2.reshape(64, -1).astype(jnp.bfloat16), b2.reshape(64, 1),
        ))
    key, k5, k6, k7, k8 = jax.random.split(key, 5)
    # fc layers stored pre-transposed (in, out) and in bf16: no per-call transpose,
    # half the dominant HBM read (MXU accumulates in f32).
    params["fc1_w"] = (jax.random.normal(k5, (128, 13824), jnp.float32) * 0.01
                       ).T.astype(jnp.bfloat16)
    params["fc1_b"] = (jax.random.normal(k6, (128,), jnp.float32) * 0.01).reshape(1, -1)
    params["out_w"] = (jax.random.normal(k7, (classes, 128), jnp.float32) * 0.01
                       ).T.astype(jnp.bfloat16)
    params["out_b"] = (jax.random.normal(k8, (classes,), jnp.float32) * 0.01).reshape(1, -1)
    return params


def _mlcnn_forward(params, x, dropout_key):
    N = x.shape[0]
    x_cf = x.transpose(1, 0, 2, 3)                            # (C, N, H, W)
    feats = []
    for i in range(4):
        w1, b1, w2, b2 = params["branches"][i]
        feats.append(_branch(x_cf, w1, b1, w2, b2, F1[i], F2[i], N))
    concat = jnp.concatenate(feats, axis=1)                   # (N, 13824)
    # TODO(synk): dropout masks come from jax.random (Bernoulli(0.5)*2 training
    # semantics), not torch's RNG stream.
    k1, k2 = jax.random.split(dropout_key)
    m1 = jnp.where(jax.random.bernoulli(k1, 0.5, (N, concat.shape[1])),
                   2.0, 0.0).astype(jnp.float32)
    m2 = jnp.where(jax.random.bernoulli(k2, 0.5, (N, 128)),
                   2.0, 0.0).astype(jnp.float32)
    return mlp_head(concat, m1,
                    params["fc1_w"], params["fc1_b"],
                    m2,
                    params["out_w"], params["out_b"])


mlcnn_forward = jax.jit(_mlcnn_forward)


if __name__ == "__main__":
    input_channels, classes = 4, 10
    key = jax.random.PRNGKey(0)
    kp, kx, kd = jax.random.split(key, 3)
    params = init_params(kp, input_channels, classes)
    # H=76, W=7 -> 4 branches * (64*18*3) = 13824 = fc1.in_features
    x = jax.random.normal(kx, (2, input_channels, 76, 7), jnp.float32)
    out = mlcnn_forward(params, x, kd)
    out = jax.block_until_ready(out)
    assert out.shape == (2, classes) and out.dtype == jnp.float32
    print("KERNEL_OK")
</pallas_src>

<mosaic_0001>
module attributes {stable_mosaic.version = 11 : i64} {
  func.func @_conv_relu_kernel(%arg0: i32, %arg1: memref<32x12xbf16, #tpu.memory_space<vmem>>, %arg2: memref<32x1xf32, #tpu.memory_space<vmem>>, %arg3: memref<12x768xbf16, #tpu.memory_space<vmem>>, %arg4: memref<32x768xf32, #tpu.memory_space<vmem>>) attributes {dimension_semantics = [#tpu.dimension_semantics<arbitrary>], iteration_bounds = array<i64: 1>, scalar_prefetch = 0 : i64, scratch_operands = 0 : i64, tpu.core_type = #tpu.core_type<tc>, window_params = [{pipeline_mode = #tpu.pipeline_mode<synchronous>, transform_indices = @transform_0, window_bounds = array<i64: 32, 12>}, {pipeline_mode = #tpu.pipeline_mode<synchronous>, transform_indices = @transform_1, window_bounds = array<i64: 32, 1>}, {pipeline_mode = #tpu.pipeline_mode<synchronous>, transform_indices = @transform_2, window_bounds = array<i64: 12, 768>}, {pipeline_mode = #tpu.pipeline_mode<synchronous>, transform_indices = @transform_3, window_bounds = array<i64: 32, 768>}]} {
    %c0 = arith.constant 0 : index
    %c0_0 = arith.constant 0 : index
    %0 = vector.load %arg1[%c0, %c0_0] : memref<32x12xbf16, #tpu.memory_space<vmem>>, vector<32x12xbf16>
    %c0_1 = arith.constant 0 : index
    %c0_2 = arith.constant 0 : index
    %1 = vector.load %arg3[%c0_1, %c0_2] : memref<12x768xbf16, #tpu.memory_space<vmem>>, vector<12x768xbf16>
    %cst = arith.constant dense<0.000000e+00> : vector<32x768xf32>
    %2 = tpu.matmul %0, %1, %cst {dimension_numbers = #tpu.dot_dimension_numbers<[1], [0], [0], [1], [0, 0, 1, 1], [], []>} : vector<32x12xbf16>, vector<12x768xbf16>, vector<32x768xf32> -> vector<32x768xf32>
    %c0_3 = arith.constant 0 : index
    %c0_4 = arith.constant 0 : index
    %3 = vector.load %arg2[%c0_3, %c0_4] : memref<32x1xf32, #tpu.memory_space<vmem>>, vector<32x1xf32>
    %4 = vector.broadcast %3 : vector<32x1xf32> to vector<32x768xf32>
    %5 = arith.addf %2, %4 : vector<32x768xf32>
    %cst_5 = arith.constant 0.000000e+00 : f32
    %6 = vector.broadcast %cst_5 : f32 to vector<32x768xf32>
    %7 = arith.maximumf %5, %6 : vector<32x768xf32>
    %c0_6 = arith.constant 0 : index
    %c0_7 = arith.constant 0 : index
    %8 = vector.load %arg4[%c0_6, %c0_7] : memref<32x768xf32, #tpu.memory_space<vmem>>, vector<32x768xf32>
    tpu.vector_store %arg4[%c0_6, %c0_7], %7 {strides = array<i32>} : memref<32x768xf32, #tpu.memory_space<vmem>>, vector<32x768xf32>,
    return
  }
  func.func @transform_0(%arg0: i32) -> (i32, i32) {
    %c0_i32 = arith.constant 0 : i32
    %c0_i32_0 = arith.constant 0 : i32
    %c0_i32_1 = arith.constant 0 : i32
    return %c0_i32, %c0_i32_0 : i32, i32
  }
  func.func @transform_1(%arg0: i32) -> (i32, i32) {
    %c0_i32 = arith.constant 0 : i32
    %c0_i32_0 = arith.constant 0 : i32
    %c0_i32_1 = arith.constant 0 : i32
    return %c0_i32, %c0_i32_0 : i32, i32
  }
  func.func @transform_2(%arg0: i32) -> (i32, i32) {
    %c0_i32 = arith.constant 0 : i32
    %c0_i32_0 = arith.constant 0 : i32
    %c0_i32_1 = arith.constant 0 : i32
    return %c0_i32, %c0_i32_0 : i32, i32
  }
  func.func @transform_3(%arg0: i32) -> (i32, i32) {
    %c0_i32 = arith.constant 0 : i32
    %c0_i32_0 = arith.constant 0 : i32
    %c0_i32_1 = arith.constant 0 : i32
    return %c0_i32, %c0_i32_0 : i32, i32
  }
}

module attributes {stable_mosaic.version = 11 : i64} {
  func.func @_conv_relu_kernel(%arg0: i32, %arg1: memref<64x288xbf16, #tpu.memory_space<vmem>>, %arg2: memref<64x1xf32, #tpu.memory_space<vmem>>, %arg3: memref<288x256xbf16, #tpu.memory_space<vmem>>, %arg4: memref<64x256xf32, #tpu.memory_space<vmem>>) attributes {dimension_semantics = [#tpu.dimension_semantics<arbitrary>], iteration_bounds = array<i64: 1>, scalar_prefetch = 0 : i64, scratch_operands = 0 : i64, tpu.core_type = #tpu.core_type<tc>, window_params = [{pipeline_mode = #tpu.pipeline_mode<synchronous>, transform_indices = @transform_0, window_bounds = array<i64: 64, 288>}, {pipeline_mode = #tpu.pipeline_mode<synchronous>, transform_indices = @transform_1, window_bounds = array<i64: 64, 1>}, {pipeline_mode = #tpu.pipeline_mode<synchronous>, transform_indices = @transform_2, window_bounds = array<i64: 288, 256>}, {pipeline_mode = #tpu.pipeline_mode<synchronous>, transform_indices = @transform_3, window_bounds = array<i64: 64, 256>}]} {
    %c0 = arith.constant 0 : index
    %c0_0 = arith.constant 0 : index
    %0 = vector.load %arg1[%c0, %c0_0] : memref<64x288xbf16, #tpu.memory_space<vmem>>, vector<64x288xbf16>
    %c0_1 = arith.constant 0 : index
    %c0_2 = arith.constant 0 : index
    %1 = vector.load %arg3[%c0_1, %c0_2] : memref<288x256xbf16, #tpu.memory_space<vmem>>, vector<288x256xbf16>
    %cst = arith.constant dense<0.000000e+00> : vector<64x256xf32>
    %2 = tpu.matmul %0, %1, %cst {dimension_numbers = #tpu.dot_dimension_numbers<[1], [0], [0], [1], [0, 0, 1, 1], [], []>} : vector<64x288xbf16>, vector<288x256xbf16>, vector<64x256xf32> -> vector<64x256xf32>
    %c0_3 = arith.constant 0 : index
    %c0_4 = arith.constant 0 : index
    %3 = vector.load %arg2[%c0_3, %c0_4] : memref<64x1xf32, #tpu.memory_space<vmem>>, vector<64x1xf32>
    %4 = vector.broadcast %3 : vector<64x1xf32> to vector<64x256xf32>
    %5 = arith.addf %2, %4 : vector<64x256xf32>
    %cst_5 = arith.constant 0.000000e+00 : f32
    %6 = vector.broadcast %cst_5 : f32 to vector<64x256xf32>
    %7 = arith.maximumf %5, %6 : vector<64x256xf32>
    %c0_6 = arith.constant 0 : index
    %c0_7 = arith.constant 0 : index
    %8 = vector.load %arg4[%c0_6, %c0_7] : memref<64x256xf32, #tpu.memory_space<vmem>>, vector<64x256xf32>
    tpu.vector_store %arg4[%c0_6, %c0_7], %7 {strides = array<i32>} : memref<64x256xf32, #tpu.memory_space<vmem>>, vector<64x256xf32>,
    return
  }
  func.func @transform_0(%arg0: i32) -> (i32, i32) {
    %c0_i32 = arith.constant 0 : i32
    %c0_i32_0 = arith.constant 0 : i32
    %c0_i32_1 = arith.constant 0 : i32
    return %c0_i32, %c0_i32_0 : i32, i32
  }
  func.func @transform_1(%arg0: i32) -> (i32, i32) {
    %c0_i32 = arith.constant 0 : i32
    %c0_i32_0 = arith.constant 0 : i32
    %c0_i32_1 = arith.constant 0 : i32
    return %c0_i32, %c0_i32_0 : i32, i32
  }
  func.func @transform_2(%arg0: i32) -> (i32, i32) {
    %c0_i32 = arith.constant 0 : i32
    %c0_i32_0 = arith.constant 0 : i32
    %c0_i32_1 = arith.constant 0 : i32
    return %c0_i32, %c0_i32_0 : i32, i32
  }
  func.func @transform_3(%arg0: i32) -> (i32, i32) {
    %c0_i32 = arith.constant 0 : i32
    %c0_i32_0 = arith.constant 0 : i32
    %c0_i32_1 = arith.constant 0 : i32
    return %c0_i32, %c0_i32_0 : i32, i32
  }
}

module attributes {stable_mosaic.version = 11 : i64} {
  func.func @_conv_relu_kernel(%arg0: i32, %arg1: memref<32x24xbf16, #tpu.memory_space<vmem>>, %arg2: memref<32x1xf32, #tpu.memory_space<vmem>>, %arg3: memref<24x768xbf16, #tpu.memory_space<vmem>>, %arg4: memref<32x768xf32, #tpu.memory_space<vmem>>) attributes {dimension_semantics = [#tpu.dimension_semantics<arbitrary>], iteration_bounds = array<i64: 1>, scalar_prefetch = 0 : i64, scratch_operands = 0 : i64, tpu.core_type = #tpu.core_type<tc>, window_params = [{pipeline_mode = #tpu.pipeline_mode<synchronous>, transform_indices = @transform_0, window_bounds = array<i64: 32, 24>}, {pipeline_mode = #tpu.pipeline_mode<synchronous>, transform_indices = @transform_1, window_bounds = array<i64: 32, 1>}, {pipeline_mode = #tpu.pipeline_mode<synchronous>, transform_indices = @transform_2, window_bounds = array<i64: 24, 768>}, {pipeline_mode = #tpu.pipeline_mode<synchronous>, transform_indices = @transform_3, window_bounds = array<i64: 32, 768>}]} {
    %c0 = arith.constant 0 : index
    %c0_0 = arith.constant 0 : index
    %0 = vector.load %arg1[%c0, %c0_0] : memref<32x24xbf16, #tpu.memory_space<vmem>>, vector<32x24xbf16>
    %c0_1 = arith.constant 0 : index
    %c0_2 = arith.constant 0 : index
    %1 = vector.load %arg3[%c0_1, %c0_2] : memref<24x768xbf16, #tpu.memory_space<vmem>>, vector<24x768xbf16>
    %cst = arith.constant dense<0.000000e+00> : vector<32x768xf32>
    %2 = tpu.matmul %0, %1, %cst {dimension_numbers = #tpu.dot_dimension_numbers<[1], [0], [0], [1], [0, 0, 1, 1], [], []>} : vector<32x24xbf16>, vector<24x768xbf16>, vector<32x768xf32> -> vector<32x768xf32>
    %c0_3 = arith.constant 0 : index
    %c0_4 = arith.constant 0 : index
    %3 = vector.load %arg2[%c0_3, %c0_4] : memref<32x1xf32, #tpu.memory_space<vmem>>, vector<32x1xf32>
    %4 = vector.broadcast %3 : vector<32x1xf32> to vector<32x768xf32>
    %5 = arith.addf %2, %4 : vector<32x768xf32>
    %cst_5 = arith.constant 0.000000e+00 : f32
    %6 = vector.broadcast %cst_5 : f32 to vector<32x768xf32>
    %7 = arith.maximumf %5, %6 : vector<32x768xf32>
    %c0_6 = arith.constant 0 : index
    %c0_7 = arith.constant 0 : index
    %8 = vector.load %arg4[%c0_6, %c0_7] : memref<32x768xf32, #tpu.memory_space<vmem>>, vector<32x768xf32>
    tpu.vector_store %arg4[%c0_6, %c0_7], %7 {strides = array<i32>} : memref<32x768xf32, #tpu.memory_space<vmem>>, vector<32x768xf32>,
    return
  }
  func.func @transform_0(%arg0: i32) -> (i32, i32) {
    %c0_i32 = arith.constant 0 : i32
    %c0_i32_0 = arith.constant 0 : i32
    %c0_i32_1 = arith.constant 0 : i32
    return %c0_i32, %c0_i32_0 : i32, i32
  }
  func.func @transform_1(%arg0: i32) -> (i32, i32) {
    %c0_i32 = arith.constant 0 : i32
    %c0_i32_0 = arith.constant 0 : i32
    %c0_i32_1 = arith.constant 0 : i32
    return %c0_i32, %c0_i32_0 : i32, i32
  }
  func.func @transform_2(%arg0: i32) -> (i32, i32) {
    %c0_i32 = arith.constant 0 : i32
    %c0_i32_0 = arith.constant 0 : i32
    %c0_i32_1 = arith.constant 0 : i32
    return %c0_i32, %c0_i32_0 : i32, i32
  }
  func.func @transform_3(%arg0: i32) -> (i32, i32) {
    %c0_i32 = arith.constant 0 : i32
    %c0_i32_0 = arith.constant 0 : i32
    %c0_i32_1 = arith.constant 0 : i32
    return %c0_i32, %c0_i32_0 : i32, i32
  }
}

module attributes {stable_mosaic.version = 11 : i64} {
  func.func @_conv_relu_kernel(%arg0: i32, %arg1: memref<64x192xbf16, #tpu.memory_space<vmem>>, %arg2: memref<64x1xf32, #tpu.memory_space<vmem>>, %arg3: memref<192x256xbf16, #tpu.memory_space<vmem>>, %arg4: memref<64x256xf32, #tpu.memory_space<vmem>>) attributes {dimension_semantics = [#tpu.dimension_semantics<arbitrary>], iteration_bounds = array<i64: 1>, scalar_prefetch = 0 : i64, scratch_operands = 0 : i64, tpu.core_type = #tpu.core_type<tc>, window_params = [{pipeline_mode = #tpu.pipeline_mode<synchronous>, transform_indices = @transform_0, window_bounds = array<i64: 64, 192>}, {pipeline_mode = #tpu.pipeline_mode<synchronous>, transform_indices = @transform_1, window_bounds = array<i64: 64, 1>}, {pipeline_mode = #tpu.pipeline_mode<synchronous>, transform_indices = @transform_2, window_bounds = array<i64: 192, 256>}, {pipeline_mode = #tpu.pipeline_mode<synchronous>, transform_indices = @transform_3, window_bounds = array<i64: 64, 256>}]} {
    %c0 = arith.constant 0 : index
    %c0_0 = arith.constant 0 : index
    %0 = vector.load %arg1[%c0, %c0_0] : memref<64x192xbf16, #tpu.memory_space<vmem>>, vector<64x192xbf16>
    %c0_1 = arith.constant 0 : index
    %c0_2 = arith.constant 0 : index
    %1 = vector.load %arg3[%c0_1, %c0_2] : memref<192x256xbf16, #tpu.memory_space<vmem>>, vector<192x256xbf16>
    %cst = arith.constant dense<0.000000e+00> : vector<64x256xf32>
    %2 = tpu.matmul %0, %1, %cst {dimension_numbers = #tpu.dot_dimension_numbers<[1], [0], [0], [1], [0, 0, 1, 1], [], []>} : vector<64x192xbf16>, vector<192x256xbf16>, vector<64x256xf32> -> vector<64x256xf32>
    %c0_3 = arith.constant 0 : index
    %c0_4 = arith.constant 0 : index
    %3 = vector.load %arg2[%c0_3, %c0_4] : memref<64x1xf32, #tpu.memory_space<vmem>>, vector<64x1xf32>
    %4 = vector.broadcast %3 : vector<64x1xf32> to vector<64x256xf32>
    %5 = arith.addf %2, %4 : vector<64x256xf32>
    %cst_5 = arith.constant 0.000000e+00 : f32
    %6 = vector.broadcast %cst_5 : f32 to vector<64x256xf32>
    %7 = arith.maximumf %5, %6 : vector<64x256xf32>
    %c0_6 = arith.constant 0 : index
    %c0_7 = arith.constant 0 : index
    %8 = vector.load %arg4[%c0_6, %c0_7] : memref<64x256xf32, #tpu.memory_space<vmem>>, vector<64x256xf32>
    tpu.vector_store %arg4[%c0_6, %c0_7], %7 {strides = array<i32>} : memref<64x256xf32, #tpu.memory_space<vmem>>, vector<64x256xf32>,
    return
  }
  func.func @transform_0(%arg0: i32) -> (i32, i32) {
    %c0_i32 = arith.constant 0 : i32
    %c0_i32_0 = arith.constant 0 : i32
    %c0_i32_1 = arith.constant 0 : i32
    return %c0_i32, %c0_i32_0 : i32, i32
  }
  func.func @transform_1(%arg0: i32) -> (i32, i32) {
    %c0_i32 = arith.constant 0 : i32
    %c0_i32_0 = arith.constant 0 : i32
    %c0_i32_1 = arith.constant 0 : i32
    return %c0_i32, %c0_i32_0 : i32, i32
  }
  func.func @transform_2(%arg0: i32) -> (i32, i32) {
    %c0_i32 = arith.constant 0 : i32
    %c0_i32_0 = arith.constant 0 : i32
    %c0_i32_1 = arith.constant 0 : i32
    return %c0_i32, %c0_i32_0 : i32, i32
  }
  func.func @transform_3(%arg0: i32) -> (i32, i32) {
    %c0_i32 = arith.constant 0 : i32
    %c0_i32_0 = arith.constant 0 : i32
    %c0_i32_1 = arith.constant 0 : i32
    return %c0_i32, %c0_i32_0 : i32, i32
  }
}

module attributes {stable_mosaic.version = 11 : i64} {
  func.func @_conv_relu_kernel(%arg0: i32, %arg1: memref<32x36xbf16, #tpu.memory_space<vmem>>, %arg2: memref<32x1xf32, #tpu.memory_space<vmem>>, %arg3: memref<36x768xbf16, #tpu.memory_space<vmem>>, %arg4: memref<32x768xf32, #tpu.memory_space<vmem>>) attributes {dimension_semantics = [#tpu.dimension_semantics<arbitrary>], iteration_bounds = array<i64: 1>, scalar_prefetch = 0 : i64, scratch_operands = 0 : i64, tpu.core_type = #tpu.core_type<tc>, window_params = [{pipeline_mode = #tpu.pipeline_mode<synchronous>, transform_indices = @transform_0, window_bounds = array<i64: 32, 36>}, {pipeline_mode = #tpu.pipeline_mode<synchronous>, transform_indices = @transform_1, window_bounds = array<i64: 32, 1>}, {pipeline_mode = #tpu.pipeline_mode<synchronous>, transform_indices = @transform_2, window_bounds = array<i64: 36, 768>}, {pipeline_mode = #tpu.pipeline_mode<synchronous>, transform_indices = @transform_3, window_bounds = array<i64: 32, 768>}]} {
    %c0 = arith.constant 0 : index
    %c0_0 = arith.constant 0 : index
    %0 = vector.load %arg1[%c0, %c0_0] : memref<32x36xbf16, #tpu.memory_space<vmem>>, vector<32x36xbf16>
    %c0_1 = arith.constant 0 : index
    %c0_2 = arith.constant 0 : index
    %1 = vector.load %arg3[%c0_1, %c0_2] : memref<36x768xbf16, #tpu.memory_space<vmem>>, vector<36x768xbf16>
    %cst = arith.constant dense<0.000000e+00> : vector<32x768xf32>
    %2 = tpu.matmul %0, %1, %cst {dimension_numbers = #tpu.dot_dimension_numbers<[1], [0], [0], [1], [0, 0, 1, 1], [], []>} : vector<32x36xbf16>, vector<36x768xbf16>, vector<32x768xf32> -> vector<32x768xf32>
    %c0_3 = arith.constant 0 : index
    %c0_4 = arith.constant 0 : index
    %3 = vector.load %arg2[%c0_3, %c0_4] : memref<32x1xf32, #tpu.memory_space<vmem>>, vector<32x1xf32>
    %4 = vector.broadcast %3 : vector<32x1xf32> to vector<32x768xf32>
    %5 = arith.addf %2, %4 : vector<32x768xf32>
    %cst_5 = arith.constant 0.000000e+00 : f32
    %6 = vector.broadcast %cst_5 : f32 to vector<32x768xf32>
    %7 = arith.maximumf %5, %6 : vector<32x768xf32>
    %c0_6 = arith.constant 0 : index
    %c0_7 = arith.constant 0 : index
    %8 = vector.load %arg4[%c0_6, %c0_7] : memref<32x768xf32, #tpu.memory_space<vmem>>, vector<32x768xf32>
    tpu.vector_store %arg4[%c0_6, %c0_7], %7 {strides = array<i32>} : memref<32x768xf32, #tpu.memory_space<vmem>>, vector<32x768xf32>,
    return
  }
  func.func @transform_0(%arg0: i32) -> (i32, i32) {
    %c0_i32 = arith.constant 0 : i32
    %c0_i32_0 = arith.constant 0 : i32
    %c0_i32_1 = arith.constant 0 : i32
    return %c0_i32, %c0_i32_0 : i32, i32
  }
  func.func @transform_1(%arg0: i32) -> (i32, i32) {
    %c0_i32 = arith.constant 0 : i32
    %c0_i32_0 = arith.constant 0 : i32
    %c0_i32_1 = arith.constant 0 : i32
    return %c0_i32, %c0_i32_0 : i32, i32
  }
  func.func @transform_2(%arg0: i32) -> (i32, i32) {
    %c0_i32 = arith.constant 0 : i32
    %c0_i32_0 = arith.constant 0 : i32
    %c0_i32_1 = arith.constant 0 : i32
    return %c0_i32, %c0_i32_0 : i32, i32
  }
  func.func @transform_3(%arg0: i32) -> (i32, i32) {
    %c0_i32 = arith.constant 0 : i32
    %c0_i32_0 = arith.constant 0 : i32
    %c0_i32_1 = arith.constant 0 : i32
    return %c0_i32, %c0_i32_0 : i32, i32
  }
}

module attributes {stable_mosaic.version = 11 : i64} {
  func.func @_conv_relu_kernel(%arg0: i32, %arg1: memref<32x48xbf16, #tpu.memory_space<vmem>>, %arg2: memref<32x1xf32, #tpu.memory_space<vmem>>, %arg3: memref<48x768xbf16, #tpu.memory_space<vmem>>, %arg4: memref<32x768xf32, #tpu.memory_space<vmem>>) attributes {dimension_semantics = [#tpu.dimension_semantics<arbitrary>], iteration_bounds = array<i64: 1>, scalar_prefetch = 0 : i64, scratch_operands = 0 : i64, tpu.core_type = #tpu.core_type<tc>, window_params = [{pipeline_mode = #tpu.pipeline_mode<synchronous>, transform_indices = @transform_0, window_bounds = array<i64: 32, 48>}, {pipeline_mode = #tpu.pipeline_mode<synchronous>, transform_indices = @transform_1, window_bounds = array<i64: 32, 1>}, {pipeline_mode = #tpu.pipeline_mode<synchronous>, transform_indices = @transform_2, window_bounds = array<i64: 48, 768>}, {pipeline_mode = #tpu.pipeline_mode<synchronous>, transform_indices = @transform_3, window_bounds = array<i64: 32, 768>}]} {
    %c0 = arith.constant 0 : index
    %c0_0 = arith.constant 0 : index
    %0 = vector.load %arg1[%c0, %c0_0] : memref<32x48xbf16, #tpu.memory_space<vmem>>, vector<32x48xbf16>
    %c0_1 = arith.constant 0 : index
    %c0_2 = arith.constant 0 : index
    %1 = vector.load %arg3[%c0_1, %c0_2] : memref<48x768xbf16, #tpu.memory_space<vmem>>, vector<48x768xbf16>
    %cst = arith.constant dense<0.000000e+00> : vector<32x768xf32>
    %2 = tpu.matmul %0, %1, %cst {dimension_numbers = #tpu.dot_dimension_numbers<[1], [0], [0], [1], [0, 0, 1, 1], [], []>} : vector<32x48xbf16>, vector<48x768xbf16>, vector<32x768xf32> -> vector<32x768xf32>
    %c0_3 = arith.constant 0 : index
    %c0_4 = arith.constant 0 : index
    %3 = vector.load %arg2[%c0_3, %c0_4] : memref<32x1xf32, #tpu.memory_space<vmem>>, vector<32x1xf32>
    %4 = vector.broadcast %3 : vector<32x1xf32> to vector<32x768xf32>
    %5 = arith.addf %2, %4 : vector<32x768xf32>
    %cst_5 = arith.constant 0.000000e+00 : f32
    %6 = vector.broadcast %cst_5 : f32 to vector<32x768xf32>
    %7 = arith.maximumf %5, %6 : vector<32x768xf32>
    %c0_6 = arith.constant 0 : index
    %c0_7 = arith.constant 0 : index
    %8 = vector.load %arg4[%c0_6, %c0_7] : memref<32x768xf32, #tpu.memory_space<vmem>>, vector<32x768xf32>
    tpu.vector_store %arg4[%c0_6, %c0_7], %7 {strides = array<i32>} : memref<32x768xf32, #tpu.memory_space<vmem>>, vector<32x768xf32>,
    return
  }
  func.func @transform_0(%arg0: i32) -> (i32, i32) {
    %c0_i32 = arith.constant 0 : i32
    %c0_i32_0 = arith.constant 0 : i32
    %c0_i32_1 = arith.constant 0 : i32
    return %c0_i32, %c0_i32_0 : i32, i32
  }
  func.func @transform_1(%arg0: i32) -> (i32, i32) {
    %c0_i32 = arith.constant 0 : i32
    %c0_i32_0 = arith.constant 0 : i32
    %c0_i32_1 = arith.constant 0 : i32
    return %c0_i32, %c0_i32_0 : i32, i32
  }
  func.func @transform_2(%arg0: i32) -> (i32, i32) {
    %c0_i32 = arith.constant 0 : i32
    %c0_i32_0 = arith.constant 0 : i32
    %c0_i32_1 = arith.constant 0 : i32
    return %c0_i32, %c0_i32_0 : i32, i32
  }
  func.func @transform_3(%arg0: i32) -> (i32, i32) {
    %c0_i32 = arith.constant 0 : i32
    %c0_i32_0 = arith.constant 0 : i32
    %c0_i32_1 = arith.constant 0 : i32
    return %c0_i32, %c0_i32_0 : i32, i32
  }
}

module attributes {stable_mosaic.version = 11 : i64} {
  func.func @_conv_relu_kernel(%arg0: i32, %arg1: memref<64x96xbf16, #tpu.memory_space<vmem>>, %arg2: memref<64x1xf32, #tpu.memory_space<vmem>>, %arg3: memref<96x256xbf16, #tpu.memory_space<vmem>>, %arg4: memref<64x256xf32, #tpu.memory_space<vmem>>) attributes {dimension_semantics = [#tpu.dimension_semantics<arbitrary>], iteration_bounds = array<i64: 1>, scalar_prefetch = 0 : i64, scratch_operands = 0 : i64, tpu.core_type = #tpu.core_type<tc>, window_params = [{pipeline_mode = #tpu.pipeline_mode<synchronous>, transform_indices = @transform_0, window_bounds = array<i64: 64, 96>}, {pipeline_mode = #tpu.pipeline_mode<synchronous>, transform_indices = @transform_1, window_bounds = array<i64: 64, 1>}, {pipeline_mode = #tpu.pipeline_mode<synchronous>, transform_indices = @transform_2, window_bounds = array<i64: 96, 256>}, {pipeline_mode = #tpu.pipeline_mode<synchronous>, transform_indices = @transform_3, window_bounds = array<i64: 64, 256>}]} {
    %c0 = arith.constant 0 : index
    %c0_0 = arith.constant 0 : index
    %0 = vector.load %arg1[%c0, %c0_0] : memref<64x96xbf16, #tpu.memory_space<vmem>>, vector<64x96xbf16>
    %c0_1 = arith.constant 0 : index
    %c0_2 = arith.constant 0 : index
    %1 = vector.load %arg3[%c0_1, %c0_2] : memref<96x256xbf16, #tpu.memory_space<vmem>>, vector<96x256xbf16>
    %cst = arith.constant dense<0.000000e+00> : vector<64x256xf32>
    %2 = tpu.matmul %0, %1, %cst {dimension_numbers = #tpu.dot_dimension_numbers<[1], [0], [0], [1], [0, 0, 1, 1], [], []>} : vector<64x96xbf16>, vector<96x256xbf16>, vector<64x256xf32> -> vector<64x256xf32>
    %c0_3 = arith.constant 0 : index
    %c0_4 = arith.constant 0 : index
    %3 = vector.load %arg2[%c0_3, %c0_4] : memref<64x1xf32, #tpu.memory_space<vmem>>, vector<64x1xf32>
    %4 = vector.broadcast %3 : vector<64x1xf32> to vector<64x256xf32>
    %5 = arith.addf %2, %4 : vector<64x256xf32>
    %cst_5 = arith.constant 0.000000e+00 : f32
    %6 = vector.broadcast %cst_5 : f32 to vector<64x256xf32>
    %7 = arith.maximumf %5, %6 : vector<64x256xf32>
    %c0_6 = arith.constant 0 : index
    %c0_7 = arith.constant 0 : index
    %8 = vector.load %arg4[%c0_6, %c0_7] : memref<64x256xf32, #tpu.memory_space<vmem>>, vector<64x256xf32>
    tpu.vector_store %arg4[%c0_6, %c0_7], %7 {strides = array<i32>} : memref<64x256xf32, #tpu.memory_space<vmem>>, vector<64x256xf32>,
    return
  }
  func.func @transform_0(%arg0: i32) -> (i32, i32) {
    %c0_i32 = arith.constant 0 : i32
    %c0_i32_0 = arith.constant 0 : i32
    %c0_i32_1 = arith.constant 0 : i32
    return %c0_i32, %c0_i32_0 : i32, i32
  }
  func.func @transform_1(%arg0: i32) -> (i32, i32) {
    %c0_i32 = arith.constant 0 : i32
    %c0_i32_0 = arith.constant 0 : i32
    %c0_i32_1 = arith.constant 0 : i32
    return %c0_i32, %c0_i32_0 : i32, i32
  }
  func.func @transform_2(%arg0: i32) -> (i32, i32) {
    %c0_i32 = arith.constant 0 : i32
    %c0_i32_0 = arith.constant 0 : i32
    %c0_i32_1 = arith.constant 0 : i32
    return %c0_i32, %c0_i32_0 : i32, i32
  }
  func.func @transform_3(%arg0: i32) -> (i32, i32) {
    %c0_i32 = arith.constant 0 : i32
    %c0_i32_0 = arith.constant 0 : i32
    %c0_i32_1 = arith.constant 0 : i32
    return %c0_i32, %c0_i32_0 : i32, i32
  }
}

module attributes {stable_mosaic.version = 11 : i64} {
  func.func @_head_kernel(%arg0: i32, %arg1: memref<2x3456xf32, #tpu.memory_space<vmem>>, %arg2: memref<2x3456xf32, #tpu.memory_space<vmem>>, %arg3: memref<3456x128xbf16, #tpu.memory_space<vmem>>, %arg4: memref<1x128xf32, #tpu.memory_space<vmem>>, %arg5: memref<2x128xf32, #tpu.memory_space<vmem>>, %arg6: memref<128x10xbf16, #tpu.memory_space<vmem>>, %arg7: memref<1x10xf32, #tpu.memory_space<vmem>>, %arg8: memref<2x10xf32, #tpu.memory_space<vmem>>, %arg9: memref<2x128xf32, #tpu.memory_space<vmem>>) attributes {dimension_semantics = [#tpu.dimension_semantics<arbitrary>], iteration_bounds = array<i64: 4>, scalar_prefetch = 0 : i64, scratch_operands = 1 : i64, tpu.core_type = #tpu.core_type<tc>, window_params = [{transform_indices = @transform_0, window_bounds = array<i64: 2, 3456>}, {transform_indices = @transform_1, window_bounds = array<i64: 2, 3456>}, {transform_indices = @transform_2, window_bounds = array<i64: 3456, 128>}, {pipeline_mode = #tpu.pipeline_mode<synchronous>, transform_indices = @transform_3, window_bounds = array<i64: 1, 128>}, {pipeline_mode = #tpu.pipeline_mode<synchronous>, transform_indices = @transform_4, window_bounds = array<i64: 2, 128>}, {pipeline_mode = #tpu.pipeline_mode<synchronous>, transform_indices = @transform_5, window_bounds = array<i64: 128, 10>}, {pipeline_mode = #tpu.pipeline_mode<synchronous>, transform_indices = @transform_6, window_bounds = array<i64: 1, 10>}, {pipeline_mode = #tpu.pipeline_mode<synchronous>, transform_indices = @transform_7, window_bounds = array<i64: 2, 10>}]} {
    %c0_i32 = arith.constant 0 : i32
    %0 = arith.cmpi eq, %arg0, %c0_i32 : i32
    %1 = arith.extui %0 : i1 to i32
    %c0_i32_0 = arith.constant 0 : i32
    %2 = arith.cmpi ne, %1, %c0_i32_0 : i32
    scf.if %2 {
      %cst_11 = arith.constant 0.000000e+00 : f32
      %15 = vector.broadcast %cst_11 : f32 to vector<2x128xf32>
      %c0_12 = arith.constant 0 : index
      %c0_13 = arith.constant 0 : index
      %16 = vector.load %arg9[%c0_12, %c0_13] : memref<2x128xf32, #tpu.memory_space<vmem>>, vector<2x128xf32>
      tpu.vector_store %arg9[%c0_12, %c0_13], %15 {strides = array<i32>} : memref<2x128xf32, #tpu.memory_space<vmem>>, vector<2x128xf32>,
    } else {
    }
    %c0 = arith.constant 0 : index
    %c0_1 = arith.constant 0 : index
    %3 = vector.load %arg1[%c0, %c0_1] : memref<2x3456xf32, #tpu.memory_space<vmem>>, vector<2x3456xf32>
    %c0_2 = arith.constant 0 : index
    %c0_3 = arith.constant 0 : index
    %4 = vector.load %arg2[%c0_2, %c0_3] : memref<2x3456xf32, #tpu.memory_space<vmem>>, vector<2x3456xf32>
    %5 = arith.mulf %3, %4 : vector<2x3456xf32>
    %6 = arith.truncf %5 : vector<2x3456xf32> to vector<2x3456xbf16>
    %c0_4 = arith.constant 0 : index
    %c0_5 = arith.constant 0 : index
    %7 = vector.load %arg9[%c0_4, %c0_5] : memref<2x128xf32, #tpu.memory_space<vmem>>, vector<2x128xf32>
    %c0_6 = arith.constant 0 : index
    %c0_7 = arith.constant 0 : index
    %8 = vector.load %arg3[%c0_6, %c0_7] : memref<3456x128xbf16, #tpu.memory_space<vmem>>, vector<3456x128xbf16>
    %cst = arith.constant dense<0.000000e+00> : vector<2x128xf32>
    %9 = tpu.matmul %6, %8, %cst {dimension_numbers = #tpu.dot_dimension_numbers<[1], [0], [0], [1], [0, 0, 1, 1], [], []>} : vector<2x3456xbf16>, vector<3456x128xbf16>, vector<2x128xf32> -> vector<2x128xf32>
    %10 = arith.addf %7, %9 : vector<2x128xf32>
    %c0_8 = arith.constant 0 : index
    %c0_9 = arith.constant 0 : index
    %11 = vector.load %arg9[%c0_8, %c0_9] : memref<2x128xf32, #tpu.memory_space<vmem>>, vector<2x128xf32>
    tpu.vector_store %arg9[%c0_8, %c0_9], %10 {strides = array<i32>} : memref<2x128xf32, #tpu.memory_space<vmem>>, vector<2x128xf32>,
    %c3_i32 = arith.constant 3 : i32
    %12 = arith.cmpi eq, %arg0, %c3_i32 : i32
    %13 = arith.extui %12 : i1 to i32
    %c0_i32_10 = arith.constant 0 : i32
    %14 = arith.cmpi ne, %13, %c0_i32_10 : i32
    scf.if %14 {
      %c0_11 = arith.constant 0 : index
      %c0_12 = arith.constant 0 : index
      %15 = vector.load %arg9[%c0_11, %c0_12] : memref<2x128xf32, #tpu.memory_space<vmem>>, vector<2x128xf32>
      %c0_13 = arith.constant 0 : index
      %c0_14 = arith.constant 0 : index
      %16 = vector.load %arg4[%c0_13, %c0_14] : memref<1x128xf32, #tpu.memory_space<vmem>>, vector<1x128xf32>
      %17 = vector.broadcast %16 : vector<1x128xf32> to vector<2x128xf32>
      %18 = arith.addf %15, %17 : vector<2x128xf32>
      %c0_15 = arith.constant 0 : index
      %c0_16 = arith.constant 0 : index
      %19 = vector.load %arg5[%c0_15, %c0_16] : memref<2x128xf32, #tpu.memory_space<vmem>>, vector<2x128xf32>
      %20 = arith.mulf %18, %19 : vector<2x128xf32>
      %21 = arith.truncf %20 : vector<2x128xf32> to vector<2x128xbf16>
      %c0_17 = arith.constant 0 : index
      %c0_18 = arith.constant 0 : index
      %22 = vector.load %arg6[%c0_17, %c0_18] : memref<128x10xbf16, #tpu.memory_space<vmem>>, vector<128x10xbf16>
      %cst_19 = arith.constant dense<0.000000e+00> : vector<2x10xf32>
      %23 = tpu.matmul %21, %22, %cst_19 {dimension_numbers = #tpu.dot_dimension_numbers<[1], [0], [0], [1], [0, 0, 1, 1], [], []>} : vector<2x128xbf16>, vector<128x10xbf16>, vector<2x10xf32> -> vector<2x10xf32>
      %c0_20 = arith.constant 0 : index
      %c0_21 = arith.constant 0 : index
      %24 = vector.load %arg7[%c0_20, %c0_21] : memref<1x10xf32, #tpu.memory_space<vmem>>, vector<1x10xf32>
      %25 = vector.broadcast %24 : vector<1x10xf32> to vector<2x10xf32>
      %26 = arith.addf %23, %25 : vector<2x10xf32>
      %c0_22 = arith.constant 0 : index
      %c0_23 = arith.constant 0 : index
      %27 = vector.load %arg8[%c0_22, %c0_23] : memref<2x10xf32, #tpu.memory_space<vmem>>, vector<2x10xf32>
      tpu.vector_store %arg8[%c0_22, %c0_23], %26 {strides = array<i32>} : memref<2x10xf32, #tpu.memory_space<vmem>>, vector<2x10xf32>,
    } else {
    }
    return
  }
  func.func @transform_0(%arg0: i32) -> (i32, i32) {
    %c0_i32 = arith.constant 0 : i32
    %c0_i32_0 = arith.constant 0 : i32
    return %c0_i32, %arg0 : i32, i32
  }
  func.func @transform_1(%arg0: i32) -> (i32, i32) {
    %c0_i32 = arith.constant 0 : i32
    %c0_i32_0 = arith.constant 0 : i32
    return %c0_i32, %arg0 : i32, i32
  }
  func.func @transform_2(%arg0: i32) -> (i32, i32) {
    %c0_i32 = arith.constant 0 : i32
    %c0_i32_0 = arith.constant 0 : i32
    return %arg0, %c0_i32 : i32, i32
  }
  func.func @transform_3(%arg0: i32) -> (i32, i32) {
    %c0_i32 = arith.constant 0 : i32
    %c0_i32_0 = arith.constant 0 : i32
    %c0_i32_1 = arith.constant 0 : i32
    return %c0_i32, %c0_i32_0 : i32, i32
  }
  func.func @transform_4(%arg0: i32) -> (i32, i32) {
    %c0_i32 = arith.constant 0 : i32
    %c0_i32_0 = arith.constant 0 : i32
    %c0_i32_1 = arith.constant 0 : i32
    return %c0_i32, %c0_i32_0 : i32, i32
  }
  func.func @transform_5(%arg0: i32) -> (i32, i32) {
    %c0_i32 = arith.constant 0 : i32
    %c0_i32_0 = arith.constant 0 : i32
    %c0_i32_1 = arith.constant 0 : i32
    return %c0_i32, %c0_i32_0 : i32, i32
  }
  func.func @transform_6(%arg0: i32) -> (i32, i32) {
    %c0_i32 = arith.constant 0 : i32
    %c0_i32_0 = arith.constant 0 : i32
    %c0_i32_1 = arith.constant 0 : i32
    return %c0_i32, %c0_i32_0 : i32, i32
  }
  func.func @transform_7(%arg0: i32) -> (i32, i32) {
    %c0_i32 = arith.constant 0 : i32
    %c0_i32_0 = arith.constant 0 : i32
    %c0_i32_1 = arith.constant 0 : i32
    return %c0_i32, %c0_i32_0 : i32, i32
  }
}

</mosaic_0001>

<llo_original>
// kernel: _mlcnn_forward.17
$region0: #{_mlcnn_forward.17}
  #allocation0 [shape = 'u32[]', space=smem, size = 0x4, offset = 0x4, fixed_abs, tag = 'smem constant byte address 0x4 - core index']
  #allocation1 [shape = 'u32[144,128]{1,0:T(1,128)}', space=vmem, size = 0x12000, scoped, tag = 'internal scratch']
  %s0 = inlined_call_operand.vmem [shape: bf16[32,12], index: 0, kind: input, shape index: {}]
  %s1 = inlined_call_operand.vmem [shape: f32[32,1], index: 1, kind: input, shape index: {}]
  %s2 = inlined_call_operand.vmem [shape: bf16[12,768], index: 2, kind: input, shape index: {}]
  %s3 = inlined_call_operand.vmem [shape: f32[32,768], index: 3, kind: output, shape index: {}]
  %s4 = sld [smem:[#allocation0]]
  $region22: #{_mlcnn_forward.17} parent=0
    _
  %s6 = ssub.s32 1, %s4
  %s7 = scalar_select 0, %s6, %s4
  // Predicated region
  $region2: #{_mlcnn_forward.17} parent=0 // pred_check
    _
  $region3: #{_mlcnn_forward.17} parent=0 // pred_check_branch
    %9 = sbr.rel (0) target = $region5
  $region4: #{_mlcnn_forward.17} parent=0 // pred_region
    _
  $region5: #{_mlcnn_forward.17} parent=0 // pred_fallthru
    _
  // Predicated region
  $region6: #{_mlcnn_forward.17} parent=0 // pred_check
    _
  $region7: #{_mlcnn_forward.17} parent=0 // pred_check_branch
    %11 = sbr.rel (0) target = $region9
  $region8: #{_mlcnn_forward.17} parent=0 // pred_region
    _
  $region9: #{_mlcnn_forward.17} parent=0 // pred_fallthru
    _
  // Predicated region
  $region10: #{_mlcnn_forward.17} parent=0 // pred_check
    _
  $region11: #{_mlcnn_forward.17} parent=0 // pred_check_branch
    %13 = sbr.rel (0) target = $region13
  $region12: #{_mlcnn_forward.17} parent=0 // pred_region
    _
  $region13: #{_mlcnn_forward.17} parent=0 // pred_fallthru
    _
  %v15 = vld [vmem:[%s0] sm:$0xf]
  %v16 = vld [vmem:[%s0 + $0x4] sm:$0xf]
  %v17 = vld [vmem:[%s0 + $0x8] sm:$0xf]
  %v18 = vld [vmem:[%s0 + $0xc] sm:$0xf]
  %v19 = vld [vmem:[%s2] sm:$0xff]
  %v20 = vld [vmem:[%s2 + $0x8] sm:$0xff]
  %v21 = vld [vmem:[%s2 + $0x10] sm:$0xff]
  %v22 = vld [vmem:[%s2 + $0x18] sm:$0x33]
  %v23 = vld [vmem:[%s2 + $0x20] sm:$0x33]
  %v24 = vld [vmem:[%s2 + $0x28] sm:$0x33]
  %v25 = vld [vmem:[%s1] sm:$0xff]
  %v26 = vld [vmem:[%s1 + $0x8] sm:$0xff]
  %v27 = vld [vmem:[%s1 + $0x10] sm:$0xff]
  %v28 = vld [vmem:[%s1 + $0x18] sm:$0xff]
  %30 = vset.pattern.permute.xlu0 0
  %31 = vperm.xlu0 %30, %v25
  %v32 = vpop.permute.xlu0 %31
  %35 = vset.pattern.permute.xlu0 0
  %36 = vperm.xlu0 %35, %v26
  %v37 = vpop.permute.xlu0 %36
  %40 = vset.pattern.permute.xlu0 0
  %41 = vperm.xlu0 %40, %v27
  %v42 = vpop.permute.xlu0 %41
  %45 = vset.pattern.permute.xlu0 0
  %46 = vperm.xlu0 %45, %v28
  %v47 = vpop.permute.xlu0 %46
  %v53 = vunpack.c.l.b16 %v15
  %v54 = vunpack.c.l.b16 %v16
  %v55 = vunpack.c.l.b16 %v17
  %v56 = vunpack.c.l.b16 %v18
  %v57 = vpack.c.b16 %v54, %v53
  %v58 = vpack.c.b16 %v56, %v55
  %v65 = vunpack.c.l.b16 %v19
  %v66 = vunpack.c.h.b16 %v19
  %v67 = vunpack.c.l.b16 %v20
  %v68 = vunpack.c.h.b16 %v20
  %v69 = vunpack.c.l.b16 %v21
  %v70 = vunpack.c.h.b16 %v21
  %v71 = vunpack.c.l.b16 %v22
  %v72 = vunpack.c.h.b16 %v22
  %v73 = vunpack.c.l.b16 %v23
  %v74 = vunpack.c.h.b16 %v23
  %v75 = vunpack.c.l.b16 %v24
  %v76 = vunpack.c.h.b16 %v24
  %v77 = vpack.c.b16 %v71, %v65
  %v78 = vpack.c.b16 %v72, %v66
  %v79 = vpack.c.b16 %v73, %v67
  %v80 = vpack.c.b16 %v74, %v68
  %v81 = vpack.c.b16 %v75, %v69
  %v82 = vpack.c.b16 %v76, %v70
  %vm83 = vcmask 97280
  %v85 = vsel %vm83, %v57, 0
  %v88 = vsel %vm83, %v58, 0
  %vm90 = vcmask 1045504
  %v92 = vsel %vm90, %v77, 0
  %v95 = vsel %vm90, %v78, 0
  %v98 = vsel %vm90, %v79, 0
  %v101 = vsel %vm90, %v80, 0
  %v104 = vsel %vm90, %v81, 0
  %v107 = vsel %vm90, %v82, 0
  %109 = vmatprep.subr.bf16.mxu0 %v95
  %110 = vmatpush1.bf16.msra.mxu0 %v92
  %111 = vmatprep.subr.bf16.mxu0 0
  %112 = vmatpush1.bf16.msra.mxu0 0
  %113 = vmatprep.subr.bf16.mxu0 0
  %114 = vmatpush1.bf16.msra.mxu0 0
  %115 = vmatprep.subr.bf16.mxu0 0
  %116 = vmatpush1.bf16.msra.mxu0 0
  %117 = vmatprep.subr.bf16.mxu0 0
  %118 = vmatpush1.bf16.msra.mxu0 0
  %119 = vmatprep.subr.bf16.mxu0 0
  %120 = vmatpush1.bf16.msra.mxu0 0
  %121 = vmatprep.subr.bf16.mxu0 0
  %122 = vmatpush1.bf16.msra.mxu0 0
  %123 = vmatprep.subr.bf16.mxu0 0
  %124 = vmatpush1.bf16.msra.mxu0 0
  %125 = vmatprep.subr.bf16.mxu0 0
  %126 = vmatpush1.bf16.msra.mxu0 0
  %127 = vmatprep.subr.bf16.mxu0 0
  %128 = vmatpush1.bf16.msra.mxu0 0
  %129 = vmatprep.subr.bf16.mxu0 0
  %130 = vmatpush1.bf16.msra.mxu0 0
  %131 = vmatprep.subr.bf16.mxu0 0
  %132 = vmatpush1.bf16.msra.mxu0 0
  %133 = vmatprep.subr.bf16.mxu0 0
  %134 = vmatpush1.bf16.msra.mxu0 0
  %135 = vmatprep.subr.bf16.mxu0 0
  %136 = vmatpush1.bf16.msra.mxu0 0
  %137 = vmatprep.subr.bf16.mxu0 0
  %138 = vmatpush1.bf16.msra.mxu0 0
  %139 = vmatprep.subr.bf16.mxu0 0
  %140 = vmatpush1.bf16.msra.mxu0 0
  %141 = vmatprep.mubr.bf16.mxu0 0
  %142 = vmatmul.mubr.bf16.gmra.mrb[0].mxu0 %v85
  %v143 = vpop.f32.mrb[0].mxu0
  %v144 = vadd.f32 %v32, %v143
  %v145 = vpop.f32.mrb[0].mxu0
  %v146 = vadd.f32 %v32, %v145
  %v147 = vpop.f32.mrb[0].mxu0
  %v148 = vadd.f32 %v37, %v147
  %v149 = vpop.f32.mrb[0].mxu0
  %v150 = vadd.f32 %v37, %v149
  %151 = vmatprep.mubr.bf16.mxu0 0
  %152 = vmatmul.mubr.bf16.gmra.mrb[0].mxu0 %v88
  %v153 = vpop.f32.mrb[0].mxu0
  %v154 = vadd.f32 %v42, %v153
  %v155 = vpop.f32.mrb[0].mxu0
  %v156 = vadd.f32 %v42, %v155
  %v157 = vpop.f32.mrb[0].mxu0
  %v158 = vadd.f32 %v47, %v157
  %v159 = vpop.f32.mrb[0].mxu0
  %v160 = vadd.f32 %v47, %v159
  %161 = vdwg.mxu0
  %162 = vmatprep.subr.bf16.mxu0 %v101
  %163 = vmatpush1.bf16.msra.mxu0 %v98
  %164 = vmatprep.subr.bf16.mxu0 0
  %165 = vmatpush1.bf16.msra.mxu0 0
  %166 = vmatprep.subr.bf16.mxu0 0
  %167 = vmatpush1.bf16.msra.mxu0 0
  %168 = vmatprep.subr.bf16.mxu0 0
  %169 = vmatpush1.bf16.msra.mxu0 0
  %170 = vmatprep.subr.bf16.mxu0 0
  %171 = vmatpush1.bf16.msra.mxu0 0
  %172 = vmatprep.subr.bf16.mxu0 0
  %173 = vmatpush1.bf16.msra.mxu0 0
  %174 = vmatprep.subr.bf16.mxu0 0
  %175 = vmatpush1.bf16.msra.mxu0 0
  %176 = vmatprep.subr.bf16.mxu0 0
  %177 = vmatpush1.bf16.msra.mxu0 0
  %178 = vmatprep.subr.bf16.mxu0 0
  %179 = vmatpush1.bf16.msra.mxu0 0
  %180 = vmatprep.subr.bf16.mxu0 0
  %181 = vmatpush1.bf16.msra.mxu0 0
  %182 = vmatprep.subr.bf16.mxu0 0
  %183 = vmatpush1.bf16.msra.mxu0 0
  %184 = vmatprep.subr.bf16.mxu0 0
  %185 = vmatpush1.bf16.msra.mxu0 0
  %186 = vmatprep.subr.bf16.mxu0 0
  %187 = vmatpush1.bf16.msra.mxu0 0
  %188 = vmatprep.subr.bf16.mxu0 0
  %189 = vmatpush1.bf16.msra.mxu0 0
  %190 = vmatprep.subr.bf16.mxu0 0
  %191 = vmatpush1.bf16.msra.mxu0 0
  %192 = vmatprep.subr.bf16.mxu0 0
  %193 = vmatpush1.bf16.msra.mxu0 0
  %194 = vmatprep.mubr.bf16.mxu0 0
  %195 = vmatmul.mubr.bf16.gmra.mrb[0].mxu0 %v85
  %v196 = vpop.f32.mrb[0].mxu0
  %v197 = vadd.f32 %v32, %v196
  %v198 = vpop.f32.mrb[0].mxu0
  %v199 = vadd.f32 %v32, %v198
  %v200 = vpop.f32.mrb[0].mxu0
  %v201 = vadd.f32 %v37, %v200
  %v202 = vpop.f32.mrb[0].mxu0
  %v203 = vadd.f32 %v37, %v202
  %204 = vmatprep.mubr.bf16.mxu0 0
  %205 = vmatmul.mubr.bf16.gmra.mrb[0].mxu0 %v88
  %v206 = vpop.f32.mrb[0].mxu0
  %v207 = vadd.f32 %v42, %v206
  %v208 = vpop.f32.mrb[0].mxu0
  %v209 = vadd.f32 %v42, %v208
  %v210 = vpop.f32.mrb[0].mxu0
  %v211 = vadd.f32 %v47, %v210
  %v212 = vpop.f32.mrb[0].mxu0
  %v213 = vadd.f32 %v47, %v212
  %214 = vdwg.mxu0
  %215 = vmatprep.subr.bf16.mxu0 %v107
  %216 = vmatpush1.bf16.msra.mxu0 %v104
  %217 = vmatprep.subr.bf16.mxu0 0
  %218 = vmatpush1.bf16.msra.mxu0 0
  %219 = vmatprep.subr.bf16.mxu0 0
  %220 = vmatpush1.bf16.msra.mxu0 0
  %221 = vmatprep.subr.bf16.mxu0 0
  %222 = vmatpush1.bf16.msra.mxu0 0
  %223 = vmatprep.subr.bf16.mxu0 0
  %224 = vmatpush1.bf16.msra.mxu0 0
  %225 = vmatprep.subr.bf16.mxu0 0
  %226 = vmatpush1.bf16.msra.mxu0 0
  %227 = vmatprep.subr.bf16.mxu0 0
  %228 = vmatpush1.bf16.msra.mxu0 0
  %229 = vmatprep.subr.bf16.mxu0 0
  %230 = vmatpush1.bf16.msra.mxu0 0
  %231 = vmatprep.subr.bf16.mxu0 0
  %232 = vmatpush1.bf16.msra.mxu0 0
  %233 = vmatprep.subr.bf16.mxu0 0
  %234 = vmatpush1.bf16.msra.mxu0 0
  %235 = vmatprep.subr.bf16.mxu0 0
  %236 = vmatpush1.bf16.msra.mxu0 0
  %237 = vmatprep.subr.bf16.mxu0 0
  %238 = vmatpush1.bf16.msra.mxu0 0
  %239 = vmatprep.subr.bf16.mxu0 0
  %240 = vmatpush1.bf16.msra.mxu0 0
  %241 = vmatprep.subr.bf16.mxu0 0
  %242 = vmatpush1.bf16.msra.mxu0 0
  %243 = vmatprep.subr.bf16.mxu0 0
  %244 = vmatpush1.bf16.msra.mxu0 0
  %245 = vmatprep.subr.bf16.mxu0 0
  %246 = vmatpush1.bf16.msra.mxu0 0
  %247 = vmatprep.mubr.bf16.mxu0 0
  %248 = vmatmul.mubr.bf16.gmra.mrb[0].mxu0 %v85
  %v249 = vpop.f32.mrb[0].mxu0
  %v250 = vadd.f32 %v32, %v249
  %v251 = vpop.f32.mrb[0].mxu0
  %v252 = vadd.f32 %v32, %v251
  %v253 = vpop.f32.mrb[0].mxu0
  %v254 = vadd.f32 %v37, %v253
  %v255 = vpop.f32.mrb[0].mxu0
  %v256 = vadd.f32 %v37, %v255
  %257 = vmatprep.mubr.bf16.mxu0 0
  %258 = vmatmul.mubr.bf16.gmra.mrb[0].mxu0 %v88
  %v259 = vpop.f32.mrb[0].mxu0
  %v260 = vadd.f32 %v42, %v259
  %v261 = vpop.f32.mrb[0].mxu0
  %v262 = vadd.f32 %v42, %v261
  %v263 = vpop.f32.mrb[0].mxu0
  %v264 = vadd.f32 %v47, %v263
  %v265 = vpop.f32.mrb[0].mxu0
  %v266 = vadd.f32 %v47, %v265
  %267 = vdwg.mxu0
  %v268 = vmax.f32 %v144, 0.0
  %v269 = vmax.f32 %v146, 0.0
  %v270 = vmax.f32 %v197, 0.0
  %v271 = vmax.f32 %v199, 0.0
  %v272 = vmax.f32 %v250, 0.0
  %v273 = vmax.f32 %v252, 0.0
  %v274 = vmax.f32 %v148, 0.0
  %v275 = vmax.f32 %v150, 0.0
  %v276 = vmax.f32 %v201, 0.0
  %v277 = vmax.f32 %v203, 0.0
  %v278 = vmax.f32 %v254, 0.0
  %v279 = vmax.f32 %v256, 0.0
  %v280 = vmax.f32 %v154, 0.0
  %v281 = vmax.f32 %v156, 0.0
  %v282 = vmax.f32 %v207, 0.0
  %v283 = vmax.f32 %v209, 0.0
  %v284 = vmax.f32 %v260, 0.0
  %v285 = vmax.f32 %v262, 0.0
  %v286 = vmax.f32 %v158, 0.0
  %v287 = vmax.f32 %v160, 0.0
  %v288 = vmax.f32 %v211, 0.0
  %v289 = vmax.f32 %v213, 0.0
  %v290 = vmax.f32 %v264, 0.0
  %v291 = vmax.f32 %v266, 0.0
  %292 = vst [vmem:[%s3] sm:$0xff] %v268
  %293 = vst [vmem:[%s3 + $0x8] sm:$0xff] %v269
  %294 = vst [vmem:[%s3 + $0x10] sm:$0xff] %v270
  %295 = vst [vmem:[%s3 + $0x18] sm:$0xff] %v271
  %296 = vst [vmem:[%s3 + $0x20] sm:$0xff] %v272
  %297 = vst [vmem:[%s3 + $0x28] sm:$0xff] %v273
  %298 = vst [vmem:[%s3 + $0x30] sm:$0xff] %v274
  %299 = vst [vmem:[%s3 + $0x38] sm:$0xff] %v275
  %300 = vst [vmem:[%s3 + $0x40] sm:$0xff] %v276
  %301 = vst [vmem:[%s3 + $0x48] sm:$0xff] %v277
  %302 = vst [vmem:[%s3 + $0x50] sm:$0xff] %v278
  %303 = vst [vmem:[%s3 + $0x58] sm:$0xff] %v279
  %304 = vst [vmem:[%s3 + $0x60] sm:$0xff] %v280
  %305 = vst [vmem:[%s3 + $0x68] sm:$0xff] %v281
  %306 = vst [vmem:[%s3 + $0x70] sm:$0xff] %v282
  %307 = vst [vmem:[%s3 + $0x78] sm:$0xff] %v283
  %308 = vst [vmem:[%s3 + $0x80] sm:$0xff] %v284
  %309 = vst [vmem:[%s3 + $0x88] sm:$0xff] %v285
  %310 = vst [vmem:[%s3 + $0x90] sm:$0xff] %v286
  %311 = vst [vmem:[%s3 + $0x98] sm:$0xff] %v287
  %312 = vst [vmem:[%s3 + $0xa0] sm:$0xff] %v288
  %313 = vst [vmem:[%s3 + $0xa8] sm:$0xff] %v289
  %314 = vst [vmem:[%s3 + $0xb0] sm:$0xff] %v290
  %315 = vst [vmem:[%s3 + $0xb8] sm:$0xff] %v291
  // Predicated region
  $region14: #{_mlcnn_forward.17} parent=0 // pred_check
    _
  $region15: #{_mlcnn_forward.17} parent=0 // pred_check_branch
    %317 = sbr.rel (0) target = $region17
  $region16: #{_mlcnn_forward.17} parent=0 // pred_region
    _
  $region17: #{_mlcnn_forward.17} parent=0 // pred_fallthru
    _
  // Predicated region
  $region18: #{_mlcnn_forward.17} parent=0 // pred_check
    _
  $region19: #{_mlcnn_forward.17} parent=0 // pred_check_branch
    %319 = sbr.rel (0) target = $region21
  $region20: #{_mlcnn_forward.17} parent=0 // pred_region
    _
  $region21: #{_mlcnn_forward.17} parent=0 // pred_fallthru
    _

// kernel: _mlcnn_forward.18
$region0: #{_mlcnn_forward.18}
  #allocation0 [shape = 'u32[]', space=smem, size = 0x4, offset = 0x4, fixed_abs, tag = 'smem constant byte address 0x4 - core index']
  #allocation1 [shape = 'u32[144,128]{1,0:T(1,128)}', space=vmem, size = 0x12000, scoped, tag = 'internal scratch']
  %s0 = inlined_call_operand.vmem [shape: bf16[64,288], index: 0, kind: input, shape index: {}]
  %s1 = inlined_call_operand.vmem [shape: f32[64,1], index: 1, kind: input, shape index: {}]
  %s2 = inlined_call_operand.vmem [shape: bf16[288,256], index: 2, kind: input, shape index: {}]
  %s3 = inlined_call_operand.vmem [shape: f32[64,256], index: 3, kind: output, shape index: {}]
  %s4 = sld [smem:[#allocation0]]
  $region22: #{_mlcnn_forward.18} parent=0
    _
  %s6 = ssub.s32 1, %s4
  %s7 = scalar_select 0, %s6, %s4
  // Predicated region
  $region2: #{_mlcnn_forward.18} parent=0 // pred_check
    _
  $region3: #{_mlcnn_forward.18} parent=0 // pred_check_branch
    %9 = sbr.rel (0) target = $region5
  $region4: #{_mlcnn_forward.18} parent=0 // pred_region
    _
  $region5: #{_mlcnn_forward.18} parent=0 // pred_fallthru
    _
  // Predicated region
  $region6: #{_mlcnn_forward.18} parent=0 // pred_check
    _
  $region7: #{_mlcnn_forward.18} parent=0 // pred_check_branch
    %11 = sbr.rel (0) target = $region9
  $region8: #{_mlcnn_forward.18} parent=0 // pred_region
    _
  $region9: #{_mlcnn_forward.18} parent=0 // pred_fallthru
    _
  // Predicated region
  $region10: #{_mlcnn_forward.18} parent=0 // pred_check
    _
  $region11: #{_mlcnn_forward.18} parent=0 // pred_check_branch
    %13 = sbr.rel (0) target = $region13
  $region12: #{_mlcnn_forward.18} parent=0 // pred_region
    _
  $region13: #{_mlcnn_forward.18} parent=0 // pred_fallthru
    _
  %v15 = vld [vmem:[%s0] sm:$0xff]
  %v16 = vld [vmem:[%s0 + $0x8] sm:$0xf]
  %v17 = vld [vmem:[%s0 + $0xc] sm:$0xff]
  %v18 = vld [vmem:[%s0 + $0x14] sm:$0xf]
  %v19 = vld [vmem:[%s0 + $0x18] sm:$0xff]
  %v20 = vld [vmem:[%s0 + $0x20] sm:$0xf]
  %v21 = vld [vmem:[%s0 + $0x24] sm:$0xff]
  %v22 = vld [vmem:[%s0 + $0x2c] sm:$0xf]
  %v23 = vld [vmem:[%s0 + $0x30] sm:$0xff]
  %v24 = vld [vmem:[%s0 + $0x38] sm:$0xf]
  %v25 = vld [vmem:[%s0 + $0x3c] sm:$0xff]
  %v26 = vld [vmem:[%s0 + $0x44] sm:$0xf]
  %v27 = vld [vmem:[%s0 + $0x48] sm:$0xff]
  %v28 = vld [vmem:[%s0 + $0x50] sm:$0xf]
  %v29 = vld [vmem:[%s0 + $0x54] sm:$0xff]
  %v30 = vld [vmem:[%s0 + $0x5c] sm:$0xf]
  %v31 = vld [vmem:[%s2] sm:$0xff]
  %v32 = vld [vmem:[%s2 + $0x8] sm:$0xff]
  %v33 = vld [vmem:[%s2 + $0x10] sm:$0xff]
  %v34 = vld [vmem:[%s2 + $0x18] sm:$0xff]
  %v35 = vld [vmem:[%s2 + $0x20] sm:$0xff]
  %v36 = vld [vmem:[%s2 + $0x28] sm:$0xff]
  %v37 = vld [vmem:[%s2 + $0x30] sm:$0xff]
  %v38 = vld [vmem:[%s2 + $0x38] sm:$0xff]
  %v39 = vld [vmem:[%s2 + $0x40] sm:$0xff]
  %v40 = vld [vmem:[%s2 + $0x48] sm:$0xff]
  %v41 = vld [vmem:[%s2 + $0x50] sm:$0xff]
  %v42 = vld [vmem:[%s2 + $0x58] sm:$0xff]
  %v43 = vld [vmem:[%s2 + $0x60] sm:$0xff]
  %v44 = vld [vmem:[%s2 + $0x68] sm:$0xff]
  %v45 = vld [vmem:[%s2 + $0x70] sm:$0xff]
  %v46 = vld [vmem:[%s2 + $0x78] sm:$0xff]
  %v47 = vld [vmem:[%s2 + $0x80] sm:$0xff]
  %v48 = vld [vmem:[%s2 + $0x88] sm:$0xff]
  %v49 = vld [vmem:[%s2 + $0x90] sm:$0xff]
  %v50 = vld [vmem:[%s2 + $0x98] sm:$0xff]
  %v51 = vld [vmem:[%s2 + $0xa0] sm:$0xff]
  %v52 = vld [vmem:[%s2 + $0xa8] sm:$0xff]
  %v53 = vld [vmem:[%s2 + $0xb0] sm:$0xff]
  %v54 = vld [vmem:[%s2 + $0xb8] sm:$0xff]
  %v55 = vld [vmem:[%s2 + $0xc0] sm:$0xff]
  %v56 = vld [vmem:[%s2 + $0xc8] sm:$0xff]
  %v57 = vld [vmem:[%s2 + $0xd0] sm:$0xff]
  %v58 = vld [vmem:[%s2 + $0xd8] sm:$0xff]
  %v59 = vld [vmem:[%s2 + $0xe0] sm:$0xff]
  %v60 = vld [vmem:[%s2 + $0xe8] sm:$0xff]
  %v61 = vld [vmem:[%s2 + $0xf0] sm:$0xff]
  %v62 = vld [vmem:[%s2 + $0xf8] sm:$0xff]
  %v63 = vld [vmem:[%s2 + $0x100] sm:$0xff]
  %v64 = vld [vmem:[%s2 + $0x108] sm:$0xff]
  %v65 = vld [vmem:[%s2 + $0x110] sm:$0xff]
  %v66 = vld [vmem:[%s2 + $0x118] sm:$0xff]
  %v67 = vld [vmem:[%s1] sm:$0xff]
  %v68 = vld [vmem:[%s1 + $0x8] sm:$0xff]
  %v69 = vld [vmem:[%s1 + $0x10] sm:$0xff]
  %v70 = vld [vmem:[%s1 + $0x18] sm:$0xff]
  %v71 = vld [vmem:[%s1 + $0x20] sm:$0xff]
  %v72 = vld [vmem:[%s1 + $0x28] sm:$0xff]
  %v73 = vld [vmem:[%s1 + $0x30] sm:$0xff]
  %v74 = vld [vmem:[%s1 + $0x38] sm:$0xff]
  %76 = vset.pattern.permute.xlu0 0
  %77 = vperm.xlu0 %76, %v67
  %v78 = vpop.permute.xlu0 %77
  %81 = vset.pattern.permute.xlu0 0
  %82 = vperm.xlu0 %81, %v68
  %v83 = vpop.permute.xlu0 %82
  %86 = vset.pattern.permute.xlu0 0
  %87 = vperm.xlu0 %86, %v69
  %v88 = vpop.permute.xlu0 %87
  %91 = vset.pattern.permute.xlu0 0
  %92 = vperm.xlu0 %91, %v70
  %v93 = vpop.permute.xlu0 %92
  %96 = vset.pattern.permute.xlu0 0
  %97 = vperm.xlu0 %96, %v71
  %v98 = vpop.permute.xlu0 %97
  %101 = vset.pattern.permute.xlu0 0
  %102 = vperm.xlu0 %101, %v72
  %v103 = vpop.permute.xlu0 %102
  %106 = vset.pattern.permute.xlu0 0
  %107 = vperm.xlu0 %106, %v73
  %v108 = vpop.permute.xlu0 %107
  %111 = vset.pattern.permute.xlu0 0
  %112 = vperm.xlu0 %111, %v74
  %v113 = vpop.permute.xlu0 %112
  %v131 = vunpack.c.l.b16 %v15
  %v132 = vunpack.c.h.b16 %v15
  %v133 = vunpack.c.l.b16 %v16
  %v134 = vunpack.c.l.b16 %v17
  %v135 = vunpack.c.h.b16 %v17
  %v136 = vunpack.c.l.b16 %v18
  %v137 = vunpack.c.l.b16 %v19
  %v138 = vunpack.c.h.b16 %v19
  %v139 = vunpack.c.l.b16 %v20
  %v140 = vunpack.c.l.b16 %v21
  %v141 = vunpack.c.h.b16 %v21
  %v142 = vunpack.c.l.b16 %v22
  %v143 = vunpack.c.l.b16 %v23
  %v144 = vunpack.c.h.b16 %v23
  %v145 = vunpack.c.l.b16 %v24
  %v146 = vunpack.c.l.b16 %v25
  %v147 = vunpack.c.h.b16 %v25
  %v148 = vunpack.c.l.b16 %v26
  %v149 = vunpack.c.l.b16 %v27
  %v150 = vunpack.c.h.b16 %v27
  %v151 = vunpack.c.l.b16 %v28
  %v152 = vunpack.c.l.b16 %v29
  %v153 = vunpack.c.h.b16 %v29
  %v154 = vunpack.c.l.b16 %v30
  %v155 = vpack.c.b16 %v134, %v131
  %v156 = vpack.c.b16 %v135, %v132
  %v157 = vpack.c.b16 %v136, %v133
  %v158 = vpack.c.b16 %v140, %v137
  %v159 = vpack.c.b16 %v141, %v138
  %v160 = vpack.c.b16 %v142, %v139
  %v161 = vpack.c.b16 %v146, %v143
  %v162 = vpack.c.b16 %v147, %v144
  %v163 = vpack.c.b16 %v148, %v145
  %v164 = vpack.c.b16 %v152, %v149
  %v165 = vpack.c.b16 %v153, %v150
  %v166 = vpack.c.b16 %v154, %v151
  %v211 = vunpack.c.l.b16 %v31
  %v212 = vunpack.c.h.b16 %v31
  %v213 = vunpack.c.l.b16 %v32
  %v214 = vunpack.c.h.b16 %v32
  %v215 = vunpack.c.l.b16 %v33
  %v216 = vunpack.c.h.b16 %v33
  %v217 = vunpack.c.l.b16 %v34
  %v218 = vunpack.c.h.b16 %v34
  %v219 = vunpack.c.l.b16 %v35
  %v220 = vunpack.c.h.b16 %v35
  %v221 = vunpack.c.l.b16 %v36
  %v222 = vunpack.c.h.b16 %v36
  %v223 = vunpack.c.l.b16 %v37
  %v224 = vunpack.c.h.b16 %v37
  %v225 = vunpack.c.l.b16 %v38
  %v226 = vunpack.c.h.b16 %v38
  %v227 = vunpack.c.l.b16 %v39
  %v228 = vunpack.c.h.b16 %v39
  %v229 = vunpack.c.l.b16 %v40
  %v230 = vunpack.c.h.b16 %v40
  %v231 = vunpack.c.l.b16 %v41
  %v232 = vunpack.c.h.b16 %v41
  %v233 = vunpack.c.l.b16 %v42
  %v234 = vunpack.c.h.b16 %v42
  %v235 = vunpack.c.l.b16 %v43
  %v236 = vunpack.c.h.b16 %v43
  %v237 = vunpack.c.l.b16 %v44
  %v238 = vunpack.c.h.b16 %v44
  %v239 = vunpack.c.l.b16 %v45
  %v240 = vunpack.c.h.b16 %v45
  %v241 = vunpack.c.l.b16 %v46
  %v242 = vunpack.c.h.b16 %v46
  %v243 = vunpack.c.l.b16 %v47
  %v244 = vunpack.c.h.b16 %v47
  %v245 = vunpack.c.l.b16 %v48
  %v246 = vunpack.c.h.b16 %v48
  %v247 = vunpack.c.l.b16 %v49
  %v248 = vunpack.c.h.b16 %v49
  %v249 = vunpack.c.l.b16 %v50
  %v250 = vunpack.c.h.b16 %v50
  %v251 = vunpack.c.l.b16 %v51
  %v252 = vunpack.c.h.b16 %v51
  %v253 = vunpack.c.l.b16 %v52
  %v254 = vunpack.c.h.b16 %v52
  %v255 = vunpack.c.l.b16 %v53
  %v256 = vunpack.c.h.b16 %v53
  %v257 = vunpack.c.l.b16 %v54
  %v258 = vunpack.c.h.b16 %v54
  %v259 = vunpack.c.l.b16 %v55
  %v260 = vunpack.c.h.b16 %v55
  %v261 = vunpack.c.l.b16 %v56
  %v262 = vunpack.c.h.b16 %v56
  %v263 = vunpack.c.l.b16 %v57
  %v264 = vunpack.c.h.b16 %v57
  %v265 = vunpack.c.l.b16 %v58
  %v266 = vunpack.c.h.b16 %v58
  %v267 = vunpack.c.l.b16 %v59
  %v268 = vunpack.c.h.b16 %v59
  %v269 = vunpack.c.l.b16 %v60
  %v270 = vunpack.c.h.b16 %v60
  %v271 = vunpack.c.l.b16 %v61
  %v272 = vunpack.c.h.b16 %v61
  %v273 = vunpack.c.l.b16 %v62
  %v274 = vunpack.c.h.b16 %v62
  %v275 = vunpack.c.l.b16 %v63
  %v276 = vunpack.c.h.b16 %v63
  %v277 = vunpack.c.l.b16 %v64
  %v278 = vunpack.c.h.b16 %v64
  %v279 = vunpack.c.l.b16 %v65
  %v280 = vunpack.c.h.b16 %v65
  %v281 = vunpack.c.l.b16 %v66
  %v282 = vunpack.c.h.b16 %v66
  %v283 = vpack.c.b16 %v213, %v211
  %v284 = vpack.c.b16 %v214, %v212
  %v285 = vpack.c.b16 %v217, %v215
  %v286 = vpack.c.b16 %v218, %v216
  %v287 = vpack.c.b16 %v221, %v219
  %v288 = vpack.c.b16 %v222, %v220
  %v289 = vpack.c.b16 %v225, %v223
  %v290 = vpack.c.b16 %v226, %v224
  %v291 = vpack.c.b16 %v229, %v227
  %v292 = vpack.c.b16 %v230, %v228
  %v293 = vpack.c.b16 %v233, %v231
  %v294 = vpack.c.b16 %v234, %v232
  %v295 = vpack.c.b16 %v237, %v235
  %v296 = vpack.c.b16 %v238, %v236
  %v297 = vpack.c.b16 %v241, %v239
  %v298 = vpack.c.b16 %v242, %v240
  %v299 = vpack.c.b16 %v245, %v243
  %v300 = vpack.c.b16 %v246, %v244
  %v301 = vpack.c.b16 %v249, %v247
  %v302 = vpack.c.b16 %v250, %v248
  %v303 = vpack.c.b16 %v253, %v251
  %v304 = vpack.c.b16 %v254, %v252
  %v305 = vpack.c.b16 %v257, %v255
  %v306 = vpack.c.b16 %v258, %v256
  %v307 = vpack.c.b16 %v261, %v259
  %v308 = vpack.c.b16 %v262, %v260
  %v309 = vpack.c.b16 %v265, %v263
  %v310 = vpack.c.b16 %v266, %v264
  %v311 = vpack.c.b16 %v269, %v267
  %v312 = vpack.c.b16 %v270, %v268
  %v313 = vpack.c.b16 %v273, %v271
  %v314 = vpack.c.b16 %v274, %v272
  %v315 = vpack.c.b16 %v277, %v275
  %v316 = vpack.c.b16 %v278, %v276
  %v317 = vpack.c.b16 %v281, %v279
  %v318 = vpack.c.b16 %v282, %v280
  %vm355 = vcmask 261120
  %v357 = vsel %vm355, %v157, 0
  %v360 = vsel %vm355, %v160, 0
  %v363 = vsel %vm355, %v163, 0
  %v366 = vsel %vm355, %v166, 0
  %368 = vmatprep.subr.bf16.mxu0 %v284
  %369 = vmatpush1.bf16.msra.mxu0 %v283
  %370 = vmatprep.subr.bf16.mxu0 %v286
  %371 = vmatpush1.bf16.msra.mxu0 %v285
  %372 = vmatprep.subr.bf16.mxu0 %v288
  %373 = vmatpush1.bf16.msra.mxu0 %v287
  %374 = vmatprep.subr.bf16.mxu0 %v290
  %375 = vmatpush1.bf16.msra.mxu0 %v289
  %376 = vmatprep.subr.bf16.mxu0 %v292
  %377 = vmatpush1.bf16.msra.mxu0 %v291
  %378 = vmatprep.subr.bf16.mxu0 %v294
  %379 = vmatpush1.bf16.msra.mxu0 %v293
  %380 = vmatprep.subr.bf16.mxu0 %v296
  %381 = vmatpush1.bf16.msra.mxu0 %v295
  %382 = vmatprep.subr.bf16.mxu0 %v298
  %383 = vmatpush1.bf16.msra.mxu0 %v297
  %384 = vmatprep.subr.bf16.mxu0 %v300
  %385 = vmatpush1.bf16.msra.mxu0 %v299
  %386 = vmatprep.subr.bf16.mxu0 %v302
  %387 = vmatpush1.bf16.msra.mxu0 %v301
  %388 = vmatprep.subr.bf16.mxu0 %v304
  %389 = vmatpush1.bf16.msra.mxu0 %v303
  %390 = vmatprep.subr.bf16.mxu0 %v306
  %391 = vmatpush1.bf16.msra.mxu0 %v305
  %392 = vmatprep.subr.bf16.mxu0 %v308
  %393 = vmatpush1.bf16.msra.mxu0 %v307
  %394 = vmatprep.subr.bf16.mxu0 %v310
  %395 = vmatpush1.bf16.msra.mxu0 %v309
  %396 = vmatprep.subr.bf16.mxu0 %v312
  %397 = vmatpush1.bf16.msra.mxu0 %v311
  %398 = vmatprep.subr.bf16.mxu0 %v314
  %399 = vmatpush1.bf16.msra.mxu0 %v313
  %400 = vmatprep.mubr.bf16.mxu0 %v156
  %401 = vmatmul.mubr.bf16.gmra.mrb[0].mxu0 %v155
  %v402 = vpop.f32.mrb[0].mxu0
  %v403 = vadd.f32 %v78, %v402
  %v404 = vpop.f32.mrb[0].mxu0
  %v405 = vadd.f32 %v78, %v404
  %v406 = vpop.f32.mrb[0].mxu0
  %v407 = vadd.f32 %v83, %v406
  %v408 = vpop.f32.mrb[0].mxu0
  %v409 = vadd.f32 %v83, %v408
  %410 = vmatprep.mubr.bf16.mxu0 %v159
  %411 = vmatmul.mubr.bf16.gmra.mrb[0].mxu0 %v158
  %v412 = vpop.f32.mrb[0].mxu0
  %v413 = vadd.f32 %v88, %v412
  %v414 = vpop.f32.mrb[0].mxu0
  %v415 = vadd.f32 %v88, %v414
  %v416 = vpop.f32.mrb[0].mxu0
  %v417 = vadd.f32 %v93, %v416
  %v418 = vpop.f32.mrb[0].mxu0
  %v419 = vadd.f32 %v93, %v418
  %420 = vmatprep.mubr.bf16.mxu0 %v162
  %421 = vmatmul.mubr.bf16.gmra.mrb[0].mxu0 %v161
  %v422 = vpop.f32.mrb[0].mxu0
  %v423 = vadd.f32 %v98, %v422
  %v424 = vpop.f32.mrb[0].mxu0
  %v425 = vadd.f32 %v98, %v424
  %v426 = vpop.f32.mrb[0].mxu0
  %v427 = vadd.f32 %v103, %v426
  %v428 = vpop.f32.mrb[0].mxu0
  %v429 = vadd.f32 %v103, %v428
  %430 = vmatprep.mubr.bf16.mxu0 %v165
  %431 = vmatmul.mubr.bf16.gmra.mrb[0].mxu0 %v164
  %v432 = vpop.f32.mrb[0].mxu0
  %v433 = vadd.f32 %v108, %v432
  %v434 = vpop.f32.mrb[0].mxu0
  %v435 = vadd.f32 %v108, %v434
  %v436 = vpop.f32.mrb[0].mxu0
  %v437 = vadd.f32 %v113, %v436
  %v438 = vpop.f32.mrb[0].mxu0
  %v439 = vadd.f32 %v113, %v438
  %440 = vdwg.mxu0
  %441 = vmatprep.subr.bf16.mxu0 %v316
  %442 = vmatpush1.bf16.msra.mxu0 %v315
  %443 = vmatprep.subr.bf16.mxu0 %v318
  %444 = vmatpush1.bf16.msra.mxu0 %v317
  %445 = vmatprep.subr.bf16.mxu0 0
  %446 = vmatpush1.bf16.msra.mxu0 0
  %447 = vmatprep.subr.bf16.mxu0 0
  %448 = vmatpush1.bf16.msra.mxu0 0
  %449 = vmatprep.subr.bf16.mxu0 0
  %450 = vmatpush1.bf16.msra.mxu0 0
  %451 = vmatprep.subr.bf16.mxu0 0
  %452 = vmatpush1.bf16.msra.mxu0 0
  %453 = vmatprep.subr.bf16.mxu0 0
  %454 = vmatpush1.bf16.msra.mxu0 0
  %455 = vmatprep.subr.bf16.mxu0 0
  %456 = vmatpush1.bf16.msra.mxu0 0
  %457 = vmatprep.subr.bf16.mxu0 0
  %458 = vmatpush1.bf16.msra.mxu0 0
  %459 = vmatprep.subr.bf16.mxu0 0
  %460 = vmatpush1.bf16.msra.mxu0 0
  %461 = vmatprep.subr.bf16.mxu0 0
  %462 = vmatpush1.bf16.msra.mxu0 0
  %463 = vmatprep.subr.bf16.mxu0 0
  %464 = vmatpush1.bf16.msra.mxu0 0
  %465 = vmatprep.subr.bf16.mxu0 0
  %466 = vmatpush1.bf16.msra.mxu0 0
  %467 = vmatprep.subr.bf16.mxu0 0
  %468 = vmatpush1.bf16.msra.mxu0 0
  %469 = vmatprep.subr.bf16.mxu0 0
  %470 = vmatpush1.bf16.msra.mxu0 0
  %471 = vmatprep.subr.bf16.mxu0 0
  %472 = vmatpush1.bf16.msra.mxu0 0
  %473 = vmatprep.mubr.bf16.mxu0 0
  %474 = vmatmul.mubr.bf16.gmra.mrb[0].mxu0 %v357
  %v475 = vpop.f32.mrb[0].mxu0
  %v476 = vadd.f32 %v403, %v475
  %v477 = vpop.f32.mrb[0].mxu0
  %v478 = vadd.f32 %v405, %v477
  %v479 = vpop.f32.mrb[0].mxu0
  %v480 = vadd.f32 %v407, %v479
  %v481 = vpop.f32.mrb[0].mxu0
  %v482 = vadd.f32 %v409, %v481
  %483 = vmatprep.mubr.bf16.mxu0 0
  %484 = vmatmul.mubr.bf16.gmra.mrb[0].mxu0 %v360
  %v485 = vpop.f32.mrb[0].mxu0
  %v486 = vadd.f32 %v413, %v485
  %v487 = vpop.f32.mrb[0].mxu0
  %v488 = vadd.f32 %v415, %v487
  %v489 = vpop.f32.mrb[0].mxu0
  %v490 = vadd.f32 %v417, %v489
  %v491 = vpop.f32.mrb[0].mxu0
  %v492 = vadd.f32 %v419, %v491
  %493 = vmatprep.mubr.bf16.mxu0 0
  %494 = vmatmul.mubr.bf16.gmra.mrb[0].mxu0 %v363
  %v495 = vpop.f32.mrb[0].mxu0
  %v496 = vadd.f32 %v423, %v495
  %v497 = vpop.f32.mrb[0].mxu0
  %v498 = vadd.f32 %v425, %v497
  %v499 = vpop.f32.mrb[0].mxu0
  %v500 = vadd.f32 %v427, %v499
  %v501 = vpop.f32.mrb[0].mxu0
  %v502 = vadd.f32 %v429, %v501
  %503 = vmatprep.mubr.bf16.mxu0 0
  %504 = vmatmul.mubr.bf16.gmra.mrb[0].mxu0 %v366
  %v505 = vpop.f32.mrb[0].mxu0
  %v506 = vadd.f32 %v433, %v505
  %v507 = vpop.f32.mrb[0].mxu0
  %v508 = vadd.f32 %v435, %v507
  %v509 = vpop.f32.mrb[0].mxu0
  %v510 = vadd.f32 %v437, %v509
  %v511 = vpop.f32.mrb[0].mxu0
  %v512 = vadd.f32 %v439, %v511
  %513 = vdwg.mxu0
  %v514 = vmax.f32 %v476, 0.0
  %v515 = vmax.f32 %v478, 0.0
  %v516 = vmax.f32 %v480, 0.0
  %v517 = vmax.f32 %v482, 0.0
  %v518 = vmax.f32 %v486, 0.0
  %v519 = vmax.f32 %v488, 0.0
  %v520 = vmax.f32 %v490, 0.0
  %v521 = vmax.f32 %v492, 0.0
  %v522 = vmax.f32 %v496, 0.0
  %v523 = vmax.f32 %v498, 0.0
  %v524 = vmax.f32 %v500, 0.0
  %v525 = vmax.f32 %v502, 0.0
  %v526 = vmax.f32 %v506, 0.0
  %v527 = vmax.f32 %v508, 0.0
  %v528 = vmax.f32 %v510, 0.0
  %v529 = vmax.f32 %v512, 0.0
  %530 = vst [vmem:[%s3] sm:$0xff] %v514
  %531 = vst [vmem:[%s3 + $0x8] sm:$0xff] %v515
  %532 = vst [vmem:[%s3 + $0x10] sm:$0xff] %v516
  %533 = vst [vmem:[%s3 + $0x18] sm:$0xff] %v517
  %534 = vst [vmem:[%s3 + $0x20] sm:$0xff] %v518
  %535 = vst [vmem:[%s3 + $0x28] sm:$0xff] %v519
  %536 = vst [vmem:[%s3 + $0x30] sm:$0xff] %v520
  %537 = vst [vmem:[%s3 + $0x38] sm:$0xff] %v521
  %538 = vst [vmem:[%s3 + $0x40] sm:$0xff] %v522
  %539 = vst [vmem:[%s3 + $0x48] sm:$0xff] %v523
  %540 = vst [vmem:[%s3 + $0x50] sm:$0xff] %v524
  %541 = vst [vmem:[%s3 + $0x58] sm:$0xff] %v525
  %542 = vst [vmem:[%s3 + $0x60] sm:$0xff] %v526
  %543 = vst [vmem:[%s3 + $0x68] sm:$0xff] %v527
  %544 = vst [vmem:[%s3 + $0x70] sm:$0xff] %v528
  %545 = vst [vmem:[%s3 + $0x78] sm:$0xff] %v529
  // Predicated region
  $region14: #{_mlcnn_forward.18} parent=0 // pred_check
    _
  $region15: #{_mlcnn_forward.18} parent=0 // pred_check_branch
    %547 = sbr.rel (0) target = $region17
  $region16: #{_mlcnn_forward.18} parent=0 // pred_region
    _
  $region17: #{_mlcnn_forward.18} parent=0 // pred_fallthru
    _
  // Predicated region
  $region18: #{_mlcnn_forward.18} parent=0 // pred_check
    _
  $region19: #{_mlcnn_forward.18} parent=0 // pred_check_branch
    %549 = sbr.rel (0) target = $region21
  $region20: #{_mlcnn_forward.18} parent=0 // pred_region
    _
  $region21: #{_mlcnn_forward.18} parent=0 // pred_fallthru
    _

// kernel: _mlcnn_forward.15
$region0: #{_mlcnn_forward.15}
  #allocation0 [shape = 'u32[]', space=smem, size = 0x4, offset = 0x4, fixed_abs, tag = 'smem constant byte address 0x4 - core index']
  #allocation1 [shape = 'u32[144,128]{1,0:T(1,128)}', space=vmem, size = 0x12000, scoped, tag = 'internal scratch']
  %s0 = inlined_call_operand.vmem [shape: bf16[32,24], index: 0, kind: input, shape index: {}]
  %s1 = inlined_call_operand.vmem [shape: f32[32,1], index: 1, kind: input, shape index: {}]
  %s2 = inlined_call_operand.vmem [shape: bf16[24,768], index: 2, kind: input, shape index: {}]
  %s3 = inlined_call_operand.vmem [shape: f32[32,768], index: 3, kind: output, shape index: {}]
  %s4 = sld [smem:[#allocation0]]
  $region22: #{_mlcnn_forward.15} parent=0
    _
  %s6 = ssub.s32 1, %s4
  %s7 = scalar_select 0, %s6, %s4
  // Predicated region
  $region2: #{_mlcnn_forward.15} parent=0 // pred_check
    _
  $region3: #{_mlcnn_forward.15} parent=0 // pred_check_branch
    %9 = sbr.rel (0) target = $region5
  $region4: #{_mlcnn_forward.15} parent=0 // pred_region
    _
  $region5: #{_mlcnn_forward.15} parent=0 // pred_fallthru
    _
  // Predicated region
  $region6: #{_mlcnn_forward.15} parent=0 // pred_check
    _
  $region7: #{_mlcnn_forward.15} parent=0 // pred_check_branch
    %11 = sbr.rel (0) target = $region9
  $region8: #{_mlcnn_forward.15} parent=0 // pred_region
    _
  $region9: #{_mlcnn_forward.15} parent=0 // pred_fallthru
    _
  // Predicated region
  $region10: #{_mlcnn_forward.15} parent=0 // pred_check
    _
  $region11: #{_mlcnn_forward.15} parent=0 // pred_check_branch
    %13 = sbr.rel (0) target = $region13
  $region12: #{_mlcnn_forward.15} parent=0 // pred_region
    _
  $region13: #{_mlcnn_forward.15} parent=0 // pred_fallthru
    _
  %v15 = vld [vmem:[%s0] sm:$0xf]
  %v16 = vld [vmem:[%s0 + $0x4] sm:$0xf]
  %v17 = vld [vmem:[%s0 + $0x8] sm:$0xf]
  %v18 = vld [vmem:[%s0 + $0xc] sm:$0xf]
  %v19 = vld [vmem:[%s2] sm:$0xff]
  %v20 = vld [vmem:[%s2 + $0x8] sm:$0xff]
  %v21 = vld [vmem:[%s2 + $0x10] sm:$0xff]
  %v22 = vld [vmem:[%s2 + $0x18] sm:$0xff]
  %v23 = vld [vmem:[%s2 + $0x20] sm:$0xff]
  %v24 = vld [vmem:[%s2 + $0x28] sm:$0xff]
  %v25 = vld [vmem:[%s2 + $0x30] sm:$0xff]
  %v26 = vld [vmem:[%s2 + $0x38] sm:$0xff]
  %v27 = vld [vmem:[%s2 + $0x40] sm:$0xff]
  %v28 = vld [vmem:[%s1] sm:$0xff]
  %v29 = vld [vmem:[%s1 + $0x8] sm:$0xff]
  %v30 = vld [vmem:[%s1 + $0x10] sm:$0xff]
  %v31 = vld [vmem:[%s1 + $0x18] sm:$0xff]
  %33 = vset.pattern.permute.xlu0 0
  %34 = vperm.xlu0 %33, %v28
  %v35 = vpop.permute.xlu0 %34
  %38 = vset.pattern.permute.xlu0 0
  %39 = vperm.xlu0 %38, %v29
  %v40 = vpop.permute.xlu0 %39
  %43 = vset.pattern.permute.xlu0 0
  %44 = vperm.xlu0 %43, %v30
  %v45 = vpop.permute.xlu0 %44
  %48 = vset.pattern.permute.xlu0 0
  %49 = vperm.xlu0 %48, %v31
  %v50 = vpop.permute.xlu0 %49
  %v56 = vunpack.c.l.b16 %v15
  %v57 = vunpack.c.l.b16 %v16
  %v58 = vunpack.c.l.b16 %v17
  %v59 = vunpack.c.l.b16 %v18
  %v60 = vpack.c.b16 %v57, %v56
  %v61 = vpack.c.b16 %v59, %v58
  %v71 = vunpack.c.l.b16 %v19
  %v72 = vunpack.c.h.b16 %v19
  %v73 = vunpack.c.l.b16 %v20
  %v74 = vunpack.c.h.b16 %v20
  %v75 = vunpack.c.l.b16 %v21
  %v76 = vunpack.c.h.b16 %v21
  %v77 = vunpack.c.l.b16 %v22
  %v78 = vunpack.c.h.b16 %v22
  %v79 = vunpack.c.l.b16 %v23
  %v80 = vunpack.c.h.b16 %v23
  %v81 = vunpack.c.l.b16 %v24
  %v82 = vunpack.c.h.b16 %v24
  %v83 = vunpack.c.l.b16 %v25
  %v84 = vunpack.c.h.b16 %v25
  %v85 = vunpack.c.l.b16 %v26
  %v86 = vunpack.c.h.b16 %v26
  %v87 = vunpack.c.l.b16 %v27
  %v88 = vunpack.c.h.b16 %v27
  %v89 = vpack.c.b16 %v77, %v71
  %v90 = vpack.c.b16 %v78, %v72
  %v91 = vpack.c.b16 %v79, %v73
  %v92 = vpack.c.b16 %v80, %v74
  %v93 = vpack.c.b16 %v81, %v75
  %v94 = vpack.c.b16 %v82, %v76
  %v95 = vpack.c.b16 %v83, %v83
  %v96 = vpack.c.b16 %v84, %v84
  %v97 = vpack.c.b16 %v85, %v85
  %v98 = vpack.c.b16 %v86, %v86
  %v99 = vpack.c.b16 %v87, %v87
  %v100 = vpack.c.b16 %v88, %v88
  %vm107 = vcmask 195584
  %v109 = vsel %vm107, %v60, 0
  %v112 = vsel %vm107, %v61, 0
  %vm114 = vcmask 1043456
  %v116 = vsel %vm114, %v95, 0
  %v119 = vsel %vm114, %v96, 0
  %v122 = vsel %vm114, %v97, 0
  %v125 = vsel %vm114, %v98, 0
  %v128 = vsel %vm114, %v99, 0
  %v131 = vsel %vm114, %v100, 0
  %133 = vmatprep.subr.bf16.mxu0 %v90
  %134 = vmatpush1.bf16.msra.mxu0 %v89
  %135 = vmatprep.subr.bf16.mxu0 %v119
  %136 = vmatpush1.bf16.msra.mxu0 %v116
  %137 = vmatprep.subr.bf16.mxu0 0
  %138 = vmatpush1.bf16.msra.mxu0 0
  %139 = vmatprep.subr.bf16.mxu0 0
  %140 = vmatpush1.bf16.msra.mxu0 0
  %141 = vmatprep.subr.bf16.mxu0 0
  %142 = vmatpush1.bf16.msra.mxu0 0
  %143 = vmatprep.subr.bf16.mxu0 0
  %144 = vmatpush1.bf16.msra.mxu0 0
  %145 = vmatprep.subr.bf16.mxu0 0
  %146 = vmatpush1.bf16.msra.mxu0 0
  %147 = vmatprep.subr.bf16.mxu0 0
  %148 = vmatpush1.bf16.msra.mxu0 0
  %149 = vmatprep.subr.bf16.mxu0 0
  %150 = vmatpush1.bf16.msra.mxu0 0
  %151 = vmatprep.subr.bf16.mxu0 0
  %152 = vmatpush1.bf16.msra.mxu0 0
  %153 = vmatprep.subr.bf16.mxu0 0
  %154 = vmatpush1.bf16.msra.mxu0 0
  %155 = vmatprep.subr.bf16.mxu0 0
  %156 = vmatpush1.bf16.msra.mxu0 0
  %157 = vmatprep.subr.bf16.mxu0 0
  %158 = vmatpush1.bf16.msra.mxu0 0
  %159 = vmatprep.subr.bf16.mxu0 0
  %160 = vmatpush1.bf16.msra.mxu0 0
  %161 = vmatprep.subr.bf16.mxu0 0
  %162 = vmatpush1.bf16.msra.mxu0 0
  %163 = vmatprep.subr.bf16.mxu0 0
  %164 = vmatpush1.bf16.msra.mxu0 0
  %165 = vmatprep.mubr.bf16.mxu0 0
  %166 = vmatmul.mubr.bf16.gmra.mrb[0].mxu0 %v109
  %v167 = vpop.f32.mrb[0].mxu0
  %v168 = vadd.f32 %v35, %v167
  %v169 = vpop.f32.mrb[0].mxu0
  %v170 = vadd.f32 %v35, %v169
  %v171 = vpop.f32.mrb[0].mxu0
  %v172 = vadd.f32 %v40, %v171
  %v173 = vpop.f32.mrb[0].mxu0
  %v174 = vadd.f32 %v40, %v173
  %175 = vmatprep.mubr.bf16.mxu0 0
  %176 = vmatmul.mubr.bf16.gmra.mrb[0].mxu0 %v112
  %v177 = vpop.f32.mrb[0].mxu0
  %v178 = vadd.f32 %v45, %v177
  %v179 = vpop.f32.mrb[0].mxu0
  %v180 = vadd.f32 %v45, %v179
  %v181 = vpop.f32.mrb[0].mxu0
  %v182 = vadd.f32 %v50, %v181
  %v183 = vpop.f32.mrb[0].mxu0
  %v184 = vadd.f32 %v50, %v183
  %185 = vdwg.mxu0
  %186 = vmatprep.subr.bf16.mxu0 %v92
  %187 = vmatpush1.bf16.msra.mxu0 %v91
  %188 = vmatprep.subr.bf16.mxu0 %v125
  %189 = vmatpush1.bf16.msra.mxu0 %v122
  %190 = vmatprep.subr.bf16.mxu0 0
  %191 = vmatpush1.bf16.msra.mxu0 0
  %192 = vmatprep.subr.bf16.mxu0 0
  %193 = vmatpush1.bf16.msra.mxu0 0
  %194 = vmatprep.subr.bf16.mxu0 0
  %195 = vmatpush1.bf16.msra.mxu0 0
  %196 = vmatprep.subr.bf16.mxu0 0
  %197 = vmatpush1.bf16.msra.mxu0 0
  %198 = vmatprep.subr.bf16.mxu0 0
  %199 = vmatpush1.bf16.msra.mxu0 0
  %200 = vmatprep.subr.bf16.mxu0 0
  %201 = vmatpush1.bf16.msra.mxu0 0
  %202 = vmatprep.subr.bf16.mxu0 0
  %203 = vmatpush1.bf16.msra.mxu0 0
  %204 = vmatprep.subr.bf16.mxu0 0
  %205 = vmatpush1.bf16.msra.mxu0 0
  %206 = vmatprep.subr.bf16.mxu0 0
  %207 = vmatpush1.bf16.msra.mxu0 0
  %208 = vmatprep.subr.bf16.mxu0 0
  %209 = vmatpush1.bf16.msra.mxu0 0
  %210 = vmatprep.subr.bf16.mxu0 0
  %211 = vmatpush1.bf16.msra.mxu0 0
  %212 = vmatprep.subr.bf16.mxu0 0
  %213 = vmatpush1.bf16.msra.mxu0 0
  %214 = vmatprep.subr.bf16.mxu0 0
  %215 = vmatpush1.bf16.msra.mxu0 0
  %216 = vmatprep.subr.bf16.mxu0 0
  %217 = vmatpush1.bf16.msra.mxu0 0
  %218 = vmatprep.mubr.bf16.mxu0 0
  %219 = vmatmul.mubr.bf16.gmra.mrb[0].mxu0 %v109
  %v220 = vpop.f32.mrb[0].mxu0
  %v221 = vadd.f32 %v35, %v220
  %v222 = vpop.f32.mrb[0].mxu0
  %v223 = vadd.f32 %v35, %v222
  %v224 = vpop.f32.mrb[0].mxu0
  %v225 = vadd.f32 %v40, %v224
  %v226 = vpop.f32.mrb[0].mxu0
  %v227 = vadd.f32 %v40, %v226
  %228 = vmatprep.mubr.bf16.mxu0 0
  %229 = vmatmul.mubr.bf16.gmra.mrb[0].mxu0 %v112
  %v230 = vpop.f32.mrb[0].mxu0
  %v231 = vadd.f32 %v45, %v230
  %v232 = vpop.f32.mrb[0].mxu0
  %v233 = vadd.f32 %v45, %v232
  %v234 = vpop.f32.mrb[0].mxu0
  %v235 = vadd.f32 %v50, %v234
  %v236 = vpop.f32.mrb[0].mxu0
  %v237 = vadd.f32 %v50, %v236
  %238 = vdwg.mxu0
  %239 = vmatprep.subr.bf16.mxu0 %v94
  %240 = vmatpush1.bf16.msra.mxu0 %v93
  %241 = vmatprep.subr.bf16.mxu0 %v131
  %242 = vmatpush1.bf16.msra.mxu0 %v128
  %243 = vmatprep.subr.bf16.mxu0 0
  %244 = vmatpush1.bf16.msra.mxu0 0
  %245 = vmatprep.subr.bf16.mxu0 0
  %246 = vmatpush1.bf16.msra.mxu0 0
  %247 = vmatprep.subr.bf16.mxu0 0
  %248 = vmatpush1.bf16.msra.mxu0 0
  %249 = vmatprep.subr.bf16.mxu0 0
  %250 = vmatpush1.bf16.msra.mxu0 0
  %251 = vmatprep.subr.bf16.mxu0 0
  %252 = vmatpush1.bf16.msra.mxu0 0
  %253 = vmatprep.subr.bf16.mxu0 0
  %254 = vmatpush1.bf16.msra.mxu0 0
  %255 = vmatprep.subr.bf16.mxu0 0
  %256 = vmatpush1.bf16.msra.mxu0 0
  %257 = vmatprep.subr.bf16.mxu0 0
  %258 = vmatpush1.bf16.msra.mxu0 0
  %259 = vmatprep.subr.bf16.mxu0 0
  %260 = vmatpush1.bf16.msra.mxu0 0
  %261 = vmatprep.subr.bf16.mxu0 0
  %262 = vmatpush1.bf16.msra.mxu0 0
  %263 = vmatprep.subr.bf16.mxu0 0
  %264 = vmatpush1.bf16.msra.mxu0 0
  %265 = vmatprep.subr.bf16.mxu0 0
  %266 = vmatpush1.bf16.msra.mxu0 0
  %267 = vmatprep.subr.bf16.mxu0 0
  %268 = vmatpush1.bf16.msra.mxu0 0
  %269 = vmatprep.subr.bf16.mxu0 0
  %270 = vmatpush1.bf16.msra.mxu0 0
  %271 = vmatprep.mubr.bf16.mxu0 0
  %272 = vmatmul.mubr.bf16.gmra.mrb[0].mxu0 %v109
  %v273 = vpop.f32.mrb[0].mxu0
  %v274 = vadd.f32 %v35, %v273
  %v275 = vpop.f32.mrb[0].mxu0
  %v276 = vadd.f32 %v35, %v275
  %v277 = vpop.f32.mrb[0].mxu0
  %v278 = vadd.f32 %v40, %v277
  %v279 = vpop.f32.mrb[0].mxu0
  %v280 = vadd.f32 %v40, %v279
  %281 = vmatprep.mubr.bf16.mxu0 0
  %282 = vmatmul.mubr.bf16.gmra.mrb[0].mxu0 %v112
  %v283 = vpop.f32.mrb[0].mxu0
  %v284 = vadd.f32 %v45, %v283
  %v285 = vpop.f32.mrb[0].mxu0
  %v286 = vadd.f32 %v45, %v285
  %v287 = vpop.f32.mrb[0].mxu0
  %v288 = vadd.f32 %v50, %v287
  %v289 = vpop.f32.mrb[0].mxu0
  %v290 = vadd.f32 %v50, %v289
  %291 = vdwg.mxu0
  %v292 = vmax.f32 %v168, 0.0
  %v293 = vmax.f32 %v170, 0.0
  %v294 = vmax.f32 %v221, 0.0
  %v295 = vmax.f32 %v223, 0.0
  %v296 = vmax.f32 %v274, 0.0
  %v297 = vmax.f32 %v276, 0.0
  %v298 = vmax.f32 %v172, 0.0
  %v299 = vmax.f32 %v174, 0.0
  %v300 = vmax.f32 %v225, 0.0
  %v301 = vmax.f32 %v227, 0.0
  %v302 = vmax.f32 %v278, 0.0
  %v303 = vmax.f32 %v280, 0.0
  %v304 = vmax.f32 %v178, 0.0
  %v305 = vmax.f32 %v180, 0.0
  %v306 = vmax.f32 %v231, 0.0
  %v307 = vmax.f32 %v233, 0.0
  %v308 = vmax.f32 %v284, 0.0
  %v309 = vmax.f32 %v286, 0.0
  %v310 = vmax.f32 %v182, 0.0
  %v311 = vmax.f32 %v184, 0.0
  %v312 = vmax.f32 %v235, 0.0
  %v313 = vmax.f32 %v237, 0.0
  %v314 = vmax.f32 %v288, 0.0
  %v315 = vmax.f32 %v290, 0.0
  %316 = vst [vmem:[%s3] sm:$0xff] %v292
  %317 = vst [vmem:[%s3 + $0x8] sm:$0xff] %v293
  %318 = vst [vmem:[%s3 + $0x10] sm:$0xff] %v294
  %319 = vst [vmem:[%s3 + $0x18] sm:$0xff] %v295
  %320 = vst [vmem:[%s3 + $0x20] sm:$0xff] %v296
  %321 = vst [vmem:[%s3 + $0x28] sm:$0xff] %v297
  %322 = vst [vmem:[%s3 + $0x30] sm:$0xff] %v298
  %323 = vst [vmem:[%s3 + $0x38] sm:$0xff] %v299
  %324 = vst [vmem:[%s3 + $0x40] sm:$0xff] %v300
  %325 = vst [vmem:[%s3 + $0x48] sm:$0xff] %v301
  %326 = vst [vmem:[%s3 + $0x50] sm:$0xff] %v302
  %327 = vst [vmem:[%s3 + $0x58] sm:$0xff] %v303
  %328 = vst [vmem:[%s3 + $0x60] sm:$0xff] %v304
  %329 = vst [vmem:[%s3 + $0x68] sm:$0xff] %v305
  %330 = vst [vmem:[%s3 + $0x70] sm:$0xff] %v306
  %331 = vst [vmem:[%s3 + $0x78] sm:$0xff] %v307
  %332 = vst [vmem:[%s3 + $0x80] sm:$0xff] %v308
  %333 = vst [vmem:[%s3 + $0x88] sm:$0xff] %v309
  %334 = vst [vmem:[%s3 + $0x90] sm:$0xff] %v310
  %335 = vst [vmem:[%s3 + $0x98] sm:$0xff] %v311
  %336 = vst [vmem:[%s3 + $0xa0] sm:$0xff] %v312
  %337 = vst [vmem:[%s3 + $0xa8] sm:$0xff] %v313
  %338 = vst [vmem:[%s3 + $0xb0] sm:$0xff] %v314
  %339 = vst [vmem:[%s3 + $0xb8] sm:$0xff] %v315
  // Predicated region
  $region14: #{_mlcnn_forward.15} parent=0 // pred_check
    _
  $region15: #{_mlcnn_forward.15} parent=0 // pred_check_branch
    %341 = sbr.rel (0) target = $region17
  $region16: #{_mlcnn_forward.15} parent=0 // pred_region
    _
  $region17: #{_mlcnn_forward.15} parent=0 // pred_fallthru
    _
  // Predicated region
  $region18: #{_mlcnn_forward.15} parent=0 // pred_check
    _
  $region19: #{_mlcnn_forward.15} parent=0 // pred_check_branch
    %343 = sbr.rel (0) target = $region21
  $region20: #{_mlcnn_forward.15} parent=0 // pred_region
    _
  $region21: #{_mlcnn_forward.15} parent=0 // pred_fallthru
    _

// kernel: _mlcnn_forward.16
$region0: #{_mlcnn_forward.16}
  #allocation0 [shape = 'u32[]', space=smem, size = 0x4, offset = 0x4, fixed_abs, tag = 'smem constant byte address 0x4 - core index']
  #allocation1 [shape = 'u32[144,128]{1,0:T(1,128)}', space=vmem, size = 0x12000, scoped, tag = 'internal scratch']
  %s0 = inlined_call_operand.vmem [shape: bf16[64,192], index: 0, kind: input, shape index: {}]
  %s1 = inlined_call_operand.vmem [shape: f32[64,1], index: 1, kind: input, shape index: {}]
  %s2 = inlined_call_operand.vmem [shape: bf16[192,256], index: 2, kind: input, shape index: {}]
  %s3 = inlined_call_operand.vmem [shape: f32[64,256], index: 3, kind: output, shape index: {}]
  %s4 = sld [smem:[#allocation0]]
  $region22: #{_mlcnn_forward.16} parent=0
    _
  %s6 = ssub.s32 1, %s4
  %s7 = scalar_select 0, %s6, %s4
  // Predicated region
  $region2: #{_mlcnn_forward.16} parent=0 // pred_check
    _
  $region3: #{_mlcnn_forward.16} parent=0 // pred_check_branch
    %9 = sbr.rel (0) target = $region5
  $region4: #{_mlcnn_forward.16} parent=0 // pred_region
    _
  $region5: #{_mlcnn_forward.16} parent=0 // pred_fallthru
    _
  // Predicated region
  $region6: #{_mlcnn_forward.16} parent=0 // pred_check
    _
  $region7: #{_mlcnn_forward.16} parent=0 // pred_check_branch
    %11 = sbr.rel (0) target = $region9
  $region8: #{_mlcnn_forward.16} parent=0 // pred_region
    _
  $region9: #{_mlcnn_forward.16} parent=0 // pred_fallthru
    _
  // Predicated region
  $region10: #{_mlcnn_forward.16} parent=0 // pred_check
    _
  $region11: #{_mlcnn_forward.16} parent=0 // pred_check_branch
    %13 = sbr.rel (0) target = $region13
  $region12: #{_mlcnn_forward.16} parent=0 // pred_region
    _
  $region13: #{_mlcnn_forward.16} parent=0 // pred_fallthru
    _
  %v15 = vld [vmem:[%s0] sm:$0xff]
  %v16 = vld [vmem:[%s0 + $0x8] sm:$0xff]
  %v17 = vld [vmem:[%s0 + $0x10] sm:$0xff]
  %v18 = vld [vmem:[%s0 + $0x18] sm:$0xff]
  %v19 = vld [vmem:[%s0 + $0x20] sm:$0xff]
  %v20 = vld [vmem:[%s0 + $0x28] sm:$0xff]
  %v21 = vld [vmem:[%s0 + $0x30] sm:$0xff]
  %v22 = vld [vmem:[%s0 + $0x38] sm:$0xff]
  %v23 = vld [vmem:[%s2] sm:$0xff]
  %v24 = vld [vmem:[%s2 + $0x8] sm:$0xff]
  %v25 = vld [vmem:[%s2 + $0x10] sm:$0xff]
  %v26 = vld [vmem:[%s2 + $0x18] sm:$0xff]
  %v27 = vld [vmem:[%s2 + $0x20] sm:$0xff]
  %v28 = vld [vmem:[%s2 + $0x28] sm:$0xff]
  %v29 = vld [vmem:[%s2 + $0x30] sm:$0xff]
  %v30 = vld [vmem:[%s2 + $0x38] sm:$0xff]
  %v31 = vld [vmem:[%s2 + $0x40] sm:$0xff]
  %v32 = vld [vmem:[%s2 + $0x48] sm:$0xff]
  %v33 = vld [vmem:[%s2 + $0x50] sm:$0xff]
  %v34 = vld [vmem:[%s2 + $0x58] sm:$0xff]
  %v35 = vld [vmem:[%s2 + $0x60] sm:$0xff]
  %v36 = vld [vmem:[%s2 + $0x68] sm:$0xff]
  %v37 = vld [vmem:[%s2 + $0x70] sm:$0xff]
  %v38 = vld [vmem:[%s2 + $0x78] sm:$0xff]
  %v39 = vld [vmem:[%s2 + $0x80] sm:$0xff]
  %v40 = vld [vmem:[%s2 + $0x88] sm:$0xff]
  %v41 = vld [vmem:[%s2 + $0x90] sm:$0xff]
  %v42 = vld [vmem:[%s2 + $0x98] sm:$0xff]
  %v43 = vld [vmem:[%s2 + $0xa0] sm:$0xff]
  %v44 = vld [vmem:[%s2 + $0xa8] sm:$0xff]
  %v45 = vld [vmem:[%s2 + $0xb0] sm:$0xff]
  %v46 = vld [vmem:[%s2 + $0xb8] sm:$0xff]
  %v47 = vld [vmem:[%s1] sm:$0xff]
  %v48 = vld [vmem:[%s1 + $0x8] sm:$0xff]
  %v49 = vld [vmem:[%s1 + $0x10] sm:$0xff]
  %v50 = vld [vmem:[%s1 + $0x18] sm:$0xff]
  %v51 = vld [vmem:[%s1 + $0x20] sm:$0xff]
  %v52 = vld [vmem:[%s1 + $0x28] sm:$0xff]
  %v53 = vld [vmem:[%s1 + $0x30] sm:$0xff]
  %v54 = vld [vmem:[%s1 + $0x38] sm:$0xff]
  %56 = vset.pattern.permute.xlu0 0
  %57 = vperm.xlu0 %56, %v47
  %v58 = vpop.permute.xlu0 %57
  %61 = vset.pattern.permute.xlu0 0
  %62 = vperm.xlu0 %61, %v48
  %v63 = vpop.permute.xlu0 %62
  %66 = vset.pattern.permute.xlu0 0
  %67 = vperm.xlu0 %66, %v49
  %v68 = vpop.permute.xlu0 %67
  %71 = vset.pattern.permute.xlu0 0
  %72 = vperm.xlu0 %71, %v50
  %v73 = vpop.permute.xlu0 %72
  %76 = vset.pattern.permute.xlu0 0
  %77 = vperm.xlu0 %76, %v51
  %v78 = vpop.permute.xlu0 %77
  %81 = vset.pattern.permute.xlu0 0
  %82 = vperm.xlu0 %81, %v52
  %v83 = vpop.permute.xlu0 %82
  %86 = vset.pattern.permute.xlu0 0
  %87 = vperm.xlu0 %86, %v53
  %v88 = vpop.permute.xlu0 %87
  %91 = vset.pattern.permute.xlu0 0
  %92 = vperm.xlu0 %91, %v54
  %v93 = vpop.permute.xlu0 %92
  %v103 = vunpack.c.l.b16 %v15
  %v104 = vunpack.c.h.b16 %v15
  %v105 = vunpack.c.l.b16 %v16
  %v106 = vunpack.c.h.b16 %v16
  %v107 = vunpack.c.l.b16 %v17
  %v108 = vunpack.c.h.b16 %v17
  %v109 = vunpack.c.l.b16 %v18
  %v110 = vunpack.c.h.b16 %v18
  %v111 = vunpack.c.l.b16 %v19
  %v112 = vunpack.c.h.b16 %v19
  %v113 = vunpack.c.l.b16 %v20
  %v114 = vunpack.c.h.b16 %v20
  %v115 = vunpack.c.l.b16 %v21
  %v116 = vunpack.c.h.b16 %v21
  %v117 = vunpack.c.l.b16 %v22
  %v118 = vunpack.c.h.b16 %v22
  %v119 = vpack.c.b16 %v105, %v103
  %v120 = vpack.c.b16 %v106, %v104
  %v121 = vpack.c.b16 %v109, %v107
  %v122 = vpack.c.b16 %v110, %v108
  %v123 = vpack.c.b16 %v113, %v111
  %v124 = vpack.c.b16 %v114, %v112
  %v125 = vpack.c.b16 %v117, %v115
  %v126 = vpack.c.b16 %v118, %v116
  %v155 = vunpack.c.l.b16 %v23
  %v156 = vunpack.c.h.b16 %v23
  %v157 = vunpack.c.l.b16 %v24
  %v158 = vunpack.c.h.b16 %v24
  %v159 = vunpack.c.l.b16 %v25
  %v160 = vunpack.c.h.b16 %v25
  %v161 = vunpack.c.l.b16 %v26
  %v162 = vunpack.c.h.b16 %v26
  %v163 = vunpack.c.l.b16 %v27
  %v164 = vunpack.c.h.b16 %v27
  %v165 = vunpack.c.l.b16 %v28
  %v166 = vunpack.c.h.b16 %v28
  %v167 = vunpack.c.l.b16 %v29
  %v168 = vunpack.c.h.b16 %v29
  %v169 = vunpack.c.l.b16 %v30
  %v170 = vunpack.c.h.b16 %v30
  %v171 = vunpack.c.l.b16 %v31
  %v172 = vunpack.c.h.b16 %v31
  %v173 = vunpack.c.l.b16 %v32
  %v174 = vunpack.c.h.b16 %v32
  %v175 = vunpack.c.l.b16 %v33
  %v176 = vunpack.c.h.b16 %v33
  %v177 = vunpack.c.l.b16 %v34
  %v178 = vunpack.c.h.b16 %v34
  %v179 = vunpack.c.l.b16 %v35
  %v180 = vunpack.c.h.b16 %v35
  %v181 = vunpack.c.l.b16 %v36
  %v182 = vunpack.c.h.b16 %v36
  %v183 = vunpack.c.l.b16 %v37
  %v184 = vunpack.c.h.b16 %v37
  %v185 = vunpack.c.l.b16 %v38
  %v186 = vunpack.c.h.b16 %v38
  %v187 = vunpack.c.l.b16 %v39
  %v188 = vunpack.c.h.b16 %v39
  %v189 = vunpack.c.l.b16 %v40
  %v190 = vunpack.c.h.b16 %v40
  %v191 = vunpack.c.l.b16 %v41
  %v192 = vunpack.c.h.b16 %v41
  %v193 = vunpack.c.l.b16 %v42
  %v194 = vunpack.c.h.b16 %v42
  %v195 = vunpack.c.l.b16 %v43
  %v196 = vunpack.c.h.b16 %v43
  %v197 = vunpack.c.l.b16 %v44
  %v198 = vunpack.c.h.b16 %v44
  %v199 = vunpack.c.l.b16 %v45
  %v200 = vunpack.c.h.b16 %v45
  %v201 = vunpack.c.l.b16 %v46
  %v202 = vunpack.c.h.b16 %v46
  %v203 = vpack.c.b16 %v157, %v155
  %v204 = vpack.c.b16 %v158, %v156
  %v205 = vpack.c.b16 %v161, %v159
  %v206 = vpack.c.b16 %v162, %v160
  %v207 = vpack.c.b16 %v165, %v163
  %v208 = vpack.c.b16 %v166, %v164
  %v209 = vpack.c.b16 %v169, %v167
  %v210 = vpack.c.b16 %v170, %v168
  %v211 = vpack.c.b16 %v173, %v171
  %v212 = vpack.c.b16 %v174, %v172
  %v213 = vpack.c.b16 %v177, %v175
  %v214 = vpack.c.b16 %v178, %v176
  %v215 = vpack.c.b16 %v181, %v179
  %v216 = vpack.c.b16 %v182, %v180
  %v217 = vpack.c.b16 %v185, %v183
  %v218 = vpack.c.b16 %v186, %v184
  %v219 = vpack.c.b16 %v189, %v187
  %v220 = vpack.c.b16 %v190, %v188
  %v221 = vpack.c.b16 %v193, %v191
  %v222 = vpack.c.b16 %v194, %v192
  %v223 = vpack.c.b16 %v197, %v195
  %v224 = vpack.c.b16 %v198, %v196
  %v225 = vpack.c.b16 %v201, %v199
  %v226 = vpack.c.b16 %v202, %v200
  %vm251 = vcmask 523264
  %v253 = vsel %vm251, %v120, 0
  %v256 = vsel %vm251, %v122, 0
  %v259 = vsel %vm251, %v124, 0
  %v262 = vsel %vm251, %v126, 0
  %264 = vmatprep.subr.bf16.mxu0 %v204
  %265 = vmatpush1.bf16.msra.mxu0 %v203
  %266 = vmatprep.subr.bf16.mxu0 %v206
  %267 = vmatpush1.bf16.msra.mxu0 %v205
  %268 = vmatprep.subr.bf16.mxu0 %v208
  %269 = vmatpush1.bf16.msra.mxu0 %v207
  %270 = vmatprep.subr.bf16.mxu0 %v210
  %271 = vmatpush1.bf16.msra.mxu0 %v209
  %272 = vmatprep.subr.bf16.mxu0 %v212
  %273 = vmatpush1.bf16.msra.mxu0 %v211
  %274 = vmatprep.subr.bf16.mxu0 %v214
  %275 = vmatpush1.bf16.msra.mxu0 %v213
  %276 = vmatprep.subr.bf16.mxu0 %v216
  %277 = vmatpush1.bf16.msra.mxu0 %v215
  %278 = vmatprep.subr.bf16.mxu0 %v218
  %279 = vmatpush1.bf16.msra.mxu0 %v217
  %280 = vmatprep.subr.bf16.mxu0 %v220
  %281 = vmatpush1.bf16.msra.mxu0 %v219
  %282 = vmatprep.subr.bf16.mxu0 %v222
  %283 = vmatpush1.bf16.msra.mxu0 %v221
  %284 = vmatprep.subr.bf16.mxu0 %v224
  %285 = vmatpush1.bf16.msra.mxu0 %v223
  %286 = vmatprep.subr.bf16.mxu0 %v226
  %287 = vmatpush1.bf16.msra.mxu0 %v225
  %288 = vmatprep.subr.bf16.mxu0 0
  %289 = vmatpush1.bf16.msra.mxu0 0
  %290 = vmatprep.subr.bf16.mxu0 0
  %291 = vmatpush1.bf16.msra.mxu0 0
  %292 = vmatprep.subr.bf16.mxu0 0
  %293 = vmatpush1.bf16.msra.mxu0 0
  %294 = vmatprep.subr.bf16.mxu0 0
  %295 = vmatpush1.bf16.msra.mxu0 0
  %296 = vmatprep.mubr.bf16.mxu0 %v253
  %297 = vmatmul.mubr.bf16.gmra.mrb[0].mxu0 %v119
  %v298 = vpop.f32.mrb[0].mxu0
  %v299 = vadd.f32 %v58, %v298
  %v300 = vpop.f32.mrb[0].mxu0
  %v301 = vadd.f32 %v58, %v300
  %v302 = vpop.f32.mrb[0].mxu0
  %v303 = vadd.f32 %v63, %v302
  %v304 = vpop.f32.mrb[0].mxu0
  %v305 = vadd.f32 %v63, %v304
  %306 = vmatprep.mubr.bf16.mxu0 %v256
  %307 = vmatmul.mubr.bf16.gmra.mrb[0].mxu0 %v121
  %v308 = vpop.f32.mrb[0].mxu0
  %v309 = vadd.f32 %v68, %v308
  %v310 = vpop.f32.mrb[0].mxu0
  %v311 = vadd.f32 %v68, %v310
  %v312 = vpop.f32.mrb[0].mxu0
  %v313 = vadd.f32 %v73, %v312
  %v314 = vpop.f32.mrb[0].mxu0
  %v315 = vadd.f32 %v73, %v314
  %316 = vmatprep.mubr.bf16.mxu0 %v259
  %317 = vmatmul.mubr.bf16.gmra.mrb[0].mxu0 %v123
  %v318 = vpop.f32.mrb[0].mxu0
  %v319 = vadd.f32 %v78, %v318
  %v320 = vpop.f32.mrb[0].mxu0
  %v321 = vadd.f32 %v78, %v320
  %v322 = vpop.f32.mrb[0].mxu0
  %v323 = vadd.f32 %v83, %v322
  %v324 = vpop.f32.mrb[0].mxu0
  %v325 = vadd.f32 %v83, %v324
  %326 = vmatprep.mubr.bf16.mxu0 %v262
  %327 = vmatmul.mubr.bf16.gmra.mrb[0].mxu0 %v125
  %v328 = vpop.f32.mrb[0].mxu0
  %v329 = vadd.f32 %v88, %v328
  %v330 = vpop.f32.mrb[0].mxu0
  %v331 = vadd.f32 %v88, %v330
  %v332 = vpop.f32.mrb[0].mxu0
  %v333 = vadd.f32 %v93, %v332
  %v334 = vpop.f32.mrb[0].mxu0
  %v335 = vadd.f32 %v93, %v334
  %336 = vdwg.mxu0
  %v337 = vmax.f32 %v299, 0.0
  %v338 = vmax.f32 %v301, 0.0
  %v339 = vmax.f32 %v303, 0.0
  %v340 = vmax.f32 %v305, 0.0
  %v341 = vmax.f32 %v309, 0.0
  %v342 = vmax.f32 %v311, 0.0
  %v343 = vmax.f32 %v313, 0.0
  %v344 = vmax.f32 %v315, 0.0
  %v345 = vmax.f32 %v319, 0.0
  %v346 = vmax.f32 %v321, 0.0
  %v347 = vmax.f32 %v323, 0.0
  %v348 = vmax.f32 %v325, 0.0
  %v349 = vmax.f32 %v329, 0.0
  %v350 = vmax.f32 %v331, 0.0
  %v351 = vmax.f32 %v333, 0.0
  %v352 = vmax.f32 %v335, 0.0
  %353 = vst [vmem:[%s3] sm:$0xff] %v337
  %354 = vst [vmem:[%s3 + $0x8] sm:$0xff] %v338
  %355 = vst [vmem:[%s3 + $0x10] sm:$0xff] %v339
  %356 = vst [vmem:[%s3 + $0x18] sm:$0xff] %v340
  %357 = vst [vmem:[%s3 + $0x20] sm:$0xff] %v341
  %358 = vst [vmem:[%s3 + $0x28] sm:$0xff] %v342
  %359 = vst [vmem:[%s3 + $0x30] sm:$0xff] %v343
  %360 = vst [vmem:[%s3 + $0x38] sm:$0xff] %v344
  %361 = vst [vmem:[%s3 + $0x40] sm:$0xff] %v345
  %362 = vst [vmem:[%s3 + $0x48] sm:$0xff] %v346
  %363 = vst [vmem:[%s3 + $0x50] sm:$0xff] %v347
  %364 = vst [vmem:[%s3 + $0x58] sm:$0xff] %v348
  %365 = vst [vmem:[%s3 + $0x60] sm:$0xff] %v349
  %366 = vst [vmem:[%s3 + $0x68] sm:$0xff] %v350
  %367 = vst [vmem:[%s3 + $0x70] sm:$0xff] %v351
  %368 = vst [vmem:[%s3 + $0x78] sm:$0xff] %v352
  // Predicated region
  $region14: #{_mlcnn_forward.16} parent=0 // pred_check
    _
  $region15: #{_mlcnn_forward.16} parent=0 // pred_check_branch
    %370 = sbr.rel (0) target = $region17
  $region16: #{_mlcnn_forward.16} parent=0 // pred_region
    _
  $region17: #{_mlcnn_forward.16} parent=0 // pred_fallthru
    _
  // Predicated region
  $region18: #{_mlcnn_forward.16} parent=0 // pred_check
    _
  $region19: #{_mlcnn_forward.16} parent=0 // pred_check_branch
    %372 = sbr.rel (0) target = $region21
  $region20: #{_mlcnn_forward.16} parent=0 // pred_region
    _
  $region21: #{_mlcnn_forward.16} parent=0 // pred_fallthru
    _

// kernel: _mlcnn_forward.13
$region0: #{_mlcnn_forward.13}
  #allocation0 [shape = 'u32[]', space=smem, size = 0x4, offset = 0x4, fixed_abs, tag = 'smem constant byte address 0x4 - core index']
  #allocation1 [shape = 'u32[144,128]{1,0:T(1,128)}', space=vmem, size = 0x12000, scoped, tag = 'internal scratch']
  %s0 = inlined_call_operand.vmem [shape: bf16[32,36], index: 0, kind: input, shape index: {}]
  %s1 = inlined_call_operand.vmem [shape: f32[32,1], index: 1, kind: input, shape index: {}]
  %s2 = inlined_call_operand.vmem [shape: bf16[36,768], index: 2, kind: input, shape index: {}]
  %s3 = inlined_call_operand.vmem [shape: f32[32,768], index: 3, kind: output, shape index: {}]
  %s4 = sld [smem:[#allocation0]]
  $region22: #{_mlcnn_forward.13} parent=0
    _
  %s6 = ssub.s32 1, %s4
  %s7 = scalar_select 0, %s6, %s4
  // Predicated region
  $region2: #{_mlcnn_forward.13} parent=0 // pred_check
    _
  $region3: #{_mlcnn_forward.13} parent=0 // pred_check_branch
    %9 = sbr.rel (0) target = $region5
  $region4: #{_mlcnn_forward.13} parent=0 // pred_region
    _
  $region5: #{_mlcnn_forward.13} parent=0 // pred_fallthru
    _
  // Predicated region
  $region6: #{_mlcnn_forward.13} parent=0 // pred_check
    _
  $region7: #{_mlcnn_forward.13} parent=0 // pred_check_branch
    %11 = sbr.rel (0) target = $region9
  $region8: #{_mlcnn_forward.13} parent=0 // pred_region
    _
  $region9: #{_mlcnn_forward.13} parent=0 // pred_fallthru
    _
  // Predicated region
  $region10: #{_mlcnn_forward.13} parent=0 // pred_check
    _
  $region11: #{_mlcnn_forward.13} parent=0 // pred_check_branch
    %13 = sbr.rel (0) target = $region13
  $region12: #{_mlcnn_forward.13} parent=0 // pred_region
    _
  $region13: #{_mlcnn_forward.13} parent=0 // pred_fallthru
    _
  %v15 = vld [vmem:[%s0] sm:$0xf]
  %v16 = vld [vmem:[%s0 + $0x4] sm:$0xf]
  %v17 = vld [vmem:[%s0 + $0x8] sm:$0xf]
  %v18 = vld [vmem:[%s0 + $0xc] sm:$0xf]
  %v19 = vld [vmem:[%s2] sm:$0xff]
  %v20 = vld [vmem:[%s2 + $0x8] sm:$0xff]
  %v21 = vld [vmem:[%s2 + $0x10] sm:$0xff]
  %v22 = vld [vmem:[%s2 + $0x18] sm:$0xff]
  %v23 = vld [vmem:[%s2 + $0x20] sm:$0xff]
  %v24 = vld [vmem:[%s2 + $0x28] sm:$0xff]
  %v25 = vld [vmem:[%s2 + $0x30] sm:$0xff]
  %v26 = vld [vmem:[%s2 + $0x38] sm:$0xff]
  %v27 = vld [vmem:[%s2 + $0x40] sm:$0xff]
  %v28 = vld [vmem:[%s2 + $0x48] sm:$0xff]
  %v29 = vld [vmem:[%s2 + $0x50] sm:$0xff]
  %v30 = vld [vmem:[%s2 + $0x58] sm:$0xff]
  %v31 = vld [vmem:[%s2 + $0x60] sm:$0x33]
  %v32 = vld [vmem:[%s2 + $0x68] sm:$0x33]
  %v33 = vld [vmem:[%s2 + $0x70] sm:$0x33]
  %v34 = vld [vmem:[%s1] sm:$0xff]
  %v35 = vld [vmem:[%s1 + $0x8] sm:$0xff]
  %v36 = vld [vmem:[%s1 + $0x10] sm:$0xff]
  %v37 = vld [vmem:[%s1 + $0x18] sm:$0xff]
  %39 = vset.pattern.permute.xlu0 0
  %40 = vperm.xlu0 %39, %v34
  %v41 = vpop.permute.xlu0 %40
  %44 = vset.pattern.permute.xlu0 0
  %45 = vperm.xlu0 %44, %v35
  %v46 = vpop.permute.xlu0 %45
  %49 = vset.pattern.permute.xlu0 0
  %50 = vperm.xlu0 %49, %v36
  %v51 = vpop.permute.xlu0 %50
  %54 = vset.pattern.permute.xlu0 0
  %55 = vperm.xlu0 %54, %v37
  %v56 = vpop.permute.xlu0 %55
  %v62 = vunpack.c.l.b16 %v15
  %v63 = vunpack.c.l.b16 %v16
  %v64 = vunpack.c.l.b16 %v17
  %v65 = vunpack.c.l.b16 %v18
  %v66 = vpack.c.b16 %v63, %v62
  %v67 = vpack.c.b16 %v65, %v64
  %v83 = vunpack.c.l.b16 %v19
  %v84 = vunpack.c.h.b16 %v19
  %v85 = vunpack.c.l.b16 %v20
  %v86 = vunpack.c.h.b16 %v20
  %v87 = vunpack.c.l.b16 %v21
  %v88 = vunpack.c.h.b16 %v21
  %v89 = vunpack.c.l.b16 %v22
  %v90 = vunpack.c.h.b16 %v22
  %v91 = vunpack.c.l.b16 %v23
  %v92 = vunpack.c.h.b16 %v23
  %v93 = vunpack.c.l.b16 %v24
  %v94 = vunpack.c.h.b16 %v24
  %v95 = vunpack.c.l.b16 %v25
  %v96 = vunpack.c.h.b16 %v25
  %v97 = vunpack.c.l.b16 %v26
  %v98 = vunpack.c.h.b16 %v26
  %v99 = vunpack.c.l.b16 %v27
  %v100 = vunpack.c.h.b16 %v27
  %v101 = vunpack.c.l.b16 %v28
  %v102 = vunpack.c.h.b16 %v28
  %v103 = vunpack.c.l.b16 %v29
  %v104 = vunpack.c.h.b16 %v29
  %v105 = vunpack.c.l.b16 %v30
  %v106 = vunpack.c.h.b16 %v30
  %v107 = vunpack.c.l.b16 %v31
  %v108 = vunpack.c.h.b16 %v31
  %v109 = vunpack.c.l.b16 %v32
  %v110 = vunpack.c.h.b16 %v32
  %v111 = vunpack.c.l.b16 %v33
  %v112 = vunpack.c.h.b16 %v33
  %v113 = vpack.c.b16 %v89, %v83
  %v114 = vpack.c.b16 %v90, %v84
  %v115 = vpack.c.b16 %v91, %v85
  %v116 = vpack.c.b16 %v92, %v86
  %v117 = vpack.c.b16 %v93, %v87
  %v118 = vpack.c.b16 %v94, %v88
  %v119 = vpack.c.b16 %v101, %v95
  %v120 = vpack.c.b16 %v102, %v96
  %v121 = vpack.c.b16 %v103, %v97
  %v122 = vpack.c.b16 %v104, %v98
  %v123 = vpack.c.b16 %v105, %v99
  %v124 = vpack.c.b16 %v106, %v100
  %v125 = vpack.c.b16 %v107, %v107
  %v126 = vpack.c.b16 %v108, %v108
  %v127 = vpack.c.b16 %v109, %v109
  %v128 = vpack.c.b16 %v110, %v110
  %v129 = vpack.c.b16 %v111, %v111
  %v130 = vpack.c.b16 %v112, %v112
  %vm143 = vcmask 293888
  %v145 = vsel %vm143, %v66, 0
  %v148 = vsel %vm143, %v67, 0
  %vm150 = vcmask 1041408
  %v152 = vsel %vm150, %v125, 0
  %v155 = vsel %vm150, %v126, 0
  %v158 = vsel %vm150, %v127, 0
  %v161 = vsel %vm150, %v128, 0
  %v164 = vsel %vm150, %v129, 0
  %v167 = vsel %vm150, %v130, 0
  %169 = vmatprep.subr.bf16.mxu0 %v114
  %170 = vmatpush1.bf16.msra.mxu0 %v113
  %171 = vmatprep.subr.bf16.mxu0 %v120
  %172 = vmatpush1.bf16.msra.mxu0 %v119
  %173 = vmatprep.subr.bf16.mxu0 %v155
  %174 = vmatpush1.bf16.msra.mxu0 %v152
  %175 = vmatprep.subr.bf16.mxu0 0
  %176 = vmatpush1.bf16.msra.mxu0 0
  %177 = vmatprep.subr.bf16.mxu0 0
  %178 = vmatpush1.bf16.msra.mxu0 0
  %179 = vmatprep.subr.bf16.mxu0 0
  %180 = vmatpush1.bf16.msra.mxu0 0
  %181 = vmatprep.subr.bf16.mxu0 0
  %182 = vmatpush1.bf16.msra.mxu0 0
  %183 = vmatprep.subr.bf16.mxu0 0
  %184 = vmatpush1.bf16.msra.mxu0 0
  %185 = vmatprep.subr.bf16.mxu0 0
  %186 = vmatpush1.bf16.msra.mxu0 0
  %187 = vmatprep.subr.bf16.mxu0 0
  %188 = vmatpush1.bf16.msra.mxu0 0
  %189 = vmatprep.subr.bf16.mxu0 0
  %190 = vmatpush1.bf16.msra.mxu0 0
  %191 = vmatprep.subr.bf16.mxu0 0
  %192 = vmatpush1.bf16.msra.mxu0 0
  %193 = vmatprep.subr.bf16.mxu0 0
  %194 = vmatpush1.bf16.msra.mxu0 0
  %195 = vmatprep.subr.bf16.mxu0 0
  %196 = vmatpush1.bf16.msra.mxu0 0
  %197 = vmatprep.subr.bf16.mxu0 0
  %198 = vmatpush1.bf16.msra.mxu0 0
  %199 = vmatprep.subr.bf16.mxu0 0
  %200 = vmatpush1.bf16.msra.mxu0 0
  %201 = vmatprep.mubr.bf16.mxu0 0
  %202 = vmatmul.mubr.bf16.gmra.mrb[0].mxu0 %v145
  %v203 = vpop.f32.mrb[0].mxu0
  %v204 = vadd.f32 %v41, %v203
  %v205 = vpop.f32.mrb[0].mxu0
  %v206 = vadd.f32 %v41, %v205
  %v207 = vpop.f32.mrb[0].mxu0
  %v208 = vadd.f32 %v46, %v207
  %v209 = vpop.f32.mrb[0].mxu0
  %v210 = vadd.f32 %v46, %v209
  %211 = vmatprep.mubr.bf16.mxu0 0
  %212 = vmatmul.mubr.bf16.gmra.mrb[0].mxu0 %v148
  %v213 = vpop.f32.mrb[0].mxu0
  %v214 = vadd.f32 %v51, %v213
  %v215 = vpop.f32.mrb[0].mxu0
  %v216 = vadd.f32 %v51, %v215
  %v217 = vpop.f32.mrb[0].mxu0
  %v218 = vadd.f32 %v56, %v217
  %v219 = vpop.f32.mrb[0].mxu0
  %v220 = vadd.f32 %v56, %v219
  %221 = vdwg.mxu0
  %222 = vmatprep.subr.bf16.mxu0 %v116
  %223 = vmatpush1.bf16.msra.mxu0 %v115
  %224 = vmatprep.subr.bf16.mxu0 %v122
  %225 = vmatpush1.bf16.msra.mxu0 %v121
  %226 = vmatprep.subr.bf16.mxu0 %v161
  %227 = vmatpush1.bf16.msra.mxu0 %v158
  %228 = vmatprep.subr.bf16.mxu0 0
  %229 = vmatpush1.bf16.msra.mxu0 0
  %230 = vmatprep.subr.bf16.mxu0 0
  %231 = vmatpush1.bf16.msra.mxu0 0
  %232 = vmatprep.subr.bf16.mxu0 0
  %233 = vmatpush1.bf16.msra.mxu0 0
  %234 = vmatprep.subr.bf16.mxu0 0
  %235 = vmatpush1.bf16.msra.mxu0 0
  %236 = vmatprep.subr.bf16.mxu0 0
  %237 = vmatpush1.bf16.msra.mxu0 0
  %238 = vmatprep.subr.bf16.mxu0 0
  %239 = vmatpush1.bf16.msra.mxu0 0
  %240 = vmatprep.subr.bf16.mxu0 0
  %241 = vmatpush1.bf16.msra.mxu0 0
  %242 = vmatprep.subr.bf16.mxu0 0
  %243 = vmatpush1.bf16.msra.mxu0 0
  %244 = vmatprep.subr.bf16.mxu0 0
  %245 = vmatpush1.bf16.msra.mxu0 0
  %246 = vmatprep.subr.bf16.mxu0 0
  %247 = vmatpush1.bf16.msra.mxu0 0
  %248 = vmatprep.subr.bf16.mxu0 0
  %249 = vmatpush1.bf16.msra.mxu0 0
  %250 = vmatprep.subr.bf16.mxu0 0
  %251 = vmatpush1.bf16.msra.mxu0 0
  %252 = vmatprep.subr.bf16.mxu0 0
  %253 = vmatpush1.bf16.msra.mxu0 0
  %254 = vmatprep.mubr.bf16.mxu0 0
  %255 = vmatmul.mubr.bf16.gmra.mrb[0].mxu0 %v145
  %v256 = vpop.f32.mrb[0].mxu0
  %v257 = vadd.f32 %v41, %v256
  %v258 = vpop.f32.mrb[0].mxu0
  %v259 = vadd.f32 %v41, %v258
  %v260 = vpop.f32.mrb[0].mxu0
  %v261 = vadd.f32 %v46, %v260
  %v262 = vpop.f32.mrb[0].mxu0
  %v263 = vadd.f32 %v46, %v262
  %264 = vmatprep.mubr.bf16.mxu0 0
  %265 = vmatmul.mubr.bf16.gmra.mrb[0].mxu0 %v148
  %v266 = vpop.f32.mrb[0].mxu0
  %v267 = vadd.f32 %v51, %v266
  %v268 = vpop.f32.mrb[0].mxu0
  %v269 = vadd.f32 %v51, %v268
  %v270 = vpop.f32.mrb[0].mxu0
  %v271 = vadd.f32 %v56, %v270
  %v272 = vpop.f32.mrb[0].mxu0
  %v273 = vadd.f32 %v56, %v272
  %274 = vdwg.mxu0
  %275 = vmatprep.subr.bf16.mxu0 %v118
  %276 = vmatpush1.bf16.msra.mxu0 %v117
  %277 = vmatprep.subr.bf16.mxu0 %v124
  %278 = vmatpush1.bf16.msra.mxu0 %v123
  %279 = vmatprep.subr.bf16.mxu0 %v167
  %280 = vmatpush1.bf16.msra.mxu0 %v164
  %281 = vmatprep.subr.bf16.mxu0 0
  %282 = vmatpush1.bf16.msra.mxu0 0
  %283 = vmatprep.subr.bf16.mxu0 0
  %284 = vmatpush1.bf16.msra.mxu0 0
  %285 = vmatprep.subr.bf16.mxu0 0
  %286 = vmatpush1.bf16.msra.mxu0 0
  %287 = vmatprep.subr.bf16.mxu0 0
  %288 = vmatpush1.bf16.msra.mxu0 0
  %289 = vmatprep.subr.bf16.mxu0 0
  %290 = vmatpush1.bf16.msra.mxu0 0
  %291 = vmatprep.subr.bf16.mxu0 0
  %292 = vmatpush1.bf16.msra.mxu0 0
  %293 = vmatprep.subr.bf16.mxu0 0
  %294 = vmatpush1.bf16.msra.mxu0 0
  %295 = vmatprep.subr.bf16.mxu0 0
  %296 = vmatpush1.bf16.msra.mxu0 0
  %297 = vmatprep.subr.bf16.mxu0 0
  %298 = vmatpush1.bf16.msra.mxu0 0
  %299 = vmatprep.subr.bf16.mxu0 0
  %300 = vmatpush1.bf16.msra.mxu0 0
  %301 = vmatprep.subr.bf16.mxu0 0
  %302 = vmatpush1.bf16.msra.mxu0 0
  %303 = vmatprep.subr.bf16.mxu0 0
  %304 = vmatpush1.bf16.msra.mxu0 0
  %305 = vmatprep.subr.bf16.mxu0 0
  %306 = vmatpush1.bf16.msra.mxu0 0
  %307 = vmatprep.mubr.bf16.mxu0 0
  %308 = vmatmul.mubr.bf16.gmra.mrb[0].mxu0 %v145
  %v309 = vpop.f32.mrb[0].mxu0
  %v310 = vadd.f32 %v41, %v309
  %v311 = vpop.f32.mrb[0].mxu0
  %v312 = vadd.f32 %v41, %v311
  %v313 = vpop.f32.mrb[0].mxu0
  %v314 = vadd.f32 %v46, %v313
  %v315 = vpop.f32.mrb[0].mxu0
  %v316 = vadd.f32 %v46, %v315
  %317 = vmatprep.mubr.bf16.mxu0 0
  %318 = vmatmul.mubr.bf16.gmra.mrb[0].mxu0 %v148
  %v319 = vpop.f32.mrb[0].mxu0
  %v320 = vadd.f32 %v51, %v319
  %v321 = vpop.f32.mrb[0].mxu0
  %v322 = vadd.f32 %v51, %v321
  %v323 = vpop.f32.mrb[0].mxu0
  %v324 = vadd.f32 %v56, %v323
  %v325 = vpop.f32.mrb[0].mxu0
  %v326 = vadd.f32 %v56, %v325
  %327 = vdwg.mxu0
  %v328 = vmax.f32 %v204, 0.0
  %v329 = vmax.f32 %v206, 0.0
  %v330 = vmax.f32 %v257, 0.0
  %v331 = vmax.f32 %v259, 0.0
  %v332 = vmax.f32 %v310, 0.0
  %v333 = vmax.f32 %v312, 0.0
  %v334 = vmax.f32 %v208, 0.0
  %v335 = vmax.f32 %v210, 0.0
  %v336 = vmax.f32 %v261, 0.0
  %v337 = vmax.f32 %v263, 0.0
  %v338 = vmax.f32 %v314, 0.0
  %v339 = vmax.f32 %v316, 0.0
  %v340 = vmax.f32 %v214, 0.0
  %v341 = vmax.f32 %v216, 0.0
  %v342 = vmax.f32 %v267, 0.0
  %v343 = vmax.f32 %v269, 0.0
  %v344 = vmax.f32 %v320, 0.0
  %v345 = vmax.f32 %v322, 0.0
  %v346 = vmax.f32 %v218, 0.0
  %v347 = vmax.f32 %v220, 0.0
  %v348 = vmax.f32 %v271, 0.0
  %v349 = vmax.f32 %v273, 0.0
  %v350 = vmax.f32 %v324, 0.0
  %v351 = vmax.f32 %v326, 0.0
  %352 = vst [vmem:[%s3] sm:$0xff] %v328
  %353 = vst [vmem:[%s3 + $0x8] sm:$0xff] %v329
  %354 = vst [vmem:[%s3 + $0x10] sm:$0xff] %v330
  %355 = vst [vmem:[%s3 + $0x18] sm:$0xff] %v331
  %356 = vst [vmem:[%s3 + $0x20] sm:$0xff] %v332
  %357 = vst [vmem:[%s3 + $0x28] sm:$0xff] %v333
  %358 = vst [vmem:[%s3 + $0x30] sm:$0xff] %v334
  %359 = vst [vmem:[%s3 + $0x38] sm:$0xff] %v335
  %360 = vst [vmem:[%s3 + $0x40] sm:$0xff] %v336
  %361 = vst [vmem:[%s3 + $0x48] sm:$0xff] %v337
  %362 = vst [vmem:[%s3 + $0x50] sm:$0xff] %v338
  %363 = vst [vmem:[%s3 + $0x58] sm:$0xff] %v339
  %364 = vst [vmem:[%s3 + $0x60] sm:$0xff] %v340
  %365 = vst [vmem:[%s3 + $0x68] sm:$0xff] %v341
  %366 = vst [vmem:[%s3 + $0x70] sm:$0xff] %v342
  %367 = vst [vmem:[%s3 + $0x78] sm:$0xff] %v343
  %368 = vst [vmem:[%s3 + $0x80] sm:$0xff] %v344
  %369 = vst [vmem:[%s3 + $0x88] sm:$0xff] %v345
  %370 = vst [vmem:[%s3 + $0x90] sm:$0xff] %v346
  %371 = vst [vmem:[%s3 + $0x98] sm:$0xff] %v347
  %372 = vst [vmem:[%s3 + $0xa0] sm:$0xff] %v348
  %373 = vst [vmem:[%s3 + $0xa8] sm:$0xff] %v349
  %374 = vst [vmem:[%s3 + $0xb0] sm:$0xff] %v350
  %375 = vst [vmem:[%s3 + $0xb8] sm:$0xff] %v351
  // Predicated region
  $region14: #{_mlcnn_forward.13} parent=0 // pred_check
    _
  $region15: #{_mlcnn_forward.13} parent=0 // pred_check_branch
    %377 = sbr.rel (0) target = $region17
  $region16: #{_mlcnn_forward.13} parent=0 // pred_region
    _
  $region17: #{_mlcnn_forward.13} parent=0 // pred_fallthru
    _
  // Predicated region
  $region18: #{_mlcnn_forward.13} parent=0 // pred_check
    _
  $region19: #{_mlcnn_forward.13} parent=0 // pred_check_branch
    %379 = sbr.rel (0) target = $region21
  $region20: #{_mlcnn_forward.13} parent=0 // pred_region
    _
  $region21: #{_mlcnn_forward.13} parent=0 // pred_fallthru
    _

// kernel: _mlcnn_forward.11
$region0: #{_mlcnn_forward.11}
  #allocation0 [shape = 'u32[]', space=smem, size = 0x4, offset = 0x4, fixed_abs, tag = 'smem constant byte address 0x4 - core index']
  #allocation1 [shape = 'u32[144,128]{1,0:T(1,128)}', space=vmem, size = 0x12000, scoped, tag = 'internal scratch']
  %s0 = inlined_call_operand.vmem [shape: bf16[32,48], index: 0, kind: input, shape index: {}]
  %s1 = inlined_call_operand.vmem [shape: f32[32,1], index: 1, kind: input, shape index: {}]
  %s2 = inlined_call_operand.vmem [shape: bf16[48,768], index: 2, kind: input, shape index: {}]
  %s3 = inlined_call_operand.vmem [shape: f32[32,768], index: 3, kind: output, shape index: {}]
  %s4 = sld [smem:[#allocation0]]
  $region22: #{_mlcnn_forward.11} parent=0
    _
  %s6 = ssub.s32 1, %s4
  %s7 = scalar_select 0, %s6, %s4
  // Predicated region
  $region2: #{_mlcnn_forward.11} parent=0 // pred_check
    _
  $region3: #{_mlcnn_forward.11} parent=0 // pred_check_branch
    %9 = sbr.rel (0) target = $region5
  $region4: #{_mlcnn_forward.11} parent=0 // pred_region
    _
  $region5: #{_mlcnn_forward.11} parent=0 // pred_fallthru
    _
  // Predicated region
  $region6: #{_mlcnn_forward.11} parent=0 // pred_check
    _
  $region7: #{_mlcnn_forward.11} parent=0 // pred_check_branch
    %11 = sbr.rel (0) target = $region9
  $region8: #{_mlcnn_forward.11} parent=0 // pred_region
    _
  $region9: #{_mlcnn_forward.11} parent=0 // pred_fallthru
    _
  // Predicated region
  $region10: #{_mlcnn_forward.11} parent=0 // pred_check
    _
  $region11: #{_mlcnn_forward.11} parent=0 // pred_check_branch
    %13 = sbr.rel (0) target = $region13
  $region12: #{_mlcnn_forward.11} parent=0 // pred_region
    _
  $region13: #{_mlcnn_forward.11} parent=0 // pred_fallthru
    _
  %v15 = vld [vmem:[%s0] sm:$0xf]
  %v16 = vld [vmem:[%s0 + $0x4] sm:$0xf]
  %v17 = vld [vmem:[%s0 + $0x8] sm:$0xf]
  %v18 = vld [vmem:[%s0 + $0xc] sm:$0xf]
  %v19 = vld [vmem:[%s2] sm:$0xff]
  %v20 = vld [vmem:[%s2 + $0x8] sm:$0xff]
  %v21 = vld [vmem:[%s2 + $0x10] sm:$0xff]
  %v22 = vld [vmem:[%s2 + $0x18] sm:$0xff]
  %v23 = vld [vmem:[%s2 + $0x20] sm:$0xff]
  %v24 = vld [vmem:[%s2 + $0x28] sm:$0xff]
  %v25 = vld [vmem:[%s2 + $0x30] sm:$0xff]
  %v26 = vld [vmem:[%s2 + $0x38] sm:$0xff]
  %v27 = vld [vmem:[%s2 + $0x40] sm:$0xff]
  %v28 = vld [vmem:[%s2 + $0x48] sm:$0xff]
  %v29 = vld [vmem:[%s2 + $0x50] sm:$0xff]
  %v30 = vld [vmem:[%s2 + $0x58] sm:$0xff]
  %v31 = vld [vmem:[%s2 + $0x60] sm:$0xff]
  %v32 = vld [vmem:[%s2 + $0x68] sm:$0xff]
  %v33 = vld [vmem:[%s2 + $0x70] sm:$0xff]
  %v34 = vld [vmem:[%s2 + $0x78] sm:$0xff]
  %v35 = vld [vmem:[%s2 + $0x80] sm:$0xff]
  %v36 = vld [vmem:[%s2 + $0x88] sm:$0xff]
  %v37 = vld [vmem:[%s1] sm:$0xff]
  %v38 = vld [vmem:[%s1 + $0x8] sm:$0xff]
  %v39 = vld [vmem:[%s1 + $0x10] sm:$0xff]
  %v40 = vld [vmem:[%s1 + $0x18] sm:$0xff]
  %42 = vset.pattern.permute.xlu0 0
  %43 = vperm.xlu0 %42, %v37
  %v44 = vpop.permute.xlu0 %43
  %47 = vset.pattern.permute.xlu0 0
  %48 = vperm.xlu0 %47, %v38
  %v49 = vpop.permute.xlu0 %48
  %52 = vset.pattern.permute.xlu0 0
  %53 = vperm.xlu0 %52, %v39
  %v54 = vpop.permute.xlu0 %53
  %57 = vset.pattern.permute.xlu0 0
  %58 = vperm.xlu0 %57, %v40
  %v59 = vpop.permute.xlu0 %58
  %v65 = vunpack.c.l.b16 %v15
  %v66 = vunpack.c.l.b16 %v16
  %v67 = vunpack.c.l.b16 %v17
  %v68 = vunpack.c.l.b16 %v18
  %v69 = vpack.c.b16 %v66, %v65
  %v70 = vpack.c.b16 %v68, %v67
  %v89 = vunpack.c.l.b16 %v19
  %v90 = vunpack.c.h.b16 %v19
  %v91 = vunpack.c.l.b16 %v20
  %v92 = vunpack.c.h.b16 %v20
  %v93 = vunpack.c.l.b16 %v21
  %v94 = vunpack.c.h.b16 %v21
  %v95 = vunpack.c.l.b16 %v22
  %v96 = vunpack.c.h.b16 %v22
  %v97 = vunpack.c.l.b16 %v23
  %v98 = vunpack.c.h.b16 %v23
  %v99 = vunpack.c.l.b16 %v24
  %v100 = vunpack.c.h.b16 %v24
  %v101 = vunpack.c.l.b16 %v25
  %v102 = vunpack.c.h.b16 %v25
  %v103 = vunpack.c.l.b16 %v26
  %v104 = vunpack.c.h.b16 %v26
  %v105 = vunpack.c.l.b16 %v27
  %v106 = vunpack.c.h.b16 %v27
  %v107 = vunpack.c.l.b16 %v28
  %v108 = vunpack.c.h.b16 %v28
  %v109 = vunpack.c.l.b16 %v29
  %v110 = vunpack.c.h.b16 %v29
  %v111 = vunpack.c.l.b16 %v30
  %v112 = vunpack.c.h.b16 %v30
  %v113 = vunpack.c.l.b16 %v31
  %v114 = vunpack.c.h.b16 %v31
  %v115 = vunpack.c.l.b16 %v32
  %v116 = vunpack.c.h.b16 %v32
  %v117 = vunpack.c.l.b16 %v33
  %v118 = vunpack.c.h.b16 %v33
  %v119 = vunpack.c.l.b16 %v34
  %v120 = vunpack.c.h.b16 %v34
  %v121 = vunpack.c.l.b16 %v35
  %v122 = vunpack.c.h.b16 %v35
  %v123 = vunpack.c.l.b16 %v36
  %v124 = vunpack.c.h.b16 %v36
  %v125 = vpack.c.b16 %v95, %v89
  %v126 = vpack.c.b16 %v96, %v90
  %v127 = vpack.c.b16 %v97, %v91
  %v128 = vpack.c.b16 %v98, %v92
  %v129 = vpack.c.b16 %v99, %v93
  %v130 = vpack.c.b16 %v100, %v94
  %v131 = vpack.c.b16 %v107, %v101
  %v132 = vpack.c.b16 %v108, %v102
  %v133 = vpack.c.b16 %v109, %v103
  %v134 = vpack.c.b16 %v110, %v104
  %v135 = vpack.c.b16 %v111, %v105
  %v136 = vpack.c.b16 %v112, %v106
  %v137 = vpack.c.b16 %v119, %v113
  %v138 = vpack.c.b16 %v120, %v114
  %v139 = vpack.c.b16 %v121, %v115
  %v140 = vpack.c.b16 %v122, %v116
  %v141 = vpack.c.b16 %v123, %v117
  %v142 = vpack.c.b16 %v124, %v118
  %vm161 = vcmask 392192
  %v163 = vsel %vm161, %v69, 0
  %v166 = vsel %vm161, %v70, 0
  %168 = vmatprep.subr.bf16.mxu0 %v126
  %169 = vmatpush1.bf16.msra.mxu0 %v125
  %170 = vmatprep.subr.bf16.mxu0 %v132
  %171 = vmatpush1.bf16.msra.mxu0 %v131
  %172 = vmatprep.subr.bf16.mxu0 %v138
  %173 = vmatpush1.bf16.msra.mxu0 %v137
  %174 = vmatprep.subr.bf16.mxu0 0
  %175 = vmatpush1.bf16.msra.mxu0 0
  %176 = vmatprep.subr.bf16.mxu0 0
  %177 = vmatpush1.bf16.msra.mxu0 0
  %178 = vmatprep.subr.bf16.mxu0 0
  %179 = vmatpush1.bf16.msra.mxu0 0
  %180 = vmatprep.subr.bf16.mxu0 0
  %181 = vmatpush1.bf16.msra.mxu0 0
  %182 = vmatprep.subr.bf16.mxu0 0
  %183 = vmatpush1.bf16.msra.mxu0 0
  %184 = vmatprep.subr.bf16.mxu0 0
  %185 = vmatpush1.bf16.msra.mxu0 0
  %186 = vmatprep.subr.bf16.mxu0 0
  %187 = vmatpush1.bf16.msra.mxu0 0
  %188 = vmatprep.subr.bf16.mxu0 0
  %189 = vmatpush1.bf16.msra.mxu0 0
  %190 = vmatprep.subr.bf16.mxu0 0
  %191 = vmatpush1.bf16.msra.mxu0 0
  %192 = vmatprep.subr.bf16.mxu0 0
  %193 = vmatpush1.bf16.msra.mxu0 0
  %194 = vmatprep.subr.bf16.mxu0 0
  %195 = vmatpush1.bf16.msra.mxu0 0
  %196 = vmatprep.subr.bf16.mxu0 0
  %197 = vmatpush1.bf16.msra.mxu0 0
  %198 = vmatprep.subr.bf16.mxu0 0
  %199 = vmatpush1.bf16.msra.mxu0 0
  %200 = vmatprep.mubr.bf16.mxu0 0
  %201 = vmatmul.mubr.bf16.gmra.mrb[0].mxu0 %v163
  %v202 = vpop.f32.mrb[0].mxu0
  %v203 = vadd.f32 %v44, %v202
  %v204 = vpop.f32.mrb[0].mxu0
  %v205 = vadd.f32 %v44, %v204
  %v206 = vpop.f32.mrb[0].mxu0
  %v207 = vadd.f32 %v49, %v206
  %v208 = vpop.f32.mrb[0].mxu0
  %v209 = vadd.f32 %v49, %v208
  %210 = vmatprep.mubr.bf16.mxu0 0
  %211 = vmatmul.mubr.bf16.gmra.mrb[0].mxu0 %v166
  %v212 = vpop.f32.mrb[0].mxu0
  %v213 = vadd.f32 %v54, %v212
  %v214 = vpop.f32.mrb[0].mxu0
  %v215 = vadd.f32 %v54, %v214
  %v216 = vpop.f32.mrb[0].mxu0
  %v217 = vadd.f32 %v59, %v216
  %v218 = vpop.f32.mrb[0].mxu0
  %v219 = vadd.f32 %v59, %v218
  %220 = vdwg.mxu0
  %221 = vmatprep.subr.bf16.mxu0 %v128
  %222 = vmatpush1.bf16.msra.mxu0 %v127
  %223 = vmatprep.subr.bf16.mxu0 %v134
  %224 = vmatpush1.bf16.msra.mxu0 %v133
  %225 = vmatprep.subr.bf16.mxu0 %v140
  %226 = vmatpush1.bf16.msra.mxu0 %v139
  %227 = vmatprep.subr.bf16.mxu0 0
  %228 = vmatpush1.bf16.msra.mxu0 0
  %229 = vmatprep.subr.bf16.mxu0 0
  %230 = vmatpush1.bf16.msra.mxu0 0
  %231 = vmatprep.subr.bf16.mxu0 0
  %232 = vmatpush1.bf16.msra.mxu0 0
  %233 = vmatprep.subr.bf16.mxu0 0
  %234 = vmatpush1.bf16.msra.mxu0 0
  %235 = vmatprep.subr.bf16.mxu0 0
  %236 = vmatpush1.bf16.msra.mxu0 0
  %237 = vmatprep.subr.bf16.mxu0 0
  %238 = vmatpush1.bf16.msra.mxu0 0
  %239 = vmatprep.subr.bf16.mxu0 0
  %240 = vmatpush1.bf16.msra.mxu0 0
  %241 = vmatprep.subr.bf16.mxu0 0
  %242 = vmatpush1.bf16.msra.mxu0 0
  %243 = vmatprep.subr.bf16.mxu0 0
  %244 = vmatpush1.bf16.msra.mxu0 0
  %245 = vmatprep.subr.bf16.mxu0 0
  %246 = vmatpush1.bf16.msra.mxu0 0
  %247 = vmatprep.subr.bf16.mxu0 0
  %248 = vmatpush1.bf16.msra.mxu0 0
  %249 = vmatprep.subr.bf16.mxu0 0
  %250 = vmatpush1.bf16.msra.mxu0 0
  %251 = vmatprep.subr.bf16.mxu0 0
  %252 = vmatpush1.bf16.msra.mxu0 0
  %253 = vmatprep.mubr.bf16.mxu0 0
  %254 = vmatmul.mubr.bf16.gmra.mrb[0].mxu0 %v163
  %v255 = vpop.f32.mrb[0].mxu0
  %v256 = vadd.f32 %v44, %v255
  %v257 = vpop.f32.mrb[0].mxu0
  %v258 = vadd.f32 %v44, %v257
  %v259 = vpop.f32.mrb[0].mxu0
  %v260 = vadd.f32 %v49, %v259
  %v261 = vpop.f32.mrb[0].mxu0
  %v262 = vadd.f32 %v49, %v261
  %263 = vmatprep.mubr.bf16.mxu0 0
  %264 = vmatmul.mubr.bf16.gmra.mrb[0].mxu0 %v166
  %v265 = vpop.f32.mrb[0].mxu0
  %v266 = vadd.f32 %v54, %v265
  %v267 = vpop.f32.mrb[0].mxu0
  %v268 = vadd.f32 %v54, %v267
  %v269 = vpop.f32.mrb[0].mxu0
  %v270 = vadd.f32 %v59, %v269
  %v271 = vpop.f32.mrb[0].mxu0
  %v272 = vadd.f32 %v59, %v271
  %273 = vdwg.mxu0
  %274 = vmatprep.subr.bf16.mxu0 %v130
  %275 = vmatpush1.bf16.msra.mxu0 %v129
  %276 = vmatprep.subr.bf16.mxu0 %v136
  %277 = vmatpush1.bf16.msra.mxu0 %v135
  %278 = vmatprep.subr.bf16.mxu0 %v142
  %279 = vmatpush1.bf16.msra.mxu0 %v141
  %280 = vmatprep.subr.bf16.mxu0 0
  %281 = vmatpush1.bf16.msra.mxu0 0
  %282 = vmatprep.subr.bf16.mxu0 0
  %283 = vmatpush1.bf16.msra.mxu0 0
  %284 = vmatprep.subr.bf16.mxu0 0
  %285 = vmatpush1.bf16.msra.mxu0 0
  %286 = vmatprep.subr.bf16.mxu0 0
  %287 = vmatpush1.bf16.msra.mxu0 0
  %288 = vmatprep.subr.bf16.mxu0 0
  %289 = vmatpush1.bf16.msra.mxu0 0
  %290 = vmatprep.subr.bf16.mxu0 0
  %291 = vmatpush1.bf16.msra.mxu0 0
  %292 = vmatprep.subr.bf16.mxu0 0
  %293 = vmatpush1.bf16.msra.mxu0 0
  %294 = vmatprep.subr.bf16.mxu0 0
  %295 = vmatpush1.bf16.msra.mxu0 0
  %296 = vmatprep.subr.bf16.mxu0 0
  %297 = vmatpush1.bf16.msra.mxu0 0
  %298 = vmatprep.subr.bf16.mxu0 0
  %299 = vmatpush1.bf16.msra.mxu0 0
  %300 = vmatprep.subr.bf16.mxu0 0
  %301 = vmatpush1.bf16.msra.mxu0 0
  %302 = vmatprep.subr.bf16.mxu0 0
  %303 = vmatpush1.bf16.msra.mxu0 0
  %304 = vmatprep.subr.bf16.mxu0 0
  %305 = vmatpush1.bf16.msra.mxu0 0
  %306 = vmatprep.mubr.bf16.mxu0 0
  %307 = vmatmul.mubr.bf16.gmra.mrb[0].mxu0 %v163
  %v308 = vpop.f32.mrb[0].mxu0
  %v309 = vadd.f32 %v44, %v308
  %v310 = vpop.f32.mrb[0].mxu0
  %v311 = vadd.f32 %v44, %v310
  %v312 = vpop.f32.mrb[0].mxu0
  %v313 = vadd.f32 %v49, %v312
  %v314 = vpop.f32.mrb[0].mxu0
  %v315 = vadd.f32 %v49, %v314
  %316 = vmatprep.mubr.bf16.mxu0 0
  %317 = vmatmul.mubr.bf16.gmra.mrb[0].mxu0 %v166
  %v318 = vpop.f32.mrb[0].mxu0
  %v319 = vadd.f32 %v54, %v318
  %v320 = vpop.f32.mrb[0].mxu0
  %v321 = vadd.f32 %v54, %v320
  %v322 = vpop.f32.mrb[0].mxu0
  %v323 = vadd.f32 %v59, %v322
  %v324 = vpop.f32.mrb[0].mxu0
  %v325 = vadd.f32 %v59, %v324
  %326 = vdwg.mxu0
  %v327 = vmax.f32 %v203, 0.0
  %v328 = vmax.f32 %v205, 0.0
  %v329 = vmax.f32 %v256, 0.0
  %v330 = vmax.f32 %v258, 0.0
  %v331 = vmax.f32 %v309, 0.0
  %v332 = vmax.f32 %v311, 0.0
  %v333 = vmax.f32 %v207, 0.0
  %v334 = vmax.f32 %v209, 0.0
  %v335 = vmax.f32 %v260, 0.0
  %v336 = vmax.f32 %v262, 0.0
  %v337 = vmax.f32 %v313, 0.0
  %v338 = vmax.f32 %v315, 0.0
  %v339 = vmax.f32 %v213, 0.0
  %v340 = vmax.f32 %v215, 0.0
  %v341 = vmax.f32 %v266, 0.0
  %v342 = vmax.f32 %v268, 0.0
  %v343 = vmax.f32 %v319, 0.0
  %v344 = vmax.f32 %v321, 0.0
  %v345 = vmax.f32 %v217, 0.0
  %v346 = vmax.f32 %v219, 0.0
  %v347 = vmax.f32 %v270, 0.0
  %v348 = vmax.f32 %v272, 0.0
  %v349 = vmax.f32 %v323, 0.0
  %v350 = vmax.f32 %v325, 0.0
  %351 = vst [vmem:[%s3] sm:$0xff] %v327
  %352 = vst [vmem:[%s3 + $0x8] sm:$0xff] %v328
  %353 = vst [vmem:[%s3 + $0x10] sm:$0xff] %v329
  %354 = vst [vmem:[%s3 + $0x18] sm:$0xff] %v330
  %355 = vst [vmem:[%s3 + $0x20] sm:$0xff] %v331
  %356 = vst [vmem:[%s3 + $0x28] sm:$0xff] %v332
  %357 = vst [vmem:[%s3 + $0x30] sm:$0xff] %v333
  %358 = vst [vmem:[%s3 + $0x38] sm:$0xff] %v334
  %359 = vst [vmem:[%s3 + $0x40] sm:$0xff] %v335
  %360 = vst [vmem:[%s3 + $0x48] sm:$0xff] %v336
  %361 = vst [vmem:[%s3 + $0x50] sm:$0xff] %v337
  %362 = vst [vmem:[%s3 + $0x58] sm:$0xff] %v338
  %363 = vst [vmem:[%s3 + $0x60] sm:$0xff] %v339
  %364 = vst [vmem:[%s3 + $0x68] sm:$0xff] %v340
  %365 = vst [vmem:[%s3 + $0x70] sm:$0xff] %v341
  %366 = vst [vmem:[%s3 + $0x78] sm:$0xff] %v342
  %367 = vst [vmem:[%s3 + $0x80] sm:$0xff] %v343
  %368 = vst [vmem:[%s3 + $0x88] sm:$0xff] %v344
  %369 = vst [vmem:[%s3 + $0x90] sm:$0xff] %v345
  %370 = vst [vmem:[%s3 + $0x98] sm:$0xff] %v346
  %371 = vst [vmem:[%s3 + $0xa0] sm:$0xff] %v347
  %372 = vst [vmem:[%s3 + $0xa8] sm:$0xff] %v348
  %373 = vst [vmem:[%s3 + $0xb0] sm:$0xff] %v349
  %374 = vst [vmem:[%s3 + $0xb8] sm:$0xff] %v350
  // Predicated region
  $region14: #{_mlcnn_forward.11} parent=0 // pred_check
    _
  $region15: #{_mlcnn_forward.11} parent=0 // pred_check_branch
    %376 = sbr.rel (0) target = $region17
  $region16: #{_mlcnn_forward.11} parent=0 // pred_region
    _
  $region17: #{_mlcnn_forward.11} parent=0 // pred_fallthru
    _
  // Predicated region
  $region18: #{_mlcnn_forward.11} parent=0 // pred_check
    _
  $region19: #{_mlcnn_forward.11} parent=0 // pred_check_branch
    %378 = sbr.rel (0) target = $region21
  $region20: #{_mlcnn_forward.11} parent=0 // pred_region
    _
  $region21: #{_mlcnn_forward.11} parent=0 // pred_fallthru
    _

// kernel: _mlcnn_forward.12
$region0: #{_mlcnn_forward.12}
  #allocation0 [shape = 'u32[]', space=smem, size = 0x4, offset = 0x4, fixed_abs, tag = 'smem constant byte address 0x4 - core index']
  #allocation1 [shape = 'u32[144,128]{1,0:T(1,128)}', space=vmem, size = 0x12000, scoped, tag = 'internal scratch']
  %s0 = inlined_call_operand.vmem [shape: bf16[64,96], index: 0, kind: input, shape index: {}]
  %s1 = inlined_call_operand.vmem [shape: f32[64,1], index: 1, kind: input, shape index: {}]
  %s2 = inlined_call_operand.vmem [shape: bf16[96,256], index: 2, kind: input, shape index: {}]
  %s3 = inlined_call_operand.vmem [shape: f32[64,256], index: 3, kind: output, shape index: {}]
  %s4 = sld [smem:[#allocation0]]
  $region22: #{_mlcnn_forward.12} parent=0
    _
  %s6 = ssub.s32 1, %s4
  %s7 = scalar_select 0, %s6, %s4
  // Predicated region
  $region2: #{_mlcnn_forward.12} parent=0 // pred_check
    _
  $region3: #{_mlcnn_forward.12} parent=0 // pred_check_branch
    %9 = sbr.rel (0) target = $region5
  $region4: #{_mlcnn_forward.12} parent=0 // pred_region
    _
  $region5: #{_mlcnn_forward.12} parent=0 // pred_fallthru
    _
  // Predicated region
  $region6: #{_mlcnn_forward.12} parent=0 // pred_check
    _
  $region7: #{_mlcnn_forward.12} parent=0 // pred_check_branch
    %11 = sbr.rel (0) target = $region9
  $region8: #{_mlcnn_forward.12} parent=0 // pred_region
    _
  $region9: #{_mlcnn_forward.12} parent=0 // pred_fallthru
    _
  // Predicated region
  $region10: #{_mlcnn_forward.12} parent=0 // pred_check
    _
  $region11: #{_mlcnn_forward.12} parent=0 // pred_check_branch
    %13 = sbr.rel (0) target = $region13
  $region12: #{_mlcnn_forward.12} parent=0 // pred_region
    _
  $region13: #{_mlcnn_forward.12} parent=0 // pred_fallthru
    _
  %v15 = vld [vmem:[%s0] sm:$0xf]
  %v16 = vld [vmem:[%s0 + $0x4] sm:$0xf]
  %v17 = vld [vmem:[%s0 + $0x8] sm:$0xf]
  %v18 = vld [vmem:[%s0 + $0xc] sm:$0xf]
  %v19 = vld [vmem:[%s0 + $0x10] sm:$0xf]
  %v20 = vld [vmem:[%s0 + $0x14] sm:$0xf]
  %v21 = vld [vmem:[%s0 + $0x18] sm:$0xf]
  %v22 = vld [vmem:[%s0 + $0x1c] sm:$0xf]
  %v23 = vld [vmem:[%s2] sm:$0xff]
  %v24 = vld [vmem:[%s2 + $0x8] sm:$0xff]
  %v25 = vld [vmem:[%s2 + $0x10] sm:$0xff]
  %v26 = vld [vmem:[%s2 + $0x18] sm:$0xff]
  %v27 = vld [vmem:[%s2 + $0x20] sm:$0xff]
  %v28 = vld [vmem:[%s2 + $0x28] sm:$0xff]
  %v29 = vld [vmem:[%s2 + $0x30] sm:$0xff]
  %v30 = vld [vmem:[%s2 + $0x38] sm:$0xff]
  %v31 = vld [vmem:[%s2 + $0x40] sm:$0xff]
  %v32 = vld [vmem:[%s2 + $0x48] sm:$0xff]
  %v33 = vld [vmem:[%s2 + $0x50] sm:$0xff]
  %v34 = vld [vmem:[%s2 + $0x58] sm:$0xff]
  %v35 = vld [vmem:[%s1] sm:$0xff]
  %v36 = vld [vmem:[%s1 + $0x8] sm:$0xff]
  %v37 = vld [vmem:[%s1 + $0x10] sm:$0xff]
  %v38 = vld [vmem:[%s1 + $0x18] sm:$0xff]
  %v39 = vld [vmem:[%s1 + $0x20] sm:$0xff]
  %v40 = vld [vmem:[%s1 + $0x28] sm:$0xff]
  %v41 = vld [vmem:[%s1 + $0x30] sm:$0xff]
  %v42 = vld [vmem:[%s1 + $0x38] sm:$0xff]
  %44 = vset.pattern.permute.xlu0 0
  %45 = vperm.xlu0 %44, %v35
  %v46 = vpop.permute.xlu0 %45
  %49 = vset.pattern.permute.xlu0 0
  %50 = vperm.xlu0 %49, %v36
  %v51 = vpop.permute.xlu0 %50
  %54 = vset.pattern.permute.xlu0 0
  %55 = vperm.xlu0 %54, %v37
  %v56 = vpop.permute.xlu0 %55
  %59 = vset.pattern.permute.xlu0 0
  %60 = vperm.xlu0 %59, %v38
  %v61 = vpop.permute.xlu0 %60
  %64 = vset.pattern.permute.xlu0 0
  %65 = vperm.xlu0 %64, %v39
  %v66 = vpop.permute.xlu0 %65
  %69 = vset.pattern.permute.xlu0 0
  %70 = vperm.xlu0 %69, %v40
  %v71 = vpop.permute.xlu0 %70
  %74 = vset.pattern.permute.xlu0 0
  %75 = vperm.xlu0 %74, %v41
  %v76 = vpop.permute.xlu0 %75
  %79 = vset.pattern.permute.xlu0 0
  %80 = vperm.xlu0 %79, %v42
  %v81 = vpop.permute.xlu0 %80
  %v91 = vunpack.c.l.b16 %v15
  %v92 = vunpack.c.l.b16 %v16
  %v93 = vunpack.c.l.b16 %v17
  %v94 = vunpack.c.l.b16 %v18
  %v95 = vunpack.c.l.b16 %v19
  %v96 = vunpack.c.l.b16 %v20
  %v97 = vunpack.c.l.b16 %v21
  %v98 = vunpack.c.l.b16 %v22
  %v99 = vpack.c.b16 %v92, %v91
  %v100 = vpack.c.b16 %v94, %v93
  %v101 = vpack.c.b16 %v96, %v95
  %v102 = vpack.c.b16 %v98, %v97
  %v115 = vunpack.c.l.b16 %v23
  %v116 = vunpack.c.h.b16 %v23
  %v117 = vunpack.c.l.b16 %v24
  %v118 = vunpack.c.h.b16 %v24
  %v119 = vunpack.c.l.b16 %v25
  %v120 = vunpack.c.h.b16 %v25
  %v121 = vunpack.c.l.b16 %v26
  %v122 = vunpack.c.h.b16 %v26
  %v123 = vunpack.c.l.b16 %v27
  %v124 = vunpack.c.h.b16 %v27
  %v125 = vunpack.c.l.b16 %v28
  %v126 = vunpack.c.h.b16 %v28
  %v127 = vunpack.c.l.b16 %v29
  %v128 = vunpack.c.h.b16 %v29
  %v129 = vunpack.c.l.b16 %v30
  %v130 = vunpack.c.h.b16 %v30
  %v131 = vunpack.c.l.b16 %v31
  %v132 = vunpack.c.h.b16 %v31
  %v133 = vunpack.c.l.b16 %v32
  %v134 = vunpack.c.h.b16 %v32
  %v135 = vunpack.c.l.b16 %v33
  %v136 = vunpack.c.h.b16 %v33
  %v137 = vunpack.c.l.b16 %v34
  %v138 = vunpack.c.h.b16 %v34
  %v139 = vpack.c.b16 %v117, %v115
  %v140 = vpack.c.b16 %v118, %v116
  %v141 = vpack.c.b16 %v121, %v119
  %v142 = vpack.c.b16 %v122, %v120
  %v143 = vpack.c.b16 %v125, %v123
  %v144 = vpack.c.b16 %v126, %v124
  %v145 = vpack.c.b16 %v129, %v127
  %v146 = vpack.c.b16 %v130, %v128
  %v147 = vpack.c.b16 %v133, %v131
  %v148 = vpack.c.b16 %v134, %v132
  %v149 = vpack.c.b16 %v137, %v135
  %v150 = vpack.c.b16 %v138, %v136
  %vm163 = vcmask 785408
  %v165 = vsel %vm163, %v99, 0
  %v168 = vsel %vm163, %v100, 0
  %v171 = vsel %vm163, %v101, 0
  %v174 = vsel %vm163, %v102, 0
  %176 = vmatprep.subr.bf16.mxu0 %v140
  %177 = vmatpush1.bf16.msra.mxu0 %v139
  %178 = vmatprep.subr.bf16.mxu0 %v142
  %179 = vmatpush1.bf16.msra.mxu0 %v141
  %180 = vmatprep.subr.bf16.mxu0 %v144
  %181 = vmatpush1.bf16.msra.mxu0 %v143
  %182 = vmatprep.subr.bf16.mxu0 %v146
  %183 = vmatpush1.bf16.msra.mxu0 %v145
  %184 = vmatprep.subr.bf16.mxu0 %v148
  %185 = vmatpush1.bf16.msra.mxu0 %v147
  %186 = vmatprep.subr.bf16.mxu0 %v150
  %187 = vmatpush1.bf16.msra.mxu0 %v149
  %188 = vmatprep.subr.bf16.mxu0 0
  %189 = vmatpush1.bf16.msra.mxu0 0
  %190 = vmatprep.subr.bf16.mxu0 0
  %191 = vmatpush1.bf16.msra.mxu0 0
  %192 = vmatprep.subr.bf16.mxu0 0
  %193 = vmatpush1.bf16.msra.mxu0 0
  %194 = vmatprep.subr.bf16.mxu0 0
  %195 = vmatpush1.bf16.msra.mxu0 0
  %196 = vmatprep.subr.bf16.mxu0 0
  %197 = vmatpush1.bf16.msra.mxu0 0
  %198 = vmatprep.subr.bf16.mxu0 0
  %199 = vmatpush1.bf16.msra.mxu0 0
  %200 = vmatprep.subr.bf16.mxu0 0
  %201 = vmatpush1.bf16.msra.mxu0 0
  %202 = vmatprep.subr.bf16.mxu0 0
  %203 = vmatpush1.bf16.msra.mxu0 0
  %204 = vmatprep.subr.bf16.mxu0 0
  %205 = vmatpush1.bf16.msra.mxu0 0
  %206 = vmatprep.subr.bf16.mxu0 0
  %207 = vmatpush1.bf16.msra.mxu0 0
  %208 = vmatprep.mubr.bf16.mxu0 0
  %209 = vmatmul.mubr.bf16.gmra.mrb[0].mxu0 %v165
  %v210 = vpop.f32.mrb[0].mxu0
  %v211 = vadd.f32 %v46, %v210
  %v212 = vpop.f32.mrb[0].mxu0
  %v213 = vadd.f32 %v46, %v212
  %v214 = vpop.f32.mrb[0].mxu0
  %v215 = vadd.f32 %v51, %v214
  %v216 = vpop.f32.mrb[0].mxu0
  %v217 = vadd.f32 %v51, %v216
  %218 = vmatprep.mubr.bf16.mxu0 0
  %219 = vmatmul.mubr.bf16.gmra.mrb[0].mxu0 %v168
  %v220 = vpop.f32.mrb[0].mxu0
  %v221 = vadd.f32 %v56, %v220
  %v222 = vpop.f32.mrb[0].mxu0
  %v223 = vadd.f32 %v56, %v222
  %v224 = vpop.f32.mrb[0].mxu0
  %v225 = vadd.f32 %v61, %v224
  %v226 = vpop.f32.mrb[0].mxu0
  %v227 = vadd.f32 %v61, %v226
  %228 = vmatprep.mubr.bf16.mxu0 0
  %229 = vmatmul.mubr.bf16.gmra.mrb[0].mxu0 %v171
  %v230 = vpop.f32.mrb[0].mxu0
  %v231 = vadd.f32 %v66, %v230
  %v232 = vpop.f32.mrb[0].mxu0
  %v233 = vadd.f32 %v66, %v232
  %v234 = vpop.f32.mrb[0].mxu0
  %v235 = vadd.f32 %v71, %v234
  %v236 = vpop.f32.mrb[0].mxu0
  %v237 = vadd.f32 %v71, %v236
  %238 = vmatprep.mubr.bf16.mxu0 0
  %239 = vmatmul.mubr.bf16.gmra.mrb[0].mxu0 %v174
  %v240 = vpop.f32.mrb[0].mxu0
  %v241 = vadd.f32 %v76, %v240
  %v242 = vpop.f32.mrb[0].mxu0
  %v243 = vadd.f32 %v76, %v242
  %v244 = vpop.f32.mrb[0].mxu0
  %v245 = vadd.f32 %v81, %v244
  %v246 = vpop.f32.mrb[0].mxu0
  %v247 = vadd.f32 %v81, %v246
  %248 = vdwg.mxu0
  %v249 = vmax.f32 %v211, 0.0
  %v250 = vmax.f32 %v213, 0.0
  %v251 = vmax.f32 %v215, 0.0
  %v252 = vmax.f32 %v217, 0.0
  %v253 = vmax.f32 %v221, 0.0
  %v254 = vmax.f32 %v223, 0.0
  %v255 = vmax.f32 %v225, 0.0
  %v256 = vmax.f32 %v227, 0.0
  %v257 = vmax.f32 %v231, 0.0
  %v258 = vmax.f32 %v233, 0.0
  %v259 = vmax.f32 %v235, 0.0
  %v260 = vmax.f32 %v237, 0.0
  %v261 = vmax.f32 %v241, 0.0
  %v262 = vmax.f32 %v243, 0.0
  %v263 = vmax.f32 %v245, 0.0
  %v264 = vmax.f32 %v247, 0.0
  %265 = vst [vmem:[%s3] sm:$0xff] %v249
  %266 = vst [vmem:[%s3 + $0x8] sm:$0xff] %v250
  %267 = vst [vmem:[%s3 + $0x10] sm:$0xff] %v251
  %268 = vst [vmem:[%s3 + $0x18] sm:$0xff] %v252
  %269 = vst [vmem:[%s3 + $0x20] sm:$0xff] %v253
  %270 = vst [vmem:[%s3 + $0x28] sm:$0xff] %v254
  %271 = vst [vmem:[%s3 + $0x30] sm:$0xff] %v255
  %272 = vst [vmem:[%s3 + $0x38] sm:$0xff] %v256
  %273 = vst [vmem:[%s3 + $0x40] sm:$0xff] %v257
  %274 = vst [vmem:[%s3 + $0x48] sm:$0xff] %v258
  %275 = vst [vmem:[%s3 + $0x50] sm:$0xff] %v259
  %276 = vst [vmem:[%s3 + $0x58] sm:$0xff] %v260
  %277 = vst [vmem:[%s3 + $0x60] sm:$0xff] %v261
  %278 = vst [vmem:[%s3 + $0x68] sm:$0xff] %v262
  %279 = vst [vmem:[%s3 + $0x70] sm:$0xff] %v263
  %280 = vst [vmem:[%s3 + $0x78] sm:$0xff] %v264
  // Predicated region
  $region14: #{_mlcnn_forward.12} parent=0 // pred_check
    _
  $region15: #{_mlcnn_forward.12} parent=0 // pred_check_branch
    %282 = sbr.rel (0) target = $region17
  $region16: #{_mlcnn_forward.12} parent=0 // pred_region
    _
  $region17: #{_mlcnn_forward.12} parent=0 // pred_fallthru
    _
  // Predicated region
  $region18: #{_mlcnn_forward.12} parent=0 // pred_check
    _
  $region19: #{_mlcnn_forward.12} parent=0 // pred_check_branch
    %284 = sbr.rel (0) target = $region21
  $region20: #{_mlcnn_forward.12} parent=0 // pred_region
    _
  $region21: #{_mlcnn_forward.12} parent=0 // pred_fallthru
    _

// kernel: _mlcnn_forward.19
$region0: #{_mlcnn_forward.19}
  #allocation0 [shape = 'u32[]', space=smem, size = 0x4, offset = 0x4, fixed_abs, tag = 'smem constant byte address 0x4 - core index']
  #allocation1 [shape = 'u32[144,128]{1,0:T(1,128)}', space=vmem, size = 0x12000, scoped, tag = 'internal scratch']
  #allocation2 [shape = 'f32[2,128]{1,0:T(2,128)}', space=vmem, size = 0x400, scoped, tag = 'scratch operand']
  %s0 = inlined_call_operand.vmem [shape: f32[2,13824], index: 0, kind: input, shape index: {}]
  %s1 = inlined_call_operand.vmem [shape: f32[2,13824], index: 1, kind: input, shape index: {}]
  %s2 = inlined_call_operand.vmem [shape: bf16[13824,128], index: 2, kind: input, shape index: {}]
  %s3 = inlined_call_operand.vmem [shape: f32[1,128], index: 3, kind: input, shape index: {}]
  %s4 = inlined_call_operand.vmem [shape: f32[2,128], index: 4, kind: input, shape index: {}]
  %s5 = inlined_call_operand.vmem [shape: bf16[128,10], index: 5, kind: input, shape index: {}]
  %s6 = inlined_call_operand.vmem [shape: f32[1,10], index: 6, kind: input, shape index: {}]
  %s7 = inlined_call_operand.hbm [shape: f32[2,10], index: 7, kind: output, shape index: {}]
  %s8 = sld [smem:[#allocation0]]
  $region69: #{_mlcnn_forward.19} parent=0
    _
  %s10 = ssub.s32 1, %s8
  %s11 = scalar_select 0, %s10, %s8
  $region1: #{_mlcnn_forward.19} parent=0
    #allocation3 [shape = 'u8[1024]{0}', space=vmem, size = 0x400, scoped, tag = 'output window, operand 0, single buffered']
    #allocation4 [shape = 's32[2]{0}', space=sflag, size = 0x8, scoped, tag = 'scoped memory for _mlcnn_forward.19']
    %12 = vsyncpa [#allocation4], 0
    loop: start=0, step=1, limit=6
    $region2: #{_mlcnn_forward.19} parent=1 // loop_pre_header
      _
    $region3: #{_mlcnn_forward.19} parent=1 // loop_header
      %s14 = sphi 0, %s18
      %p15 = scmp.ge.s32.totalorder %s14, 6
      %s24 = sphi 0, %s26
      %s27 = sphi 0, %s24
      %s28 = sphi 0, %s27
      %s44 = sphi 0, %s28
      %s50 = sphi 0, %s52
      %s53 = sphi 0, %s50
      %s54 = sphi 0, %s53
      %s70 = sphi 0, %s54
      %s76 = sphi 0, %s78
      %s79 = sphi 0, %s76
      %s80 = sphi 0, %s79
      %s96 = sphi 0, %s80
      %s100 = sphi 0, %s100
      %s102 = sphi 0, %s100
      %s103 = sphi 0, %s102
      %s117 = sphi 0, %s103
      %s121 = sphi 0, %s121
      %s123 = sphi 0, %s121
      %s124 = sphi 0, %s123
      %s138 = sphi 0, %s124
      %s142 = sphi 0, %s142
      %s144 = sphi 0, %s142
      %s145 = sphi 0, %s144
      %s159 = sphi 0, %s145
      %s163 = sphi 0, %s163
      %s165 = sphi 0, %s163
      %s166 = sphi 0, %s165
      %s180 = sphi 0, %s166
      %s184 = sphi 0, %s184
      %s186 = sphi 0, %s184
      %s187 = sphi 0, %s186
      %s201 = sphi 0, %s187
    $region4: #{_mlcnn_forward.19} parent=1 // loop_header_branch
      %17 = sbr.rel (%p15) target = $region8
    $region5: #{_mlcnn_forward.19} parent=1 // loop_body
      %s19 = ssub.s32 %s14, 1
      %s20 = ssub.s32 %s14, 2
      %s21 = sadd.s32 %s14, 1
      %s22 = ssub.s32 %s14, %s21
      %p23 = scmp.eq.s32.totalorder %s22, 0
      %s25 = sadd.s32 %s24, 1
      %s26 = scalar_select %p23, %s24, %s25
      %p29 = pneg %p23
      %p30 = scmp.eq.s32.totalorder %s14, 3
      %p31 = por %p29, %p30
      %p32 = scmp.ne.s32.totalorder %s24, %s27
      %p33 = scmp.eq.s32.totalorder %s14, 0
      %p34 = por %p32, %p33
      %p35 = scmp.ne.s32.totalorder %s24, %s27
      %p36 = scmp.eq.s32.totalorder %s19, 3
      %p37 = por %p35, %p36
      %p38 = scmp.ne.s32.totalorder %s27, %s28
      %p39 = scmp.eq.s32.totalorder %s19, 0
      %p40 = por %p38, %p39
      %p41 = scmp.ne.s32.totalorder %s27, %s28
      %p42 = scmp.eq.s32.totalorder %s20, 3
      %p43 = por %p41, %p42
      %p45 = scmp.ne.s32.totalorder %s28, %s44
      %p46 = scmp.eq.s32.totalorder %s20, 0
      %p47 = por %p45, %p46
      %s48 = ssub.s32 %s14, %s21
      %p49 = scmp.eq.s32.totalorder %s48, 0
      %s51 = sadd.s32 %s50, 1
      %s52 = scalar_select %p49, %s50, %s51
      %p55 = pneg %p49
      %p56 = scmp.eq.s32.totalorder %s14, 3
      %p57 = por %p55, %p56
      %p58 = scmp.ne.s32.totalorder %s50, %s53
      %p59 = scmp.eq.s32.totalorder %s14, 0
      %p60 = por %p58, %p59
      %p61 = scmp.ne.s32.totalorder %s50, %s53
      %p62 = scmp.eq.s32.totalorder %s19, 3
      %p63 = por %p61, %p62
      %p64 = scmp.ne.s32.totalorder %s53, %s54
      %p65 = scmp.eq.s32.totalorder %s19, 0
      %p66 = por %p64, %p65
      %p67 = scmp.ne.s32.totalorder %s53, %s54
      %p68 = scmp.eq.s32.totalorder %s20, 3
      %p69 = por %p67, %p68
      %p71 = scmp.ne.s32.totalorder %s54, %s70
      %p72 = scmp.eq.s32.totalorder %s20, 0
      %p73 = por %p71, %p72
      %s74 = ssub.s32 %s14, %s21
      %p75 = scmp.eq.s32.totalorder %s74, 0
      %s77 = sadd.s32 %s76, 1
      %s78 = scalar_select %p75, %s76, %s77
      %p81 = pneg %p75
      %p82 = scmp.eq.s32.totalorder %s14, 3
      %p83 = por %p81, %p82
      %p84 = scmp.ne.s32.totalorder %s76, %s79
      %p85 = scmp.eq.s32.totalorder %s14, 0
      %p86 = por %p84, %p85
      %p87 = scmp.ne.s32.totalorder %s76, %s79
      %p88 = scmp.eq.s32.totalorder %s19, 3
      %p89 = por %p87, %p88
      %p90 = scmp.ne.s32.totalorder %s79, %s80
      %p91 = scmp.eq.s32.totalorder %s19, 0
      %p92 = por %p90, %p91
      %p93 = scmp.ne.s32.totalorder %s79, %s80
      %p94 = scmp.eq.s32.totalorder %s20, 3
      %p95 = por %p93, %p94
      %p97 = scmp.ne.s32.totalorder %s80, %s96
      %p98 = scmp.eq.s32.totalorder %s20, 0
      %p99 = por %p97, %p98
      %s101 = sadd.s32 %s100, 1
      %p104 = scmp.eq.s32.totalorder %s14, 3
      %p105 = scmp.ne.s32.totalorder %s100, %s102
      %p106 = scmp.eq.s32.totalorder %s14, 0
      %p107 = por %p105, %p106
      %p108 = scmp.ne.s32.totalorder %s100, %s102
      %p109 = scmp.eq.s32.totalorder %s19, 3
      %p110 = por %p108, %p109
      %p111 = scmp.ne.s32.totalorder %s102, %s103
      %p112 = scmp.eq.s32.totalorder %s19, 0
      %p113 = por %p111, %p112
      %p114 = scmp.ne.s32.totalorder %s102, %s103
      %p115 = scmp.eq.s32.totalorder %s20, 3
      %p116 = por %p114, %p115
      %p118 = scmp.ne.s32.totalorder %s103, %s117
      %p119 = scmp.eq.s32.totalorder %s20, 0
      %p120 = por %p118, %p119
      %s122 = sadd.s32 %s121, 1
      %p125 = scmp.eq.s32.totalorder %s14, 3
      %p126 = scmp.ne.s32.totalorder %s121, %s123
      %p127 = scmp.eq.s32.totalorder %s14, 0
      %p128 = por %p126, %p127
      %p129 = scmp.ne.s32.totalorder %s121, %s123
      %p130 = scmp.eq.s32.totalorder %s19, 3
      %p131 = por %p129, %p130
      %p132 = scmp.ne.s32.totalorder %s123, %s124
      %p133 = scmp.eq.s32.totalorder %s19, 0
      %p134 = por %p132, %p133
      %p135 = scmp.ne.s32.totalorder %s123, %s124
      %p136 = scmp.eq.s32.totalorder %s20, 3
      %p137 = por %p135, %p136
      %p139 = scmp.ne.s32.totalorder %s124, %s138
      %p140 = scmp.eq.s32.totalorder %s20, 0
      %p141 = por %p139, %p140
      %s143 = sadd.s32 %s142, 1
      %p146 = scmp.eq.s32.totalorder %s14, 3
      %p147 = scmp.ne.s32.totalorder %s142, %s144
      %p148 = scmp.eq.s32.totalorder %s14, 0
      %p149 = por %p147, %p148
      %p150 = scmp.ne.s32.totalorder %s142, %s144
      %p151 = scmp.eq.s32.totalorder %s19, 3
      %p152 = por %p150, %p151
      %p153 = scmp.ne.s32.totalorder %s144, %s145
      %p154 = scmp.eq.s32.totalorder %s19, 0
      %p155 = por %p153, %p154
      %p156 = scmp.ne.s32.totalorder %s144, %s145
      %p157 = scmp.eq.s32.totalorder %s20, 3
      %p158 = por %p156, %p157
      %p160 = scmp.ne.s32.totalorder %s145, %s159
      %p161 = scmp.eq.s32.totalorder %s20, 0
      %p162 = por %p160, %p161
      %s164 = sadd.s32 %s163, 1
      %p167 = scmp.eq.s32.totalorder %s14, 3
      %p168 = scmp.ne.s32.totalorder %s163, %s165
      %p169 = scmp.eq.s32.totalorder %s14, 0
      %p170 = por %p168, %p169
      %p171 = scmp.ne.s32.totalorder %s163, %s165
      %p172 = scmp.eq.s32.totalorder %s19, 3
      %p173 = por %p171, %p172
      %p174 = scmp.ne.s32.totalorder %s165, %s166
      %p175 = scmp.eq.s32.totalorder %s19, 0
      %p176 = por %p174, %p175
      %p177 = scmp.ne.s32.totalorder %s165, %s166
      %p178 = scmp.eq.s32.totalorder %s20, 3
      %p179 = por %p177, %p178
      %p181 = scmp.ne.s32.totalorder %s166, %s180
      %p182 = scmp.eq.s32.totalorder %s20, 0
      %p183 = por %p181, %p182
      %s185 = sadd.s32 %s184, 1
      %p188 = scmp.eq.s32.totalorder %s14, 3
      %p189 = scmp.ne.s32.totalorder %s184, %s186
      %p190 = scmp.eq.s32.totalorder %s14, 0
      %p191 = por %p189, %p190
      %p192 = scmp.ne.s32.totalorder %s184, %s186
      %p193 = scmp.eq.s32.totalorder %s19, 3
      %p194 = por %p192, %p193
      %p195 = scmp.ne.s32.totalorder %s186, %s187
      %p196 = scmp.eq.s32.totalorder %s19, 0
      %p197 = por %p195, %p196
      %p198 = scmp.ne.s32.totalorder %s186, %s187
      %p199 = scmp.eq.s32.totalorder %s20, 3
      %p200 = por %p198, %p199
      %p202 = scmp.ne.s32.totalorder %s187, %s201
      %p203 = scmp.eq.s32.totalorder %s20, 0
      %p204 = por %p202, %p203
      %p205 = scmp.le.s32.totalorder 1, %s14
      %p206 = scmp.lt.s32.totalorder %s14, 5
      %p207 = pnand %p205, %p206
      %p208 = pneg %p207
      // Predicated region
      $region9: #{_mlcnn_forward.19} parent=5 // pred_check
        _
      $region10: #{_mlcnn_forward.19} parent=5 // pred_check_branch
        %210 = sbr.rel (%p207) target = $region12
      $region11: #{_mlcnn_forward.19} parent=5 // pred_region
        %s211 = ssub.s32 %s14, 1
        // Predicated region
        $region13: #{_mlcnn_forward.19} parent=11 // pred_check
          %p212 = pneg %p113
        $region14: #{_mlcnn_forward.19} parent=11 // pred_check_branch
          %214 = sbr.rel (%p212) target = $region16
        $region15: #{_mlcnn_forward.19} parent=11 // pred_region
          _
        $region16: #{_mlcnn_forward.19} parent=11 // pred_fallthru
          _
        // Predicated region
        $region17: #{_mlcnn_forward.19} parent=11 // pred_check
          %p215 = pneg %p134
        $region18: #{_mlcnn_forward.19} parent=11 // pred_check_branch
          %217 = sbr.rel (%p215) target = $region20
        $region19: #{_mlcnn_forward.19} parent=11 // pred_region
          _
        $region20: #{_mlcnn_forward.19} parent=11 // pred_fallthru
          _
        // Predicated region
        $region21: #{_mlcnn_forward.19} parent=11 // pred_check
          %p218 = pneg %p155
        $region22: #{_mlcnn_forward.19} parent=11 // pred_check_branch
          %220 = sbr.rel (%p218) target = $region24
        $region23: #{_mlcnn_forward.19} parent=11 // pred_region
          _
        $region24: #{_mlcnn_forward.19} parent=11 // pred_fallthru
          _
        // Predicated region
        $region25: #{_mlcnn_forward.19} parent=11 // pred_check
          %p221 = pneg %p176
        $region26: #{_mlcnn_forward.19} parent=11 // pred_check_branch
          %223 = sbr.rel (%p221) target = $region28
        $region27: #{_mlcnn_forward.19} parent=11 // pred_region
          _
        $region28: #{_mlcnn_forward.19} parent=11 // pred_fallthru
          _
      $region12: #{_mlcnn_forward.19} parent=5 // pred_fallthru
        _
      %p224 = scmp.lt.s32.totalorder %s14, 4
      // Predicated region
      $region29: #{_mlcnn_forward.19} parent=5 // pred_check
        %p225 = pneg %p224
      $region30: #{_mlcnn_forward.19} parent=5 // pred_check_branch
        %227 = sbr.rel (%p225) target = $region32
      $region31: #{_mlcnn_forward.19} parent=5 // pred_region
        // Predicated region
        $region33: #{_mlcnn_forward.19} parent=31 // pred_check
          %p228 = pneg %p34
        $region34: #{_mlcnn_forward.19} parent=31 // pred_check_branch
          %230 = sbr.rel (%p228) target = $region36
        $region35: #{_mlcnn_forward.19} parent=31 // pred_region
          %s231 = smul.u32 27, %s14
          %p232 = scmp.lt.s32.totalorder %s231, 107
          %s233 = scalar_select %p232, %s231, 107
          %s234 = smul.addr %s233, 2
          %s235 = scalar_lea.vmem %s0, %s234
          %s236 = smul.u32 27, %s14
        $region36: #{_mlcnn_forward.19} parent=31 // pred_fallthru
          _
        // Predicated region
        $region37: #{_mlcnn_forward.19} parent=31 // pred_check
          %p237 = pneg %p60
        $region38: #{_mlcnn_forward.19} parent=31 // pred_check_branch
          %239 = sbr.rel (%p237) target = $region40
        $region39: #{_mlcnn_forward.19} parent=31 // pred_region
          %s240 = smul.u32 27, %s14
          %p241 = scmp.lt.s32.totalorder %s240, 107
          %s242 = scalar_select %p241, %s240, 107
          %s243 = smul.addr %s242, 2
          %s244 = scalar_lea.vmem %s1, %s243
          %s245 = smul.u32 27, %s14
        $region40: #{_mlcnn_forward.19} parent=31 // pred_fallthru
          _
        // Predicated region
        $region41: #{_mlcnn_forward.19} parent=31 // pred_check
          %p246 = pneg %p86
        $region42: #{_mlcnn_forward.19} parent=31 // pred_check_branch
          %248 = sbr.rel (%p246) target = $region44
        $region43: #{_mlcnn_forward.19} parent=31 // pred_region
          %s249 = smul.u32 432, %s14
          %p250 = scmp.lt.s32.totalorder %s249, 1727
          %s251 = scalar_select %p250, %s249, 1727
          %s252 = smul.addr %s251, 4
          %s253 = scalar_lea.vmem %s2, %s252
          %s254 = smul.u32 432, %s14
        $region44: #{_mlcnn_forward.19} parent=31 // pred_fallthru
          _
      $region32: #{_mlcnn_forward.19} parent=5 // pred_fallthru
        _
      %p255 = scmp.le.s32.totalorder 1, %s14
      %p256 = scmp.lt.s32.totalorder %s14, 5
      %p257 = pnand %p255, %p256
      %p258 = pneg %p257
      // Predicated region
      $region45: #{_mlcnn_forward.19} parent=5 // pred_check
        _
      $region46: #{_mlcnn_forward.19} parent=5 // pred_check_branch
        %260 = sbr.rel (%p257) target = $region48
      $region47: #{_mlcnn_forward.19} parent=5 // pred_region
        %s261 = ssub.s32 %s14, 1
        %s262 = smul.u32 27, %s19
        %p263 = scmp.lt.s32.totalorder %s262, 107
        %s264 = scalar_select %p263, %s262, 107
        %s265 = smul.addr %s264, 2
        %s266 = scalar_lea.vmem %s0, %s265
        %p267 = pneg %p40
        %p268 = pneg %p37
        %s269 = smul.u32 27, %s19
        %p270 = scmp.lt.s32.totalorder %s269, 107
        %s271 = scalar_select %p270, %s269, 107
        %s272 = smul.addr %s271, 2
        %s273 = scalar_lea.vmem %s1, %s272
        %p274 = pneg %p66
        %p275 = pneg %p63
        %s276 = smul.u32 432, %s19
        %p277 = scmp.lt.s32.totalorder %s276, 1727
        %s278 = scalar_select %p277, %s276, 1727
        %s279 = smul.addr %s278, 4
        %s280 = scalar_lea.vmem %s2, %s279
        %p281 = pneg %p92
        %p282 = pneg %p89
        %p283 = pneg %p113
        %p284 = pneg %p110
        %p285 = pneg %p134
        %p286 = pneg %p131
        %p287 = pneg %p155
        %p288 = pneg %p152
        %p289 = pneg %p176
        %p290 = pneg %p173
        %p291 = pneg %p197
        %p292 = pneg %p194
        %s293 = smul.u32 27, %s19
        %p294 = scmp.lt.s32.totalorder %s293, 107
        %s295 = scalar_select %p294, %s293, 107
        %s296 = smul.addr %s295, 2
        %s297 = scalar_lea.vmem %s0, %s296
        %s298 = smul.u32 27, %s19
        %s299 = smul.u32 27, %s19
        %p300 = scmp.lt.s32.totalorder %s299, 107
        %s301 = scalar_select %p300, %s299, 107
        %s302 = smul.addr %s301, 2
        %s303 = scalar_lea.vmem %s1, %s302
        %s304 = smul.u32 27, %s19
        %s305 = smul.u32 432, %s19
        %p306 = scmp.lt.s32.totalorder %s305, 1727
        %s307 = scalar_select %p306, %s305, 1727
        %s308 = smul.addr %s307, 4
        %s309 = scalar_lea.vmem %s2, %s308
        %s310 = smul.u32 432, %s19
        %p312 = scmp.eq.s32.totalorder %s19, 0
        // Predicated region
        $region49: #{_mlcnn_forward.19} parent=47 // pred_check
          %p313 = pneg %p312
        $region50: #{_mlcnn_forward.19} parent=47 // pred_check_branch
          %315 = sbr.rel (%p313) target = $region52
        $region51: #{_mlcnn_forward.19} parent=47 // pred_region
          %316 = vst [vmem:[#allocation2] sm:$0x3] 0.0
        $region52: #{_mlcnn_forward.19} parent=47 // pred_fallthru
          _
        %v317 = vld [vmem:[%s297] sm:$0xff]
        %v318 = vld [vmem:[%s297 + $0x8] sm:$0xff]
        %v319 = vld [vmem:[%s297 + $0x10] sm:$0xff]
        %v320 = vld [vmem:[%s297 + $0x18] sm:$0xff]
        %v321 = vld [vmem:[%s297 + $0x20] sm:$0xff]
        %v322 = vld [vmem:[%s297 + $0x28] sm:$0xff]
        %v323 = vld [vmem:[%s297 + $0x30] sm:$0x3f]
        %v324 = vld [vmem:[%s303] sm:$0xff]
        %v325 = vld [vmem:[%s303 + $0x8] sm:$0xff]
        %v326 = vld [vmem:[%s303 + $0x10] sm:$0xff]
        %v327 = vld [vmem:[%s303 + $0x18] sm:$0xff]
        %v328 = vld [vmem:[%s303 + $0x20] sm:$0xff]
        %v329 = vld [vmem:[%s303 + $0x28] sm:$0xff]
        %v330 = vld [vmem:[%s303 + $0x30] sm:$0x3f]
        %v331 = vmul.f32 %v317, %v324
        %v332 = vmul.f32 %v318, %v325
        %v333 = vmul.f32 %v319, %v326
        %v334 = vmul.f32 %v320, %v327
        %v335 = vmul.f32 %v321, %v328
        %v336 = vmul.f32 %v322, %v329
        %v337 = vmul.f32 %v323, %v330
        %v345 = vcombine.high %v331, %v331
        %v347 = vunpack.c.l.s4 1983009808
        %v348 = vunpack.c.0.s8 %v347
        %v349 = vlaneseq
        %v350 = vshrl.u32 %v349, 7
        %v351 = vsub.s32 %v348, %v350
        %v352 = vrot.slane %v331, %v351
        %v354 = vunpack.c.l.s4 1983009808
        %v355 = vunpack.c.0.s8 %v354
        %v356 = vlaneseq
        %v357 = vshrl.u32 %v356, 7
        %v358 = vsub.s32 %v355, %v357
        %v359 = vrot.slane %v345, %v358
        %v360 = vcombine.high %v352, %v352
        %v361 = vcombine.high %v359, %v359
        %v362 = vcombine.high %v332, %v332
        %v364 = vunpack.c.l.s4 1983009808
        %v365 = vunpack.c.0.s8 %v364
        %v366 = vlaneseq
        %v367 = vshrl.u32 %v366, 7
        %v368 = vsub.s32 %v365, %v367
        %v369 = vrot.slane %v332, %v368
        %v371 = vunpack.c.l.s4 1983009808
        %v372 = vunpack.c.0.s8 %v371
        %v373 = vlaneseq
        %v374 = vshrl.u32 %v373, 7
        %v375 = vsub.s32 %v372, %v374
        %v376 = vrot.slane %v362, %v375
        %v377 = vcombine.high %v369, %v369
        %v378 = vcombine.high %v376, %v376
        %v379 = vcombine.high %v333, %v333
        %v381 = vunpack.c.l.s4 1983009808
        %v382 = vunpack.c.0.s8 %v381
        %v383 = vlaneseq
        %v384 = vshrl.u32 %v383, 7
        %v385 = vsub.s32 %v382, %v384
        %v386 = vrot.slane %v333, %v385
        %v388 = vunpack.c.l.s4 1983009808
        %v389 = vunpack.c.0.s8 %v388
        %v390 = vlaneseq
        %v391 = vshrl.u32 %v390, 7
        %v392 = vsub.s32 %v389, %v391
        %v393 = vrot.slane %v379, %v392
        %v394 = vcombine.high %v386, %v386
        %v395 = vcombine.high %v393, %v393
        %v396 = vcombine.high %v334, %v334
        %v398 = vunpack.c.l.s4 1983009808
        %v399 = vunpack.c.0.s8 %v398
        %v400 = vlaneseq
        %v401 = vshrl.u32 %v400, 7
        %v402 = vsub.s32 %v399, %v401
        %v403 = vrot.slane %v334, %v402
        %v405 = vunpack.c.l.s4 1983009808
        %v406 = vunpack.c.0.s8 %v405
        %v407 = vlaneseq
        %v408 = vshrl.u32 %v407, 7
        %v409 = vsub.s32 %v406, %v408
        %v410 = vrot.slane %v396, %v409
        %v411 = vcombine.high %v403, %v403
        %v412 = vcombine.high %v410, %v410
        %v413 = vcombine.high %v335, %v335
        %v415 = vunpack.c.l.s4 1983009808
        %v416 = vunpack.c.0.s8 %v415
        %v417 = vlaneseq
        %v418 = vshrl.u32 %v417, 7
        %v419 = vsub.s32 %v416, %v418
        %v420 = vrot.slane %v335, %v419
        %v422 = vunpack.c.l.s4 1983009808
        %v423 = vunpack.c.0.s8 %v422
        %v424 = vlaneseq
        %v425 = vshrl.u32 %v424, 7
        %v426 = vsub.s32 %v423, %v425
        %v427 = vrot.slane %v413, %v426
        %v428 = vcombine.high %v420, %v420
        %v429 = vcombine.high %v427, %v427
        %v430 = vcombine.high %v336, %v336
        %v432 = vunpack.c.l.s4 1983009808
        %v433 = vunpack.c.0.s8 %v432
        %v434 = vlaneseq
        %v435 = vshrl.u32 %v434, 7
        %v436 = vsub.s32 %v433, %v435
        %v437 = vrot.slane %v336, %v436
        %v439 = vunpack.c.l.s4 1983009808
        %v440 = vunpack.c.0.s8 %v439
        %v441 = vlaneseq
        %v442 = vshrl.u32 %v441, 7
        %v443 = vsub.s32 %v440, %v442
        %v444 = vrot.slane %v430, %v443
        %v445 = vcombine.high %v437, %v437
        %v446 = vcombine.high %v444, %v444
        %v447 = vcombine.high %v337, %v337
        %v449 = vunpack.c.l.s4 1983009808
        %v450 = vunpack.c.0.s8 %v449
        %v451 = vlaneseq
        %v452 = vshrl.u32 %v451, 7
        %v453 = vsub.s32 %v450, %v452
        %v454 = vrot.slane %v337, %v453
        %v456 = vunpack.c.l.s4 1983009808
        %v457 = vunpack.c.0.s8 %v456
        %v458 = vlaneseq
        %v459 = vshrl.u32 %v458, 7
        %v460 = vsub.s32 %v457, %v459
        %v461 = vrot.slane %v447, %v460
        %v462 = vcombine.high %v454, %v454
        %v490 = vpack.c.bf16 %v352, %v352
        %v491 = vpack.c.bf16 %v360, %v360
        %v492 = vpack.c.bf16 %v359, %v359
        %v493 = vpack.c.bf16 %v361, %v361
        %v494 = vpack.c.bf16 %v369, %v369
        %v495 = vpack.c.bf16 %v377, %v377
        %v496 = vpack.c.bf16 %v376, %v376
        %v497 = vpack.c.bf16 %v378, %v378
        %v498 = vpack.c.bf16 %v386, %v386
        %v499 = vpack.c.bf16 %v394, %v394
        %v500 = vpack.c.bf16 %v393, %v393
        %v501 = vpack.c.bf16 %v395, %v395
        %v502 = vpack.c.bf16 %v403, %v403
        %v503 = vpack.c.bf16 %v411, %v411
        %v504 = vpack.c.bf16 %v410, %v410
        %v505 = vpack.c.bf16 %v412, %v412
        %v506 = vpack.c.bf16 %v420, %v420
        %v507 = vpack.c.bf16 %v428, %v428
        %v508 = vpack.c.bf16 %v427, %v427
        %v509 = vpack.c.bf16 %v429, %v429
        %v510 = vpack.c.bf16 %v437, %v437
        %v511 = vpack.c.bf16 %v445, %v445
        %v512 = vpack.c.bf16 %v444, %v444
        %v513 = vpack.c.bf16 %v446, %v446
        %v514 = vpack.c.bf16 %v454, %v454
        %v515 = vpack.c.bf16 %v462, %v462
        %v516 = vpack.c.bf16 %v461, %v461
        %v517 = vld [vmem:[#allocation2] sm:$0x3]
        %v518 = vld [vmem:[%s309] sm:$0xf]
        %v519 = vld [vmem:[%s309 + $0x4] sm:$0xf]
        %v520 = vld [vmem:[%s309 + $0x8] sm:$0xf]
        %v521 = vld [vmem:[%s309 + $0xc] sm:$0xf]
        %v522 = vld [vmem:[%s309 + $0x10] sm:$0xf]
        %v523 = vld [vmem:[%s309 + $0x14] sm:$0xf]
        %v524 = vld [vmem:[%s309 + $0x18] sm:$0xf]
        %v525 = vld [vmem:[%s309 + $0x1c] sm:$0xf]
        %v526 = vld [vmem:[%s309 + $0x20] sm:$0xf]
        %v527 = vld [vmem:[%s309 + $0x24] sm:$0xf]
        %v528 = vld [vmem:[%s309 + $0x28] sm:$0xf]
        %v529 = vld [vmem:[%s309 + $0x2c] sm:$0xf]
        %v530 = vld [vmem:[%s309 + $0x30] sm:$0xf]
        %v531 = vld [vmem:[%s309 + $0x34] sm:$0xf]
        %v532 = vld [vmem:[%s309 + $0x38] sm:$0xf]
        %v533 = vld [vmem:[%s309 + $0x3c] sm:$0xf]
        %v534 = vld [vmem:[%s309 + $0x40] sm:$0xf]
        %v535 = vld [vmem:[%s309 + $0x44] sm:$0xf]
        %v536 = vld [vmem:[%s309 + $0x48] sm:$0xf]
        %v537 = vld [vmem:[%s309 + $0x4c] sm:$0xf]
        %v538 = vld [vmem:[%s309 + $0x50] sm:$0xf]
        %v539 = vld [vmem:[%s309 + $0x54] sm:$0xf]
        %v540 = vld [vmem:[%s309 + $0x58] sm:$0xf]
        %v541 = vld [vmem:[%s309 + $0x5c] sm:$0xf]
        %v542 = vld [vmem:[%s309 + $0x60] sm:$0xf]
        %v543 = vld [vmem:[%s309 + $0x64] sm:$0xf]
        %v544 = vld [vmem:[%s309 + $0x68] sm:$0xf]
        %v545 = vld [vmem:[%s309 + $0x6c] sm:$0xf]
        %v546 = vld [vmem:[%s309 + $0x70] sm:$0xf]
        %v547 = vld [vmem:[%s309 + $0x74] sm:$0xf]
        %v548 = vld [vmem:[%s309 + $0x78] sm:$0xf]
        %v549 = vld [vmem:[%s309 + $0x7c] sm:$0xf]
        %v550 = vld [vmem:[%s309 + $0x80] sm:$0xf]
        %v551 = vld [vmem:[%s309 + $0x84] sm:$0xf]
        %v552 = vld [vmem:[%s309 + $0x88] sm:$0xf]
        %v553 = vld [vmem:[%s309 + $0x8c] sm:$0xf]
        %v554 = vld [vmem:[%s309 + $0x90] sm:$0xf]
        %v555 = vld [vmem:[%s309 + $0x94] sm:$0xf]
        %v556 = vld [vmem:[%s309 + $0x98] sm:$0xf]
        %v557 = vld [vmem:[%s309 + $0x9c] sm:$0xf]
        %v558 = vld [vmem:[%s309 + $0xa0] sm:$0xf]
        %v559 = vld [vmem:[%s309 + $0xa4] sm:$0xf]
        %v560 = vld [vmem:[%s309 + $0xa8] sm:$0xf]
        %v561 = vld [vmem:[%s309 + $0xac] sm:$0xf]
        %v562 = vld [vmem:[%s309 + $0xb0] sm:$0xf]
        %v563 = vld [vmem:[%s309 + $0xb4] sm:$0xf]
        %v564 = vld [vmem:[%s309 + $0xb8] sm:$0xf]
        %v565 = vld [vmem:[%s309 + $0xbc] sm:$0xf]
        %v566 = vld [vmem:[%s309 + $0xc0] sm:$0xf]
        %v567 = vld [vmem:[%s309 + $0xc4] sm:$0xf]
        %v568 = vld [vmem:[%s309 + $0xc8] sm:$0xf]
        %v569 = vld [vmem:[%s309 + $0xcc] sm:$0xf]
        %v570 = vld [vmem:[%s309 + $0xd0] sm:$0xf]
        %v571 = vld [vmem:[%s309 + $0xd4] sm:$0xf]
        %v572 = vld [vmem:[%s309 + $0xd8] sm:$0xf]
        %v573 = vld [vmem:[%s309 + $0xdc] sm:$0xf]
        %v574 = vld [vmem:[%s309 + $0xe0] sm:$0xf]
        %v575 = vld [vmem:[%s309 + $0xe4] sm:$0xf]
        %v576 = vld [vmem:[%s309 + $0xe8] sm:$0xf]
        %v577 = vld [vmem:[%s309 + $0xec] sm:$0xf]
        %v578 = vld [vmem:[%s309 + $0xf0] sm:$0xf]
        %v579 = vld [vmem:[%s309 + $0xf4] sm:$0xf]
        %v580 = vld [vmem:[%s309 + $0xf8] sm:$0xf]
        %v581 = vld [vmem:[%s309 + $0xfc] sm:$0xf]
        %v582 = vld [vmem:[%s309 + $0x100] sm:$0xf]
        %v583 = vld [vmem:[%s309 + $0x104] sm:$0xf]
        %v584 = vld [vmem:[%s309 + $0x108] sm:$0xf]
        %v585 = vld [vmem:[%s309 + $0x10c] sm:$0xf]
        %v586 = vld [vmem:[%s309 + $0x110] sm:$0xf]
        %v587 = vld [vmem:[%s309 + $0x114] sm:$0xf]
        %v588 = vld [vmem:[%s309 + $0x118] sm:$0xf]
        %v589 = vld [vmem:[%s309 + $0x11c] sm:$0xf]
        %v590 = vld [vmem:[%s309 + $0x120] sm:$0xf]
        %v591 = vld [vmem:[%s309 + $0x124] sm:$0xf]
        %v592 = vld [vmem:[%s309 + $0x128] sm:$0xf]
        %v593 = vld [vmem:[%s309 + $0x12c] sm:$0xf]
        %v594 = vld [vmem:[%s309 + $0x130] sm:$0xf]
        %v595 = vld [vmem:[%s309 + $0x134] sm:$0xf]
        %v596 = vld [vmem:[%s309 + $0x138] sm:$0xf]
        %v597 = vld [vmem:[%s309 + $0x13c] sm:$0xf]
        %v598 = vld [vmem:[%s309 + $0x140] sm:$0xf]
        %v599 = vld [vmem:[%s309 + $0x144] sm:$0xf]
        %v600 = vld [vmem:[%s309 + $0x148] sm:$0xf]
        %v601 = vld [vmem:[%s309 + $0x14c] sm:$0xf]
        %v602 = vld [vmem:[%s309 + $0x150] sm:$0xf]
        %v603 = vld [vmem:[%s309 + $0x154] sm:$0xf]
        %v604 = vld [vmem:[%s309 + $0x158] sm:$0xf]
        %v605 = vld [vmem:[%s309 + $0x15c] sm:$0xf]
        %v606 = vld [vmem:[%s309 + $0x160] sm:$0xf]
        %v607 = vld [vmem:[%s309 + $0x164] sm:$0xf]
        %v608 = vld [vmem:[%s309 + $0x168] sm:$0xf]
        %v609 = vld [vmem:[%s309 + $0x16c] sm:$0xf]
        %v610 = vld [vmem:[%s309 + $0x170] sm:$0xf]
        %v611 = vld [vmem:[%s309 + $0x174] sm:$0xf]
        %v612 = vld [vmem:[%s309 + $0x178] sm:$0xf]
        %v613 = vld [vmem:[%s309 + $0x17c] sm:$0xf]
        %v614 = vld [vmem:[%s309 + $0x180] sm:$0xf]
        %v615 = vld [vmem:[%s309 + $0x184] sm:$0xf]
        %v616 = vld [vmem:[%s309 + $0x188] sm:$0xf]
        %v617 = vld [vmem:[%s309 + $0x18c] sm:$0xf]
        %v618 = vld [vmem:[%s309 + $0x190] sm:$0xf]
        %v619 = vld [vmem:[%s309 + $0x194] sm:$0xf]
        %v620 = vld [vmem:[%s309 + $0x198] sm:$0xf]
        %v621 = vld [vmem:[%s309 + $0x19c] sm:$0xf]
        %v622 = vld [vmem:[%s309 + $0x1a0] sm:$0xf]
        %v623 = vld [vmem:[%s309 + $0x1a4] sm:$0xf]
        %v624 = vld [vmem:[%s309 + $0x1a8] sm:$0xf]
        %v625 = vld [vmem:[%s309 + $0x1ac] sm:$0xf]
        %v626 = vld [vmem:[%s309 + $0x1b0] sm:$0xf]
        %v627 = vld [vmem:[%s309 + $0x1b4] sm:$0xf]
        %v628 = vld [vmem:[%s309 + $0x1b8] sm:$0xf]
        %v629 = vld [vmem:[%s309 + $0x1bc] sm:$0xf]
        %v630 = vld [vmem:[%s309 + $0x1c0] sm:$0xf]
        %v631 = vld [vmem:[%s309 + $0x1c4] sm:$0xf]
        %v632 = vld [vmem:[%s309 + $0x1c8] sm:$0xf]
        %v633 = vld [vmem:[%s309 + $0x1cc] sm:$0xf]
        %v634 = vld [vmem:[%s309 + $0x1d0] sm:$0xf]
        %v635 = vld [vmem:[%s309 + $0x1d4] sm:$0xf]
        %v636 = vld [vmem:[%s309 + $0x1d8] sm:$0xf]
        %v637 = vld [vmem:[%s309 + $0x1dc] sm:$0xf]
        %v638 = vld [vmem:[%s309 + $0x1e0] sm:$0xf]
        %v639 = vld [vmem:[%s309 + $0x1e4] sm:$0xf]
        %v640 = vld [vmem:[%s309 + $0x1e8] sm:$0xf]
        %v641 = vld [vmem:[%s309 + $0x1ec] sm:$0xf]
        %v642 = vld [vmem:[%s309 + $0x1f0] sm:$0xf]
        %v643 = vld [vmem:[%s309 + $0x1f4] sm:$0xf]
        %v644 = vld [vmem:[%s309 + $0x1f8] sm:$0xf]
        %v645 = vld [vmem:[%s309 + $0x1fc] sm:$0xf]
        %v646 = vld [vmem:[%s309 + $0x200] sm:$0xf]
        %v647 = vld [vmem:[%s309 + $0x204] sm:$0xf]
        %v648 = vld [vmem:[%s309 + $0x208] sm:$0xf]
        %v649 = vld [vmem:[%s309 + $0x20c] sm:$0xf]
        %v650 = vld [vmem:[%s309 + $0x210] sm:$0xf]
        %v651 = vld [vmem:[%s309 + $0x214] sm:$0xf]
        %v652 = vld [vmem:[%s309 + $0x218] sm:$0xf]
        %v653 = vld [vmem:[%s309 + $0x21c] sm:$0xf]
        %v654 = vld [vmem:[%s309 + $0x220] sm:$0xf]
        %v655 = vld [vmem:[%s309 + $0x224] sm:$0xf]
        %v656 = vld [vmem:[%s309 + $0x228] sm:$0xf]
        %v657 = vld [vmem:[%s309 + $0x22c] sm:$0xf]
        %v658 = vld [vmem:[%s309 + $0x230] sm:$0xf]
        %v659 = vld [vmem:[%s309 + $0x234] sm:$0xf]
        %v660 = vld [vmem:[%s309 + $0x238] sm:$0xf]
        %v661 = vld [vmem:[%s309 + $0x23c] sm:$0xf]
        %v662 = vld [vmem:[%s309 + $0x240] sm:$0xf]
        %v663 = vld [vmem:[%s309 + $0x244] sm:$0xf]
        %v664 = vld [vmem:[%s309 + $0x248] sm:$0xf]
        %v665 = vld [vmem:[%s309 + $0x24c] sm:$0xf]
        %v666 = vld [vmem:[%s309 + $0x250] sm:$0xf]
        %v667 = vld [vmem:[%s309 + $0x254] sm:$0xf]
        %v668 = vld [vmem:[%s309 + $0x258] sm:$0xf]
        %v669 = vld [vmem:[%s309 + $0x25c] sm:$0xf]
        %v670 = vld [vmem:[%s309 + $0x260] sm:$0xf]
        %v671 = vld [vmem:[%s309 + $0x264] sm:$0xf]
        %v672 = vld [vmem:[%s309 + $0x268] sm:$0xf]
        %v673 = vld [vmem:[%s309 + $0x26c] sm:$0xf]
        %v674 = vld [vmem:[%s309 + $0x270] sm:$0xf]
        %v675 = vld [vmem:[%s309 + $0x274] sm:$0xf]
        %v676 = vld [vmem:[%s309 + $0x278] sm:$0xf]
        %v677 = vld [vmem:[%s309 + $0x27c] sm:$0xf]
        %v678 = vld [vmem:[%s309 + $0x280] sm:$0xf]
        %v679 = vld [vmem:[%s309 + $0x284] sm:$0xf]
        %v680 = vld [vmem:[%s309 + $0x288] sm:$0xf]
        %v681 = vld [vmem:[%s309 + $0x28c] sm:$0xf]
        %v682 = vld [vmem:[%s309 + $0x290] sm:$0xf]
        %v683 = vld [vmem:[%s309 + $0x294] sm:$0xf]
        %v684 = vld [vmem:[%s309 + $0x298] sm:$0xf]
        %v685 = vld [vmem:[%s309 + $0x29c] sm:$0xf]
        %v686 = vld [vmem:[%s309 + $0x2a0] sm:$0xf]
        %v687 = vld [vmem:[%s309 + $0x2a4] sm:$0xf]
        %v688 = vld [vmem:[%s309 + $0x2a8] sm:$0xf]
        %v689 = vld [vmem:[%s309 + $0x2ac] sm:$0xf]
        %v690 = vld [vmem:[%s309 + $0x2b0] sm:$0xf]
        %v691 = vld [vmem:[%s309 + $0x2b4] sm:$0xf]
        %v692 = vld [vmem:[%s309 + $0x2b8] sm:$0xf]
        %v693 = vld [vmem:[%s309 + $0x2bc] sm:$0xf]
        %v694 = vld [vmem:[%s309 + $0x2c0] sm:$0xf]
        %v695 = vld [vmem:[%s309 + $0x2c4] sm:$0xf]
        %v696 = vld [vmem:[%s309 + $0x2c8] sm:$0xf]
        %v697 = vld [vmem:[%s309 + $0x2cc] sm:$0xf]
        %v698 = vld [vmem:[%s309 + $0x2d0] sm:$0xf]
        %v699 = vld [vmem:[%s309 + $0x2d4] sm:$0xf]
        %v700 = vld [vmem:[%s309 + $0x2d8] sm:$0xf]
        %v701 = vld [vmem:[%s309 + $0x2dc] sm:$0xf]
        %v702 = vld [vmem:[%s309 + $0x2e0] sm:$0xf]
        %v703 = vld [vmem:[%s309 + $0x2e4] sm:$0xf]
        %v704 = vld [vmem:[%s309 + $0x2e8] sm:$0xf]
        %v705 = vld [vmem:[%s309 + $0x2ec] sm:$0xf]
        %v706 = vld [vmem:[%s309 + $0x2f0] sm:$0xf]
        %v707 = vld [vmem:[%s309 + $0x2f4] sm:$0xf]
        %v708 = vld [vmem:[%s309 + $0x2f8] sm:$0xf]
        %v709 = vld [vmem:[%s309 + $0x2fc] sm:$0xf]
        %v710 = vld [vmem:[%s309 + $0x300] sm:$0xf]
        %v711 = vld [vmem:[%s309 + $0x304] sm:$0xf]
        %v712 = vld [vmem:[%s309 + $0x308] sm:$0xf]
        %v713 = vld [vmem:[%s309 + $0x30c] sm:$0xf]
        %v714 = vld [vmem:[%s309 + $0x310] sm:$0xf]
        %v715 = vld [vmem:[%s309 + $0x314] sm:$0xf]
        %v716 = vld [vmem:[%s309 + $0x318] sm:$0xf]
        %v717 = vld [vmem:[%s309 + $0x31c] sm:$0xf]
        %v718 = vld [vmem:[%s309 + $0x320] sm:$0xf]
        %v719 = vld [vmem:[%s309 + $0x324] sm:$0xf]
        %v720 = vld [vmem:[%s309 + $0x328] sm:$0xf]
        %v721 = vld [vmem:[%s309 + $0x32c] sm:$0xf]
        %v722 = vld [vmem:[%s309 + $0x330] sm:$0xf]
        %v723 = vld [vmem:[%s309 + $0x334] sm:$0xf]
        %v724 = vld [vmem:[%s309 + $0x338] sm:$0xf]
        %v725 = vld [vmem:[%s309 + $0x33c] sm:$0xf]
        %v726 = vld [vmem:[%s309 + $0x340] sm:$0xf]
        %v727 = vld [vmem:[%s309 + $0x344] sm:$0xf]
        %v728 = vld [vmem:[%s309 + $0x348] sm:$0xf]
        %v729 = vld [vmem:[%s309 + $0x34c] sm:$0xf]
        %v730 = vld [vmem:[%s309 + $0x350] sm:$0xf]
        %v731 = vld [vmem:[%s309 + $0x354] sm:$0xf]
        %v732 = vld [vmem:[%s309 + $0x358] sm:$0xf]
        %v733 = vld [vmem:[%s309 + $0x35c] sm:$0xf]
        %v734 = vld [vmem:[%s309 + $0x360] sm:$0xf]
        %v735 = vld [vmem:[%s309 + $0x364] sm:$0xf]
        %v736 = vld [vmem:[%s309 + $0x368] sm:$0xf]
        %v737 = vld [vmem:[%s309 + $0x36c] sm:$0xf]
        %v738 = vld [vmem:[%s309 + $0x370] sm:$0xf]
        %v739 = vld [vmem:[%s309 + $0x374] sm:$0xf]
        %v740 = vld [vmem:[%s309 + $0x378] sm:$0xf]
        %v741 = vld [vmem:[%s309 + $0x37c] sm:$0xf]
        %v742 = vld [vmem:[%s309 + $0x380] sm:$0xf]
        %v743 = vld [vmem:[%s309 + $0x384] sm:$0xf]
        %v744 = vld [vmem:[%s309 + $0x388] sm:$0xf]
        %v745 = vld [vmem:[%s309 + $0x38c] sm:$0xf]
        %v746 = vld [vmem:[%s309 + $0x390] sm:$0xf]
        %v747 = vld [vmem:[%s309 + $0x394] sm:$0xf]
        %v748 = vld [vmem:[%s309 + $0x398] sm:$0xf]
        %v749 = vld [vmem:[%s309 + $0x39c] sm:$0xf]
        %v750 = vld [vmem:[%s309 + $0x3a0] sm:$0xf]
        %v751 = vld [vmem:[%s309 + $0x3a4] sm:$0xf]
        %v752 = vld [vmem:[%s309 + $0x3a8] sm:$0xf]
        %v753 = vld [vmem:[%s309 + $0x3ac] sm:$0xf]
        %v754 = vld [vmem:[%s309 + $0x3b0] sm:$0xf]
        %v755 = vld [vmem:[%s309 + $0x3b4] sm:$0xf]
        %v756 = vld [vmem:[%s309 + $0x3b8] sm:$0xf]
        %v757 = vld [vmem:[%s309 + $0x3bc] sm:$0xf]
        %v758 = vld [vmem:[%s309 + $0x3c0] sm:$0xf]
        %v759 = vld [vmem:[%s309 + $0x3c4] sm:$0xf]
        %v760 = vld [vmem:[%s309 + $0x3c8] sm:$0xf]
        %v761 = vld [vmem:[%s309 + $0x3cc] sm:$0xf]
        %v762 = vld [vmem:[%s309 + $0x3d0] sm:$0xf]
        %v763 = vld [vmem:[%s309 + $0x3d4] sm:$0xf]
        %v764 = vld [vmem:[%s309 + $0x3d8] sm:$0xf]
        %v765 = vld [vmem:[%s309 + $0x3dc] sm:$0xf]
        %v766 = vld [vmem:[%s309 + $0x3e0] sm:$0xf]
        %v767 = vld [vmem:[%s309 + $0x3e4] sm:$0xf]
        %v768 = vld [vmem:[%s309 + $0x3e8] sm:$0xf]
        %v769 = vld [vmem:[%s309 + $0x3ec] sm:$0xf]
        %v770 = vld [vmem:[%s309 + $0x3f0] sm:$0xf]
        %v771 = vld [vmem:[%s309 + $0x3f4] sm:$0xf]
        %v772 = vld [vmem:[%s309 + $0x3f8] sm:$0xf]
        %v773 = vld [vmem:[%s309 + $0x3fc] sm:$0xf]
        %v774 = vld [vmem:[%s309 + $0x400] sm:$0xf]
        %v775 = vld [vmem:[%s309 + $0x404] sm:$0xf]
        %v776 = vld [vmem:[%s309 + $0x408] sm:$0xf]
        %v777 = vld [vmem:[%s309 + $0x40c] sm:$0xf]
        %v778 = vld [vmem:[%s309 + $0x410] sm:$0xf]
        %v779 = vld [vmem:[%s309 + $0x414] sm:$0xf]
        %v780 = vld [vmem:[%s309 + $0x418] sm:$0xf]
        %v781 = vld [vmem:[%s309 + $0x41c] sm:$0xf]
        %v782 = vld [vmem:[%s309 + $0x420] sm:$0xf]
        %v783 = vld [vmem:[%s309 + $0x424] sm:$0xf]
        %v784 = vld [vmem:[%s309 + $0x428] sm:$0xf]
        %v785 = vld [vmem:[%s309 + $0x42c] sm:$0xf]
        %v786 = vld [vmem:[%s309 + $0x430] sm:$0xf]
        %v787 = vld [vmem:[%s309 + $0x434] sm:$0xf]
        %v788 = vld [vmem:[%s309 + $0x438] sm:$0xf]
        %v789 = vld [vmem:[%s309 + $0x43c] sm:$0xf]
        %v790 = vld [vmem:[%s309 + $0x440] sm:$0xf]
        %v791 = vld [vmem:[%s309 + $0x444] sm:$0xf]
        %v792 = vld [vmem:[%s309 + $0x448] sm:$0xf]
        %v793 = vld [vmem:[%s309 + $0x44c] sm:$0xf]
        %v794 = vld [vmem:[%s309 + $0x450] sm:$0xf]
        %v795 = vld [vmem:[%s309 + $0x454] sm:$0xf]
        %v796 = vld [vmem:[%s309 + $0x458] sm:$0xf]
        %v797 = vld [vmem:[%s309 + $0x45c] sm:$0xf]
        %v798 = vld [vmem:[%s309 + $0x460] sm:$0xf]
        %v799 = vld [vmem:[%s309 + $0x464] sm:$0xf]
        %v800 = vld [vmem:[%s309 + $0x468] sm:$0xf]
        %v801 = vld [vmem:[%s309 + $0x46c] sm:$0xf]
        %v802 = vld [vmem:[%s309 + $0x470] sm:$0xf]
        %v803 = vld [vmem:[%s309 + $0x474] sm:$0xf]
        %v804 = vld [vmem:[%s309 + $0x478] sm:$0xf]
        %v805 = vld [vmem:[%s309 + $0x47c] sm:$0xf]
        %v806 = vld [vmem:[%s309 + $0x480] sm:$0xf]
        %v807 = vld [vmem:[%s309 + $0x484] sm:$0xf]
        %v808 = vld [vmem:[%s309 + $0x488] sm:$0xf]
        %v809 = vld [vmem:[%s309 + $0x48c] sm:$0xf]
        %v810 = vld [vmem:[%s309 + $0x490] sm:$0xf]
        %v811 = vld [vmem:[%s309 + $0x494] sm:$0xf]
        %v812 = vld [vmem:[%s309 + $0x498] sm:$0xf]
        %v813 = vld [vmem:[%s309 + $0x49c] sm:$0xf]
        %v814 = vld [vmem:[%s309 + $0x4a0] sm:$0xf]
        %v815 = vld [vmem:[%s309 + $0x4a4] sm:$0xf]
        %v816 = vld [vmem:[%s309 + $0x4a8] sm:$0xf]
        %v817 = vld [vmem:[%s309 + $0x4ac] sm:$0xf]
        %v818 = vld [vmem:[%s309 + $0x4b0] sm:$0xf]
        %v819 = vld [vmem:[%s309 + $0x4b4] sm:$0xf]
        %v820 = vld [vmem:[%s309 + $0x4b8] sm:$0xf]
        %v821 = vld [vmem:[%s309 + $0x4bc] sm:$0xf]
        %v822 = vld [vmem:[%s309 + $0x4c0] sm:$0xf]
        %v823 = vld [vmem:[%s309 + $0x4c4] sm:$0xf]
        %v824 = vld [vmem:[%s309 + $0x4c8] sm:$0xf]
        %v825 = vld [vmem:[%s309 + $0x4cc] sm:$0xf]
        %v826 = vld [vmem:[%s309 + $0x4d0] sm:$0xf]
        %v827 = vld [vmem:[%s309 + $0x4d4] sm:$0xf]
        %v828 = vld [vmem:[%s309 + $0x4d8] sm:$0xf]
        %v829 = vld [vmem:[%s309 + $0x4dc] sm:$0xf]
        %v830 = vld [vmem:[%s309 + $0x4e0] sm:$0xf]
        %v831 = vld [vmem:[%s309 + $0x4e4] sm:$0xf]
        %v832 = vld [vmem:[%s309 + $0x4e8] sm:$0xf]
        %v833 = vld [vmem:[%s309 + $0x4ec] sm:$0xf]
        %v834 = vld [vmem:[%s309 + $0x4f0] sm:$0xf]
        %v835 = vld [vmem:[%s309 + $0x4f4] sm:$0xf]
        %v836 = vld [vmem:[%s309 + $0x4f8] sm:$0xf]
        %v837 = vld [vmem:[%s309 + $0x4fc] sm:$0xf]
        %v838 = vld [vmem:[%s309 + $0x500] sm:$0xf]
        %v839 = vld [vmem:[%s309 + $0x504] sm:$0xf]
        %v840 = vld [vmem:[%s309 + $0x508] sm:$0xf]
        %v841 = vld [vmem:[%s309 + $0x50c] sm:$0xf]
        %v842 = vld [vmem:[%s309 + $0x510] sm:$0xf]
        %v843 = vld [vmem:[%s309 + $0x514] sm:$0xf]
        %v844 = vld [vmem:[%s309 + $0x518] sm:$0xf]
        %v845 = vld [vmem:[%s309 + $0x51c] sm:$0xf]
        %v846 = vld [vmem:[%s309 + $0x520] sm:$0xf]
        %v847 = vld [vmem:[%s309 + $0x524] sm:$0xf]
        %v848 = vld [vmem:[%s309 + $0x528] sm:$0xf]
        %v849 = vld [vmem:[%s309 + $0x52c] sm:$0xf]
        %v850 = vld [vmem:[%s309 + $0x530] sm:$0xf]
        %v851 = vld [vmem:[%s309 + $0x534] sm:$0xf]
        %v852 = vld [vmem:[%s309 + $0x538] sm:$0xf]
        %v853 = vld [vmem:[%s309 + $0x53c] sm:$0xf]
        %v854 = vld [vmem:[%s309 + $0x540] sm:$0xf]
        %v855 = vld [vmem:[%s309 + $0x544] sm:$0xf]
        %v856 = vld [vmem:[%s309 + $0x548] sm:$0xf]
        %v857 = vld [vmem:[%s309 + $0x54c] sm:$0xf]
        %v858 = vld [vmem:[%s309 + $0x550] sm:$0xf]
        %v859 = vld [vmem:[%s309 + $0x554] sm:$0xf]
        %v860 = vld [vmem:[%s309 + $0x558] sm:$0xf]
        %v861 = vld [vmem:[%s309 + $0x55c] sm:$0xf]
        %v862 = vld [vmem:[%s309 + $0x560] sm:$0xf]
        %v863 = vld [vmem:[%s309 + $0x564] sm:$0xf]
        %v864 = vld [vmem:[%s309 + $0x568] sm:$0xf]
        %v865 = vld [vmem:[%s309 + $0x56c] sm:$0xf]
        %v866 = vld [vmem:[%s309 + $0x570] sm:$0xf]
        %v867 = vld [vmem:[%s309 + $0x574] sm:$0xf]
        %v868 = vld [vmem:[%s309 + $0x578] sm:$0xf]
        %v869 = vld [vmem:[%s309 + $0x57c] sm:$0xf]
        %v870 = vld [vmem:[%s309 + $0x580] sm:$0xf]
        %v871 = vld [vmem:[%s309 + $0x584] sm:$0xf]
        %v872 = vld [vmem:[%s309 + $0x588] sm:$0xf]
        %v873 = vld [vmem:[%s309 + $0x58c] sm:$0xf]
        %v874 = vld [vmem:[%s309 + $0x590] sm:$0xf]
        %v875 = vld [vmem:[%s309 + $0x594] sm:$0xf]
        %v876 = vld [vmem:[%s309 + $0x598] sm:$0xf]
        %v877 = vld [vmem:[%s309 + $0x59c] sm:$0xf]
        %v878 = vld [vmem:[%s309 + $0x5a0] sm:$0xf]
        %v879 = vld [vmem:[%s309 + $0x5a4] sm:$0xf]
        %v880 = vld [vmem:[%s309 + $0x5a8] sm:$0xf]
        %v881 = vld [vmem:[%s309 + $0x5ac] sm:$0xf]
        %v882 = vld [vmem:[%s309 + $0x5b0] sm:$0xf]
        %v883 = vld [vmem:[%s309 + $0x5b4] sm:$0xf]
        %v884 = vld [vmem:[%s309 + $0x5b8] sm:$0xf]
        %v885 = vld [vmem:[%s309 + $0x5bc] sm:$0xf]
        %v886 = vld [vmem:[%s309 + $0x5c0] sm:$0xf]
        %v887 = vld [vmem:[%s309 + $0x5c4] sm:$0xf]
        %v888 = vld [vmem:[%s309 + $0x5c8] sm:$0xf]
        %v889 = vld [vmem:[%s309 + $0x5cc] sm:$0xf]
        %v890 = vld [vmem:[%s309 + $0x5d0] sm:$0xf]
        %v891 = vld [vmem:[%s309 + $0x5d4] sm:$0xf]
        %v892 = vld [vmem:[%s309 + $0x5d8] sm:$0xf]
        %v893 = vld [vmem:[%s309 + $0x5dc] sm:$0xf]
        %v894 = vld [vmem:[%s309 + $0x5e0] sm:$0xf]
        %v895 = vld [vmem:[%s309 + $0x5e4] sm:$0xf]
        %v896 = vld [vmem:[%s309 + $0x5e8] sm:$0xf]
        %v897 = vld [vmem:[%s309 + $0x5ec] sm:$0xf]
        %v898 = vld [vmem:[%s309 + $0x5f0] sm:$0xf]
        %v899 = vld [vmem:[%s309 + $0x5f4] sm:$0xf]
        %v900 = vld [vmem:[%s309 + $0x5f8] sm:$0xf]
        %v901 = vld [vmem:[%s309 + $0x5fc] sm:$0xf]
        %v902 = vld [vmem:[%s309 + $0x600] sm:$0xf]
        %v903 = vld [vmem:[%s309 + $0x604] sm:$0xf]
        %v904 = vld [vmem:[%s309 + $0x608] sm:$0xf]
        %v905 = vld [vmem:[%s309 + $0x60c] sm:$0xf]
        %v906 = vld [vmem:[%s309 + $0x610] sm:$0xf]
        %v907 = vld [vmem:[%s309 + $0x614] sm:$0xf]
        %v908 = vld [vmem:[%s309 + $0x618] sm:$0xf]
        %v909 = vld [vmem:[%s309 + $0x61c] sm:$0xf]
        %v910 = vld [vmem:[%s309 + $0x620] sm:$0xf]
        %v911 = vld [vmem:[%s309 + $0x624] sm:$0xf]
        %v912 = vld [vmem:[%s309 + $0x628] sm:$0xf]
        %v913 = vld [vmem:[%s309 + $0x62c] sm:$0xf]
        %v914 = vld [vmem:[%s309 + $0x630] sm:$0xf]
        %v915 = vld [vmem:[%s309 + $0x634] sm:$0xf]
        %v916 = vld [vmem:[%s309 + $0x638] sm:$0xf]
        %v917 = vld [vmem:[%s309 + $0x63c] sm:$0xf]
        %v918 = vld [vmem:[%s309 + $0x640] sm:$0xf]
        %v919 = vld [vmem:[%s309 + $0x644] sm:$0xf]
        %v920 = vld [vmem:[%s309 + $0x648] sm:$0xf]
        %v921 = vld [vmem:[%s309 + $0x64c] sm:$0xf]
        %v922 = vld [vmem:[%s309 + $0x650] sm:$0xf]
        %v923 = vld [vmem:[%s309 + $0x654] sm:$0xf]
        %v924 = vld [vmem:[%s309 + $0x658] sm:$0xf]
        %v925 = vld [vmem:[%s309 + $0x65c] sm:$0xf]
        %v926 = vld [vmem:[%s309 + $0x660] sm:$0xf]
        %v927 = vld [vmem:[%s309 + $0x664] sm:$0xf]
        %v928 = vld [vmem:[%s309 + $0x668] sm:$0xf]
        %v929 = vld [vmem:[%s309 + $0x66c] sm:$0xf]
        %v930 = vld [vmem:[%s309 + $0x670] sm:$0xf]
        %v931 = vld [vmem:[%s309 + $0x674] sm:$0xf]
        %v932 = vld [vmem:[%s309 + $0x678] sm:$0xf]
        %v933 = vld [vmem:[%s309 + $0x67c] sm:$0xf]
        %v934 = vld [vmem:[%s309 + $0x680] sm:$0xf]
        %v935 = vld [vmem:[%s309 + $0x684] sm:$0xf]
        %v936 = vld [vmem:[%s309 + $0x688] sm:$0xf]
        %v937 = vld [vmem:[%s309 + $0x68c] sm:$0xf]
        %v938 = vld [vmem:[%s309 + $0x690] sm:$0xf]
        %v939 = vld [vmem:[%s309 + $0x694] sm:$0xf]
        %v940 = vld [vmem:[%s309 + $0x698] sm:$0xf]
        %v941 = vld [vmem:[%s309 + $0x69c] sm:$0xf]
        %v942 = vld [vmem:[%s309 + $0x6a0] sm:$0xf]
        %v943 = vld [vmem:[%s309 + $0x6a4] sm:$0xf]
        %v944 = vld [vmem:[%s309 + $0x6a8] sm:$0xf]
        %v945 = vld [vmem:[%s309 + $0x6ac] sm:$0xf]
        %v946 = vld [vmem:[%s309 + $0x6b0] sm:$0xf]
        %v947 = vld [vmem:[%s309 + $0x6b4] sm:$0xf]
        %v948 = vld [vmem:[%s309 + $0x6b8] sm:$0xf]
        %v949 = vld [vmem:[%s309 + $0x6bc] sm:$0xf]
        %v1382 = vunpack.c.l.b16 %v518
        %v1383 = vunpack.c.l.b16 %v519
        %v1384 = vunpack.c.l.b16 %v520
        %v1385 = vunpack.c.l.b16 %v521
        %v1386 = vunpack.c.l.b16 %v522
        %v1387 = vunpack.c.l.b16 %v523
        %v1388 = vunpack.c.l.b16 %v524
        %v1389 = vunpack.c.l.b16 %v525
        %v1390 = vunpack.c.l.b16 %v526
        %v1391 = vunpack.c.l.b16 %v527
        %v1392 = vunpack.c.l.b16 %v528
        %v1393 = vunpack.c.l.b16 %v529
        %v1394 = vunpack.c.l.b16 %v530
        %v1395 = vunpack.c.l.b16 %v531
        %v1396 = vunpack.c.l.b16 %v532
        %v1397 = vunpack.c.l.b16 %v533
        %v1398 = vunpack.c.l.b16 %v534
        %v1399 = vunpack.c.l.b16 %v535
        %v1400 = vunpack.c.l.b16 %v536
        %v1401 = vunpack.c.l.b16 %v537
        %v1402 = vunpack.c.l.b16 %v538
        %v1403 = vunpack.c.l.b16 %v539
        %v1404 = vunpack.c.l.b16 %v540
        %v1405 = vunpack.c.l.b16 %v541
        %v1406 = vunpack.c.l.b16 %v542
        %v1407 = vunpack.c.l.b16 %v543
        %v1408 = vunpack.c.l.b16 %v544
        %v1409 = vunpack.c.l.b16 %v545
        %v1410 = vunpack.c.l.b16 %v546
        %v1411 = vunpack.c.l.b16 %v547
        %v1412 = vunpack.c.l.b16 %v548
        %v1413 = vunpack.c.l.b16 %v549
        %v1414 = vunpack.c.l.b16 %v550
        %v1415 = vunpack.c.l.b16 %v551
        %v1416 = vunpack.c.l.b16 %v552
        %v1417 = vunpack.c.l.b16 %v553
        %v1418 = vunpack.c.l.b16 %v554
        %v1419 = vunpack.c.l.b16 %v555
        %v1420 = vunpack.c.l.b16 %v556
        %v1421 = vunpack.c.l.b16 %v557
        %v1422 = vunpack.c.l.b16 %v558
        %v1423 = vunpack.c.l.b16 %v559
        %v1424 = vunpack.c.l.b16 %v560
        %v1425 = vunpack.c.l.b16 %v561
        %v1426 = vunpack.c.l.b16 %v562
        %v1427 = vunpack.c.l.b16 %v563
        %v1428 = vunpack.c.l.b16 %v564
        %v1429 = vunpack.c.l.b16 %v565
        %v1430 = vunpack.c.l.b16 %v566
        %v1431 = vunpack.c.l.b16 %v567
        %v1432 = vunpack.c.l.b16 %v568
        %v1433 = vunpack.c.l.b16 %v569
        %v1434 = vunpack.c.l.b16 %v570
        %v1435 = vunpack.c.l.b16 %v571
        %v1436 = vunpack.c.l.b16 %v572
        %v1437 = vunpack.c.l.b16 %v573
        %v1438 = vunpack.c.l.b16 %v574
        %v1439 = vunpack.c.l.b16 %v575
        %v1440 = vunpack.c.l.b16 %v576
        %v1441 = vunpack.c.l.b16 %v577
        %v1442 = vunpack.c.l.b16 %v578
        %v1443 = vunpack.c.l.b16 %v579
        %v1444 = vunpack.c.l.b16 %v580
        %v1445 = vunpack.c.l.b16 %v581
        %v1446 = vunpack.c.l.b16 %v582
        %v1447 = vunpack.c.l.b16 %v583
        %v1448 = vunpack.c.l.b16 %v584
        %v1449 = vunpack.c.l.b16 %v585
        %v1450 = vunpack.c.l.b16 %v586
        %v1451 = vunpack.c.l.b16 %v587
        %v1452 = vunpack.c.l.b16 %v588
        %v1453 = vunpack.c.l.b16 %v589
        %v1454 = vunpack.c.l.b16 %v590
        %v1455 = vunpack.c.l.b16 %v591
        %v1456 = vunpack.c.l.b16 %v592
        %v1457 = vunpack.c.l.b16 %v593
        %v1458 = vunpack.c.l.b16 %v594
        %v1459 = vunpack.c.l.b16 %v595
        %v1460 = vunpack.c.l.b16 %v596
        %v1461 = vunpack.c.l.b16 %v597
        %v1462 = vunpack.c.l.b16 %v598
        %v1463 = vunpack.c.l.b16 %v599
        %v1464 = vunpack.c.l.b16 %v600
        %v1465 = vunpack.c.l.b16 %v601
        %v1466 = vunpack.c.l.b16 %v602
        %v1467 = vunpack.c.l.b16 %v603
        %v1468 = vunpack.c.l.b16 %v604
        %v1469 = vunpack.c.l.b16 %v605
        %v1470 = vunpack.c.l.b16 %v606
        %v1471 = vunpack.c.l.b16 %v607
        %v1472 = vunpack.c.l.b16 %v608
        %v1473 = vunpack.c.l.b16 %v609
        %v1474 = vunpack.c.l.b16 %v610
        %v1475 = vunpack.c.l.b16 %v611
        %v1476 = vunpack.c.l.b16 %v612
        %v1477 = vunpack.c.l.b16 %v613
        %v1478 = vunpack.c.l.b16 %v614
        %v1479 = vunpack.c.l.b16 %v615
        %v1480 = vunpack.c.l.b16 %v616
        %v1481 = vunpack.c.l.b16 %v617
        %v1482 = vunpack.c.l.b16 %v618
        %v1483 = vunpack.c.l.b16 %v619
        %v1484 = vunpack.c.l.b16 %v620
        %v1485 = vunpack.c.l.b16 %v621
        %v1486 = vunpack.c.l.b16 %v622
        %v1487 = vunpack.c.l.b16 %v623
        %v1488 = vunpack.c.l.b16 %v624
        %v1489 = vunpack.c.l.b16 %v625
        %v1490 = vunpack.c.l.b16 %v626
        %v1491 = vunpack.c.l.b16 %v627
        %v1492 = vunpack.c.l.b16 %v628
        %v1493 = vunpack.c.l.b16 %v629
        %v1494 = vunpack.c.l.b16 %v630
        %v1495 = vunpack.c.l.b16 %v631
        %v1496 = vunpack.c.l.b16 %v632
        %v1497 = vunpack.c.l.b16 %v633
        %v1498 = vunpack.c.l.b16 %v634
        %v1499 = vunpack.c.l.b16 %v635
        %v1500 = vunpack.c.l.b16 %v636
        %v1501 = vunpack.c.l.b16 %v637
        %v1502 = vunpack.c.l.b16 %v638
        %v1503 = vunpack.c.l.b16 %v639
        %v1504 = vunpack.c.l.b16 %v640
        %v1505 = vunpack.c.l.b16 %v641
        %v1506 = vunpack.c.l.b16 %v642
        %v1507 = vunpack.c.l.b16 %v643
        %v1508 = vunpack.c.l.b16 %v644
        %v1509 = vunpack.c.l.b16 %v645
        %v1510 = vunpack.c.l.b16 %v646
        %v1511 = vunpack.c.l.b16 %v647
        %v1512 = vunpack.c.l.b16 %v648
        %v1513 = vunpack.c.l.b16 %v649
        %v1514 = vunpack.c.l.b16 %v650
        %v1515 = vunpack.c.l.b16 %v651
        %v1516 = vunpack.c.l.b16 %v652
        %v1517 = vunpack.c.l.b16 %v653
        %v1518 = vunpack.c.l.b16 %v654
        %v1519 = vunpack.c.l.b16 %v655
        %v1520 = vunpack.c.l.b16 %v656
        %v1521 = vunpack.c.l.b16 %v657
        %v1522 = vunpack.c.l.b16 %v658
        %v1523 = vunpack.c.l.b16 %v659
        %v1524 = vunpack.c.l.b16 %v660
        %v1525 = vunpack.c.l.b16 %v661
        %v1526 = vunpack.c.l.b16 %v662
        %v1527 = vunpack.c.l.b16 %v663
        %v1528 = vunpack.c.l.b16 %v664
        %v1529 = vunpack.c.l.b16 %v665
        %v1530 = vunpack.c.l.b16 %v666
        %v1531 = vunpack.c.l.b16 %v667
        %v1532 = vunpack.c.l.b16 %v668
        %v1533 = vunpack.c.l.b16 %v669
        %v1534 = vunpack.c.l.b16 %v670
        %v1535 = vunpack.c.l.b16 %v671
        %v1536 = vunpack.c.l.b16 %v672
        %v1537 = vunpack.c.l.b16 %v673
        %v1538 = vunpack.c.l.b16 %v674
        %v1539 = vunpack.c.l.b16 %v675
        %v1540 = vunpack.c.l.b16 %v676
        %v1541 = vunpack.c.l.b16 %v677
        %v1542 = vunpack.c.l.b16 %v678
        %v1543 = vunpack.c.l.b16 %v679
        %v1544 = vunpack.c.l.b16 %v680
        %v1545 = vunpack.c.l.b16 %v681
        %v1546 = vunpack.c.l.b16 %v682
        %v1547 = vunpack.c.l.b16 %v683
        %v1548 = vunpack.c.l.b16 %v684
        %v1549 = vunpack.c.l.b16 %v685
        %v1550 = vunpack.c.l.b16 %v686
        %v1551 = vunpack.c.l.b16 %v687
        %v1552 = vunpack.c.l.b16 %v688
        %v1553 = vunpack.c.l.b16 %v689
        %v1554 = vunpack.c.l.b16 %v690
        %v1555 = vunpack.c.l.b16 %v691
        %v1556 = vunpack.c.l.b16 %v692
        %v1557 = vunpack.c.l.b16 %v693
        %v1558 = vunpack.c.l.b16 %v694
        %v1559 = vunpack.c.l.b16 %v695
        %v1560 = vunpack.c.l.b16 %v696
        %v1561 = vunpack.c.l.b16 %v697
        %v1562 = vunpack.c.l.b16 %v698
        %v1563 = vunpack.c.l.b16 %v699
        %v1564 = vunpack.c.l.b16 %v700
        %v1565 = vunpack.c.l.b16 %v701
        %v1566 = vunpack.c.l.b16 %v702
        %v1567 = vunpack.c.l.b16 %v703
        %v1568 = vunpack.c.l.b16 %v704
        %v1569 = vunpack.c.l.b16 %v705
        %v1570 = vunpack.c.l.b16 %v706
        %v1571 = vunpack.c.l.b16 %v707
        %v1572 = vunpack.c.l.b16 %v708
        %v1573 = vunpack.c.l.b16 %v709
        %v1574 = vunpack.c.l.b16 %v710
        %v1575 = vunpack.c.l.b16 %v711
        %v1576 = vunpack.c.l.b16 %v712
        %v1577 = vunpack.c.l.b16 %v713
        %v1578 = vunpack.c.l.b16 %v714
        %v1579 = vunpack.c.l.b16 %v715
        %v1580 = vunpack.c.l.b16 %v716
        %v1581 = vunpack.c.l.b16 %v717
        %v1582 = vunpack.c.l.b16 %v718
        %v1583 = vunpack.c.l.b16 %v719
        %v1584 = vunpack.c.l.b16 %v720
        %v1585 = vunpack.c.l.b16 %v721
        %v1586 = vunpack.c.l.b16 %v722
        %v1587 = vunpack.c.l.b16 %v723
        %v1588 = vunpack.c.l.b16 %v724
        %v1589 = vunpack.c.l.b16 %v725
        %v1590 = vunpack.c.l.b16 %v726
        %v1591 = vunpack.c.l.b16 %v727
        %v1592 = vunpack.c.l.b16 %v728
        %v1593 = vunpack.c.l.b16 %v729
        %v1594 = vunpack.c.l.b16 %v730
        %v1595 = vunpack.c.l.b16 %v731
        %v1596 = vunpack.c.l.b16 %v732
        %v1597 = vunpack.c.l.b16 %v733
        %v1598 = vunpack.c.l.b16 %v734
        %v1599 = vunpack.c.l.b16 %v735
        %v1600 = vunpack.c.l.b16 %v736
        %v1601 = vunpack.c.l.b16 %v737
        %v1602 = vunpack.c.l.b16 %v738
        %v1603 = vunpack.c.l.b16 %v739
        %v1604 = vunpack.c.l.b16 %v740
        %v1605 = vunpack.c.l.b16 %v741
        %v1606 = vunpack.c.l.b16 %v742
        %v1607 = vunpack.c.l.b16 %v743
        %v1608 = vunpack.c.l.b16 %v744
        %v1609 = vunpack.c.l.b16 %v745
        %v1610 = vunpack.c.l.b16 %v746
        %v1611 = vunpack.c.l.b16 %v747
        %v1612 = vunpack.c.l.b16 %v748
        %v1613 = vunpack.c.l.b16 %v749
        %v1614 = vunpack.c.l.b16 %v750
        %v1615 = vunpack.c.l.b16 %v751
        %v1616 = vunpack.c.l.b16 %v752
        %v1617 = vunpack.c.l.b16 %v753
        %v1618 = vunpack.c.l.b16 %v754
        %v1619 = vunpack.c.l.b16 %v755
        %v1620 = vunpack.c.l.b16 %v756
        %v1621 = vunpack.c.l.b16 %v757
        %v1622 = vunpack.c.l.b16 %v758
        %v1623 = vunpack.c.l.b16 %v759
        %v1624 = vunpack.c.l.b16 %v760
        %v1625 = vunpack.c.l.b16 %v761
        %v1626 = vunpack.c.l.b16 %v762
        %v1627 = vunpack.c.l.b16 %v763
        %v1628 = vunpack.c.l.b16 %v764
        %v1629 = vunpack.c.l.b16 %v765
        %v1630 = vunpack.c.l.b16 %v766
        %v1631 = vunpack.c.l.b16 %v767
        %v1632 = vunpack.c.l.b16 %v768
        %v1633 = vunpack.c.l.b16 %v769
        %v1634 = vunpack.c.l.b16 %v770
        %v1635 = vunpack.c.l.b16 %v771
        %v1636 = vunpack.c.l.b16 %v772
        %v1637 = vunpack.c.l.b16 %v773
        %v1638 = vunpack.c.l.b16 %v774
        %v1639 = vunpack.c.l.b16 %v775
        %v1640 = vunpack.c.l.b16 %v776
        %v1641 = vunpack.c.l.b16 %v777
        %v1642 = vunpack.c.l.b16 %v778
        %v1643 = vunpack.c.l.b16 %v779
        %v1644 = vunpack.c.l.b16 %v780
        %v1645 = vunpack.c.l.b16 %v781
        %v1646 = vunpack.c.l.b16 %v782
        %v1647 = vunpack.c.l.b16 %v783
        %v1648 = vunpack.c.l.b16 %v784
        %v1649 = vunpack.c.l.b16 %v785
        %v1650 = vunpack.c.l.b16 %v786
        %v1651 = vunpack.c.l.b16 %v787
        %v1652 = vunpack.c.l.b16 %v788
        %v1653 = vunpack.c.l.b16 %v789
        %v1654 = vunpack.c.l.b16 %v790
        %v1655 = vunpack.c.l.b16 %v791
        %v1656 = vunpack.c.l.b16 %v792
        %v1657 = vunpack.c.l.b16 %v793
        %v1658 = vunpack.c.l.b16 %v794
        %v1659 = vunpack.c.l.b16 %v795
        %v1660 = vunpack.c.l.b16 %v796
        %v1661 = vunpack.c.l.b16 %v797
        %v1662 = vunpack.c.l.b16 %v798
        %v1663 = vunpack.c.l.b16 %v799
        %v1664 = vunpack.c.l.b16 %v800
        %v1665 = vunpack.c.l.b16 %v801
        %v1666 = vunpack.c.l.b16 %v802
        %v1667 = vunpack.c.l.b16 %v803
        %v1668 = vunpack.c.l.b16 %v804
        %v1669 = vunpack.c.l.b16 %v805
        %v1670 = vunpack.c.l.b16 %v806
        %v1671 = vunpack.c.l.b16 %v807
        %v1672 = vunpack.c.l.b16 %v808
        %v1673 = vunpack.c.l.b16 %v809
        %v1674 = vunpack.c.l.b16 %v810
        %v1675 = vunpack.c.l.b16 %v811
        %v1676 = vunpack.c.l.b16 %v812
        %v1677 = vunpack.c.l.b16 %v813
        %v1678 = vunpack.c.l.b16 %v814
        %v1679 = vunpack.c.l.b16 %v815
        %v1680 = vunpack.c.l.b16 %v816
        %v1681 = vunpack.c.l.b16 %v817
        %v1682 = vunpack.c.l.b16 %v818
        %v1683 = vunpack.c.l.b16 %v819
        %v1684 = vunpack.c.l.b16 %v820
        %v1685 = vunpack.c.l.b16 %v821
        %v1686 = vunpack.c.l.b16 %v822
        %v1687 = vunpack.c.l.b16 %v823
        %v1688 = vunpack.c.l.b16 %v824
        %v1689 = vunpack.c.l.b16 %v825
        %v1690 = vunpack.c.l.b16 %v826
        %v1691 = vunpack.c.l.b16 %v827
        %v1692 = vunpack.c.l.b16 %v828
        %v1693 = vunpack.c.l.b16 %v829
        %v1694 = vunpack.c.l.b16 %v830
        %v1695 = vunpack.c.l.b16 %v831
        %v1696 = vunpack.c.l.b16 %v832
        %v1697 = vunpack.c.l.b16 %v833
        %v1698 = vunpack.c.l.b16 %v834
        %v1699 = vunpack.c.l.b16 %v835
        %v1700 = vunpack.c.l.b16 %v836
        %v1701 = vunpack.c.l.b16 %v837
        %v1702 = vunpack.c.l.b16 %v838
        %v1703 = vunpack.c.l.b16 %v839
        %v1704 = vunpack.c.l.b16 %v840
        %v1705 = vunpack.c.l.b16 %v841
        %v1706 = vunpack.c.l.b16 %v842
        %v1707 = vunpack.c.l.b16 %v843
        %v1708 = vunpack.c.l.b16 %v844
        %v1709 = vunpack.c.l.b16 %v845
        %v1710 = vunpack.c.l.b16 %v846
        %v1711 = vunpack.c.l.b16 %v847
        %v1712 = vunpack.c.l.b16 %v848
        %v1713 = vunpack.c.l.b16 %v849
        %v1714 = vunpack.c.l.b16 %v850
        %v1715 = vunpack.c.l.b16 %v851
        %v1716 = vunpack.c.l.b16 %v852
        %v1717 = vunpack.c.l.b16 %v853
        %v1718 = vunpack.c.l.b16 %v854
        %v1719 = vunpack.c.l.b16 %v855
        %v1720 = vunpack.c.l.b16 %v856
        %v1721 = vunpack.c.l.b16 %v857
        %v1722 = vunpack.c.l.b16 %v858
        %v1723 = vunpack.c.l.b16 %v859
        %v1724 = vunpack.c.l.b16 %v860
        %v1725 = vunpack.c.l.b16 %v861
        %v1726 = vunpack.c.l.b16 %v862
        %v1727 = vunpack.c.l.b16 %v863
        %v1728 = vunpack.c.l.b16 %v864
        %v1729 = vunpack.c.l.b16 %v865
        %v1730 = vunpack.c.l.b16 %v866
        %v1731 = vunpack.c.l.b16 %v867
        %v1732 = vunpack.c.l.b16 %v868
        %v1733 = vunpack.c.l.b16 %v869
        %v1734 = vunpack.c.l.b16 %v870
        %v1735 = vunpack.c.l.b16 %v871
        %v1736 = vunpack.c.l.b16 %v872
        %v1737 = vunpack.c.l.b16 %v873
        %v1738 = vunpack.c.l.b16 %v874
        %v1739 = vunpack.c.l.b16 %v875
        %v1740 = vunpack.c.l.b16 %v876
        %v1741 = vunpack.c.l.b16 %v877
        %v1742 = vunpack.c.l.b16 %v878
        %v1743 = vunpack.c.l.b16 %v879
        %v1744 = vunpack.c.l.b16 %v880
        %v1745 = vunpack.c.l.b16 %v881
        %v1746 = vunpack.c.l.b16 %v882
        %v1747 = vunpack.c.l.b16 %v883
        %v1748 = vunpack.c.l.b16 %v884
        %v1749 = vunpack.c.l.b16 %v885
        %v1750 = vunpack.c.l.b16 %v886
        %v1751 = vunpack.c.l.b16 %v887
        %v1752 = vunpack.c.l.b16 %v888
        %v1753 = vunpack.c.l.b16 %v889
        %v1754 = vunpack.c.l.b16 %v890
        %v1755 = vunpack.c.l.b16 %v891
        %v1756 = vunpack.c.l.b16 %v892
        %v1757 = vunpack.c.l.b16 %v893
        %v1758 = vunpack.c.l.b16 %v894
        %v1759 = vunpack.c.l.b16 %v895
        %v1760 = vunpack.c.l.b16 %v896
        %v1761 = vunpack.c.l.b16 %v897
        %v1762 = vunpack.c.l.b16 %v898
        %v1763 = vunpack.c.l.b16 %v899
        %v1764 = vunpack.c.l.b16 %v900
        %v1765 = vunpack.c.l.b16 %v901
        %v1766 = vunpack.c.l.b16 %v902
        %v1767 = vunpack.c.l.b16 %v903
        %v1768 = vunpack.c.l.b16 %v904
        %v1769 = vunpack.c.l.b16 %v905
        %v1770 = vunpack.c.l.b16 %v906
        %v1771 = vunpack.c.l.b16 %v907
        %v1772 = vunpack.c.l.b16 %v908
        %v1773 = vunpack.c.l.b16 %v909
        %v1774 = vunpack.c.l.b16 %v910
        %v1775 = vunpack.c.l.b16 %v911
        %v1776 = vunpack.c.l.b16 %v912
        %v1777 = vunpack.c.l.b16 %v913
        %v1778 = vunpack.c.l.b16 %v914
        %v1779 = vunpack.c.l.b16 %v915
        %v1780 = vunpack.c.l.b16 %v916
        %v1781 = vunpack.c.l.b16 %v917
        %v1782 = vunpack.c.l.b16 %v918
        %v1783 = vunpack.c.l.b16 %v919
        %v1784 = vunpack.c.l.b16 %v920
        %v1785 = vunpack.c.l.b16 %v921
        %v1786 = vunpack.c.l.b16 %v922
        %v1787 = vunpack.c.l.b16 %v923
        %v1788 = vunpack.c.l.b16 %v924
        %v1789 = vunpack.c.l.b16 %v925
        %v1790 = vunpack.c.l.b16 %v926
        %v1791 = vunpack.c.l.b16 %v927
        %v1792 = vunpack.c.l.b16 %v928
        %v1793 = vunpack.c.l.b16 %v929
        %v1794 = vunpack.c.l.b16 %v930
        %v1795 = vunpack.c.l.b16 %v931
        %v1796 = vunpack.c.l.b16 %v932
        %v1797 = vunpack.c.l.b16 %v933
        %v1798 = vunpack.c.l.b16 %v934
        %v1799 = vunpack.c.l.b16 %v935
        %v1800 = vunpack.c.l.b16 %v936
        %v1801 = vunpack.c.l.b16 %v937
        %v1802 = vunpack.c.l.b16 %v938
        %v1803 = vunpack.c.l.b16 %v939
        %v1804 = vunpack.c.l.b16 %v940
        %v1805 = vunpack.c.l.b16 %v941
        %v1806 = vunpack.c.l.b16 %v942
        %v1807 = vunpack.c.l.b16 %v943
        %v1808 = vunpack.c.l.b16 %v944
        %v1809 = vunpack.c.l.b16 %v945
        %v1810 = vunpack.c.l.b16 %v946
        %v1811 = vunpack.c.l.b16 %v947
        %v1812 = vunpack.c.l.b16 %v948
        %v1813 = vunpack.c.l.b16 %v949
        %v1814 = vpack.c.b16 %v1383, %v1382
        %v1815 = vpack.c.b16 %v1385, %v1384
        %v1816 = vpack.c.b16 %v1387, %v1386
        %v1817 = vpack.c.b16 %v1389, %v1388
        %v1818 = vpack.c.b16 %v1391, %v1390
        %v1819 = vpack.c.b16 %v1393, %v1392
        %v1820 = vpack.c.b16 %v1395, %v1394
        %v1821 = vpack.c.b16 %v1397, %v1396
        %v1822 = vpack.c.b16 %v1399, %v1398
        %v1823 = vpack.c.b16 %v1401, %v1400
        %v1824 = vpack.c.b16 %v1403, %v1402
        %v1825 = vpack.c.b16 %v1405, %v1404
        %v1826 = vpack.c.b16 %v1407, %v1406
        %v1827 = vpack.c.b16 %v1409, %v1408
        %v1828 = vpack.c.b16 %v1411, %v1410
        %v1829 = vpack.c.b16 %v1413, %v1412
        %v1830 = vpack.c.b16 %v1415, %v1414
        %v1831 = vpack.c.b16 %v1417, %v1416
        %v1832 = vpack.c.b16 %v1419, %v1418
        %v1833 = vpack.c.b16 %v1421, %v1420
        %v1834 = vpack.c.b16 %v1423, %v1422
        %v1835 = vpack.c.b16 %v1425, %v1424
        %v1836 = vpack.c.b16 %v1427, %v1426
        %v1837 = vpack.c.b16 %v1429, %v1428
        %v1838 = vpack.c.b16 %v1431, %v1430
        %v1839 = vpack.c.b16 %v1433, %v1432
        %v1840 = vpack.c.b16 %v1435, %v1434
        %v1841 = vpack.c.b16 %v1437, %v1436
        %v1842 = vpack.c.b16 %v1439, %v1438
        %v1843 = vpack.c.b16 %v1441, %v1440
        %v1844 = vpack.c.b16 %v1443, %v1442
        %v1845 = vpack.c.b16 %v1445, %v1444
        %v1846 = vpack.c.b16 %v1447, %v1446
        %v1847 = vpack.c.b16 %v1449, %v1448
        %v1848 = vpack.c.b16 %v1451, %v1450
        %v1849 = vpack.c.b16 %v1453, %v1452
        %v1850 = vpack.c.b16 %v1455, %v1454
        %v1851 = vpack.c.b16 %v1457, %v1456
        %v1852 = vpack.c.b16 %v1459, %v1458
        %v1853 = vpack.c.b16 %v1461, %v1460
        %v1854 = vpack.c.b16 %v1463, %v1462
        %v1855 = vpack.c.b16 %v1465, %v1464
        %v1856 = vpack.c.b16 %v1467, %v1466
        %v1857 = vpack.c.b16 %v1469, %v1468
        %v1858 = vpack.c.b16 %v1471, %v1470
        %v1859 = vpack.c.b16 %v1473, %v1472
        %v1860 = vpack.c.b16 %v1475, %v1474
        %v1861 = vpack.c.b16 %v1477, %v1476
        %v1862 = vpack.c.b16 %v1479, %v1478
        %v1863 = vpack.c.b16 %v1481, %v1480
        %v1864 = vpack.c.b16 %v1483, %v1482
        %v1865 = vpack.c.b16 %v1485, %v1484
        %v1866 = vpack.c.b16 %v1487, %v1486
        %v1867 = vpack.c.b16 %v1489, %v1488
        %v1868 = vpack.c.b16 %v1491, %v1490
        %v1869 = vpack.c.b16 %v1493, %v1492
        %v1870 = vpack.c.b16 %v1495, %v1494
        %v1871 = vpack.c.b16 %v1497, %v1496
        %v1872 = vpack.c.b16 %v1499, %v1498
        %v1873 = vpack.c.b16 %v1501, %v1500
        %v1874 = vpack.c.b16 %v1503, %v1502
        %v1875 = vpack.c.b16 %v1505, %v1504
        %v1876 = vpack.c.b16 %v1507, %v1506
        %v1877 = vpack.c.b16 %v1509, %v1508
        %v1878 = vpack.c.b16 %v1511, %v1510
        %v1879 = vpack.c.b16 %v1513, %v1512
        %v1880 = vpack.c.b16 %v1515, %v1514
        %v1881 = vpack.c.b16 %v1517, %v1516
        %v1882 = vpack.c.b16 %v1519, %v1518
        %v1883 = vpack.c.b16 %v1521, %v1520
        %v1884 = vpack.c.b16 %v1523, %v1522
        %v1885 = vpack.c.b16 %v1525, %v1524
        %v1886 = vpack.c.b16 %v1527, %v1526
        %v1887 = vpack.c.b16 %v1529, %v1528
        %v1888 = vpack.c.b16 %v1531, %v1530
        %v1889 = vpack.c.b16 %v1533, %v1532
        %v1890 = vpack.c.b16 %v1535, %v1534
        %v1891 = vpack.c.b16 %v1537, %v1536
        %v1892 = vpack.c.b16 %v1539, %v1538
        %v1893 = vpack.c.b16 %v1541, %v1540
        %v1894 = vpack.c.b16 %v1543, %v1542
        %v1895 = vpack.c.b16 %v1545, %v1544
        %v1896 = vpack.c.b16 %v1547, %v1546
        %v1897 = vpack.c.b16 %v1549, %v1548
        %v1898 = vpack.c.b16 %v1551, %v1550
        %v1899 = vpack.c.b16 %v1553, %v1552
        %v1900 = vpack.c.b16 %v1555, %v1554
        %v1901 = vpack.c.b16 %v1557, %v1556
        %v1902 = vpack.c.b16 %v1559, %v1558
        %v1903 = vpack.c.b16 %v1561, %v1560
        %v1904 = vpack.c.b16 %v1563, %v1562
        %v1905 = vpack.c.b16 %v1565, %v1564
        %v1906 = vpack.c.b16 %v1567, %v1566
        %v1907 = vpack.c.b16 %v1569, %v1568
        %v1908 = vpack.c.b16 %v1571, %v1570
        %v1909 = vpack.c.b16 %v1573, %v1572
        %v1910 = vpack.c.b16 %v1575, %v1574
        %v1911 = vpack.c.b16 %v1577, %v1576
        %v1912 = vpack.c.b16 %v1579, %v1578
        %v1913 = vpack.c.b16 %v1581, %v1580
        %v1914 = vpack.c.b16 %v1583, %v1582
        %v1915 = vpack.c.b16 %v1585, %v1584
        %v1916 = vpack.c.b16 %v1587, %v1586
        %v1917 = vpack.c.b16 %v1589, %v1588
        %v1918 = vpack.c.b16 %v1591, %v1590
        %v1919 = vpack.c.b16 %v1593, %v1592
        %v1920 = vpack.c.b16 %v1595, %v1594
        %v1921 = vpack.c.b16 %v1597, %v1596
        %v1922 = vpack.c.b16 %v1599, %v1598
        %v1923 = vpack.c.b16 %v1601, %v1600
        %v1924 = vpack.c.b16 %v1603, %v1602
        %v1925 = vpack.c.b16 %v1605, %v1604
        %v1926 = vpack.c.b16 %v1607, %v1606
        %v1927 = vpack.c.b16 %v1609, %v1608
        %v1928 = vpack.c.b16 %v1611, %v1610
        %v1929 = vpack.c.b16 %v1613, %v1612
        %v1930 = vpack.c.b16 %v1615, %v1614
        %v1931 = vpack.c.b16 %v1617, %v1616
        %v1932 = vpack.c.b16 %v1619, %v1618
        %v1933 = vpack.c.b16 %v1621, %v1620
        %v1934 = vpack.c.b16 %v1623, %v1622
        %v1935 = vpack.c.b16 %v1625, %v1624
        %v1936 = vpack.c.b16 %v1627, %v1626
        %v1937 = vpack.c.b16 %v1629, %v1628
        %v1938 = vpack.c.b16 %v1631, %v1630
        %v1939 = vpack.c.b16 %v1633, %v1632
        %v1940 = vpack.c.b16 %v1635, %v1634
        %v1941 = vpack.c.b16 %v1637, %v1636
        %v1942 = vpack.c.b16 %v1639, %v1638
        %v1943 = vpack.c.b16 %v1641, %v1640
        %v1944 = vpack.c.b16 %v1643, %v1642
        %v1945 = vpack.c.b16 %v1645, %v1644
        %v1946 = vpack.c.b16 %v1647, %v1646
        %v1947 = vpack.c.b16 %v1649, %v1648
        %v1948 = vpack.c.b16 %v1651, %v1650
        %v1949 = vpack.c.b16 %v1653, %v1652
        %v1950 = vpack.c.b16 %v1655, %v1654
        %v1951 = vpack.c.b16 %v1657, %v1656
        %v1952 = vpack.c.b16 %v1659, %v1658
        %v1953 = vpack.c.b16 %v1661, %v1660
        %v1954 = vpack.c.b16 %v1663, %v1662
        %v1955 = vpack.c.b16 %v1665, %v1664
        %v1956 = vpack.c.b16 %v1667, %v1666
        %v1957 = vpack.c.b16 %v1669, %v1668
        %v1958 = vpack.c.b16 %v1671, %v1670
        %v1959 = vpack.c.b16 %v1673, %v1672
        %v1960 = vpack.c.b16 %v1675, %v1674
        %v1961 = vpack.c.b16 %v1677, %v1676
        %v1962 = vpack.c.b16 %v1679, %v1678
        %v1963 = vpack.c.b16 %v1681, %v1680
        %v1964 = vpack.c.b16 %v1683, %v1682
        %v1965 = vpack.c.b16 %v1685, %v1684
        %v1966 = vpack.c.b16 %v1687, %v1686
        %v1967 = vpack.c.b16 %v1689, %v1688
        %v1968 = vpack.c.b16 %v1691, %v1690
        %v1969 = vpack.c.b16 %v1693, %v1692
        %v1970 = vpack.c.b16 %v1695, %v1694
        %v1971 = vpack.c.b16 %v1697, %v1696
        %v1972 = vpack.c.b16 %v1699, %v1698
        %v1973 = vpack.c.b16 %v1701, %v1700
        %v1974 = vpack.c.b16 %v1703, %v1702
        %v1975 = vpack.c.b16 %v1705, %v1704
        %v1976 = vpack.c.b16 %v1707, %v1706
        %v1977 = vpack.c.b16 %v1709, %v1708
        %v1978 = vpack.c.b16 %v1711, %v1710
        %v1979 = vpack.c.b16 %v1713, %v1712
        %v1980 = vpack.c.b16 %v1715, %v1714
        %v1981 = vpack.c.b16 %v1717, %v1716
        %v1982 = vpack.c.b16 %v1719, %v1718
        %v1983 = vpack.c.b16 %v1721, %v1720
        %v1984 = vpack.c.b16 %v1723, %v1722
        %v1985 = vpack.c.b16 %v1725, %v1724
        %v1986 = vpack.c.b16 %v1727, %v1726
        %v1987 = vpack.c.b16 %v1729, %v1728
        %v1988 = vpack.c.b16 %v1731, %v1730
        %v1989 = vpack.c.b16 %v1733, %v1732
        %v1990 = vpack.c.b16 %v1735, %v1734
        %v1991 = vpack.c.b16 %v1737, %v1736
        %v1992 = vpack.c.b16 %v1739, %v1738
        %v1993 = vpack.c.b16 %v1741, %v1740
        %v1994 = vpack.c.b16 %v1743, %v1742
        %v1995 = vpack.c.b16 %v1745, %v1744
        %v1996 = vpack.c.b16 %v1747, %v1746
        %v1997 = vpack.c.b16 %v1749, %v1748
        %v1998 = vpack.c.b16 %v1751, %v1750
        %v1999 = vpack.c.b16 %v1753, %v1752
        %v2000 = vpack.c.b16 %v1755, %v1754
        %v2001 = vpack.c.b16 %v1757, %v1756
        %v2002 = vpack.c.b16 %v1759, %v1758
        %v2003 = vpack.c.b16 %v1761, %v1760
        %v2004 = vpack.c.b16 %v1763, %v1762
        %v2005 = vpack.c.b16 %v1765, %v1764
        %v2006 = vpack.c.b16 %v1767, %v1766
        %v2007 = vpack.c.b16 %v1769, %v1768
        %v2008 = vpack.c.b16 %v1771, %v1770
        %v2009 = vpack.c.b16 %v1773, %v1772
        %v2010 = vpack.c.b16 %v1775, %v1774
        %v2011 = vpack.c.b16 %v1777, %v1776
        %v2012 = vpack.c.b16 %v1779, %v1778
        %v2013 = vpack.c.b16 %v1781, %v1780
        %v2014 = vpack.c.b16 %v1783, %v1782
        %v2015 = vpack.c.b16 %v1785, %v1784
        %v2016 = vpack.c.b16 %v1787, %v1786
        %v2017 = vpack.c.b16 %v1789, %v1788
        %v2018 = vpack.c.b16 %v1791, %v1790
        %v2019 = vpack.c.b16 %v1793, %v1792
        %v2020 = vpack.c.b16 %v1795, %v1794
        %v2021 = vpack.c.b16 %v1797, %v1796
        %v2022 = vpack.c.b16 %v1799, %v1798
        %v2023 = vpack.c.b16 %v1801, %v1800
        %v2024 = vpack.c.b16 %v1803, %v1802
        %v2025 = vpack.c.b16 %v1805, %v1804
        %v2026 = vpack.c.b16 %v1807, %v1806
        %v2027 = vpack.c.b16 %v1809, %v1808
        %v2028 = vpack.c.b16 %v1811, %v1810
        %v2029 = vpack.c.b16 %v1813, %v1812
        %2246 = vmatprep.subr.bf16.mxu0 0
        %2247 = vmatpush1.bf16.msra.mxu0 %v1814
        %2248 = vmatprep.subr.bf16.mxu0 0
        %2249 = vmatpush1.bf16.msra.mxu0 %v1815
        %2250 = vmatprep.subr.bf16.mxu0 0
        %2251 = vmatpush1.bf16.msra.mxu0 %v1816
        %2252 = vmatprep.subr.bf16.mxu0 0
        %2253 = vmatpush1.bf16.msra.mxu0 %v1817
        %2254 = vmatprep.subr.bf16.mxu0 0
        %2255 = vmatpush1.bf16.msra.mxu0 %v1818
        %2256 = vmatprep.subr.bf16.mxu0 0
        %2257 = vmatpush1.bf16.msra.mxu0 %v1819
        %2258 = vmatprep.subr.bf16.mxu0 0
        %2259 = vmatpush1.bf16.msra.mxu0 %v1820
        %2260 = vmatprep.subr.bf16.mxu0 0
        %2261 = vmatpush1.bf16.msra.mxu0 %v1821
        %2262 = vmatprep.subr.bf16.mxu0 0
        %2263 = vmatpush1.bf16.msra.mxu0 %v1822
        %2264 = vmatprep.subr.bf16.mxu0 0
        %2265 = vmatpush1.bf16.msra.mxu0 %v1823
        %2266 = vmatprep.subr.bf16.mxu0 0
        %2267 = vmatpush1.bf16.msra.mxu0 %v1824
        %2268 = vmatprep.subr.bf16.mxu0 0
        %2269 = vmatpush1.bf16.msra.mxu0 %v1825
        %2270 = vmatprep.subr.bf16.mxu0 0
        %2271 = vmatpush1.bf16.msra.mxu0 %v1826
        %2272 = vmatprep.subr.bf16.mxu0 0
        %2273 = vmatpush1.bf16.msra.mxu0 %v1827
        %2274 = vmatprep.subr.bf16.mxu0 0
        %2275 = vmatpush1.bf16.msra.mxu0 %v1828
        %2276 = vmatprep.subr.bf16.mxu0 0
        %2277 = vmatpush1.bf16.msra.mxu0 %v1829
        %2278 = vmatprep.mubr.bf16.mxu0 %v491
        %2279 = vmatmul.mubr.bf16.gmra.mrb[0].mxu0 %v490
        %v2280 = vpop.f32.mrb[0].mxu0
        %v2281 = vadd.f32 0.0, %v2280
        %v2282 = vpop.f32.mrb[0].mxu0
        %v2283 = vpop.f32.mrb[0].mxu0
        %v2284 = vpop.f32.mrb[0].mxu0
        %2285 = vdwg.mxu0
        %2286 = vmatprep.subr.bf16.mxu0 0
        %2287 = vmatpush1.bf16.msra.mxu0 %v1830
        %2288 = vmatprep.subr.bf16.mxu0 0
        %2289 = vmatpush1.bf16.msra.mxu0 %v1831
        %2290 = vmatprep.subr.bf16.mxu0 0
        %2291 = vmatpush1.bf16.msra.mxu0 %v1832
        %2292 = vmatprep.subr.bf16.mxu0 0
        %2293 = vmatpush1.bf16.msra.mxu0 %v1833
        %2294 = vmatprep.subr.bf16.mxu0 0
        %2295 = vmatpush1.bf16.msra.mxu0 %v1834
        %2296 = vmatprep.subr.bf16.mxu0 0
        %2297 = vmatpush1.bf16.msra.mxu0 %v1835
        %2298 = vmatprep.subr.bf16.mxu0 0
        %2299 = vmatpush1.bf16.msra.mxu0 %v1836
        %2300 = vmatprep.subr.bf16.mxu0 0
        %2301 = vmatpush1.bf16.msra.mxu0 %v1837
        %2302 = vmatprep.subr.bf16.mxu0 0
        %2303 = vmatpush1.bf16.msra.mxu0 %v1838
        %2304 = vmatprep.subr.bf16.mxu0 0
        %2305 = vmatpush1.bf16.msra.mxu0 %v1839
        %2306 = vmatprep.subr.bf16.mxu0 0
        %2307 = vmatpush1.bf16.msra.mxu0 %v1840
        %2308 = vmatprep.subr.bf16.mxu0 0
        %2309 = vmatpush1.bf16.msra.mxu0 %v1841
        %2310 = vmatprep.subr.bf16.mxu0 0
        %2311 = vmatpush1.bf16.msra.mxu0 %v1842
        %2312 = vmatprep.subr.bf16.mxu0 0
        %2313 = vmatpush1.bf16.msra.mxu0 %v1843
        %2314 = vmatprep.subr.bf16.mxu0 0
        %2315 = vmatpush1.bf16.msra.mxu0 %v1844
        %2316 = vmatprep.subr.bf16.mxu0 0
        %2317 = vmatpush1.bf16.msra.mxu0 %v1845
        %2318 = vmatprep.mubr.bf16.mxu0 %v493
        %2319 = vmatmul.mubr.bf16.gmra.mrb[0].mxu0 %v492
        %v2320 = vpop.f32.mrb[0].mxu0
        %v2321 = vadd.f32 %v2281, %v2320
        %v2322 = vpop.f32.mrb[0].mxu0
        %v2323 = vpop.f32.mrb[0].mxu0
        %v2324 = vpop.f32.mrb[0].mxu0
        %2325 = vdwg.mxu0
        %2326 = vmatprep.subr.bf16.mxu0 0
        %2327 = vmatpush1.bf16.msra.mxu0 %v1846
        %2328 = vmatprep.subr.bf16.mxu0 0
        %2329 = vmatpush1.bf16.msra.mxu0 %v1847
        %2330 = vmatprep.subr.bf16.mxu0 0
        %2331 = vmatpush1.bf16.msra.mxu0 %v1848
        %2332 = vmatprep.subr.bf16.mxu0 0
        %2333 = vmatpush1.bf16.msra.mxu0 %v1849
        %2334 = vmatprep.subr.bf16.mxu0 0
        %2335 = vmatpush1.bf16.msra.mxu0 %v1850
        %2336 = vmatprep.subr.bf16.mxu0 0
        %2337 = vmatpush1.bf16.msra.mxu0 %v1851
        %2338 = vmatprep.subr.bf16.mxu0 0
        %2339 = vmatpush1.bf16.msra.mxu0 %v1852
        %2340 = vmatprep.subr.bf16.mxu0 0
        %2341 = vmatpush1.bf16.msra.mxu0 %v1853
        %2342 = vmatprep.subr.bf16.mxu0 0
        %2343 = vmatpush1.bf16.msra.mxu0 %v1854
        %2344 = vmatprep.subr.bf16.mxu0 0
        %2345 = vmatpush1.bf16.msra.mxu0 %v1855
        %2346 = vmatprep.subr.bf16.mxu0 0
        %2347 = vmatpush1.bf16.msra.mxu0 %v1856
        %2348 = vmatprep.subr.bf16.mxu0 0
        %2349 = vmatpush1.bf16.msra.mxu0 %v1857
        %2350 = vmatprep.subr.bf16.mxu0 0
        %2351 = vmatpush1.bf16.msra.mxu0 %v1858
        %2352 = vmatprep.subr.bf16.mxu0 0
        %2353 = vmatpush1.bf16.msra.mxu0 %v1859
        %2354 = vmatprep.subr.bf16.mxu0 0
        %2355 = vmatpush1.bf16.msra.mxu0 %v1860
        %2356 = vmatprep.subr.bf16.mxu0 0
        %2357 = vmatpush1.bf16.msra.mxu0 %v1861
        %2358 = vmatprep.mubr.bf16.mxu0 %v495
        %2359 = vmatmul.mubr.bf16.gmra.mrb[0].mxu0 %v494
        %v2360 = vpop.f32.mrb[0].mxu0
        %v2361 = vadd.f32 %v2321, %v2360
        %v2362 = vpop.f32.mrb[0].mxu0
        %v2363 = vpop.f32.mrb[0].mxu0
        %v2364 = vpop.f32.mrb[0].mxu0
        %2365 = vdwg.mxu0
        %2366 = vmatprep.subr.bf16.mxu0 0
        %2367 = vmatpush1.bf16.msra.mxu0 %v1862
        %2368 = vmatprep.subr.bf16.mxu0 0
        %2369 = vmatpush1.bf16.msra.mxu0 %v1863
        %2370 = vmatprep.subr.bf16.mxu0 0
        %2371 = vmatpush1.bf16.msra.mxu0 %v1864
        %2372 = vmatprep.subr.bf16.mxu0 0
        %2373 = vmatpush1.bf16.msra.mxu0 %v1865
        %2374 = vmatprep.subr.bf16.mxu0 0
        %2375 = vmatpush1.bf16.msra.mxu0 %v1866
        %2376 = vmatprep.subr.bf16.mxu0 0
        %2377 = vmatpush1.bf16.msra.mxu0 %v1867
        %2378 = vmatprep.subr.bf16.mxu0 0
        %2379 = vmatpush1.bf16.msra.mxu0 %v1868
        %2380 = vmatprep.subr.bf16.mxu0 0
        %2381 = vmatpush1.bf16.msra.mxu0 %v1869
        %2382 = vmatprep.subr.bf16.mxu0 0
        %2383 = vmatpush1.bf16.msra.mxu0 %v1870
        %2384 = vmatprep.subr.bf16.mxu0 0
        %2385 = vmatpush1.bf16.msra.mxu0 %v1871
        %2386 = vmatprep.subr.bf16.mxu0 0
        %2387 = vmatpush1.bf16.msra.mxu0 %v1872
        %2388 = vmatprep.subr.bf16.mxu0 0
        %2389 = vmatpush1.bf16.msra.mxu0 %v1873
        %2390 = vmatprep.subr.bf16.mxu0 0
        %2391 = vmatpush1.bf16.msra.mxu0 %v1874
        %2392 = vmatprep.subr.bf16.mxu0 0
        %2393 = vmatpush1.bf16.msra.mxu0 %v1875
        %2394 = vmatprep.subr.bf16.mxu0 0
        %2395 = vmatpush1.bf16.msra.mxu0 %v1876
        %2396 = vmatprep.subr.bf16.mxu0 0
        %2397 = vmatpush1.bf16.msra.mxu0 %v1877
        %2398 = vmatprep.mubr.bf16.mxu0 %v497
        %2399 = vmatmul.mubr.bf16.gmra.mrb[0].mxu0 %v496
        %v2400 = vpop.f32.mrb[0].mxu0
        %v2401 = vadd.f32 %v2361, %v2400
        %v2402 = vpop.f32.mrb[0].mxu0
        %v2403 = vpop.f32.mrb[0].mxu0
        %v2404 = vpop.f32.mrb[0].mxu0
        %2405 = vdwg.mxu0
        %2406 = vmatprep.subr.bf16.mxu0 0
        %2407 = vmatpush1.bf16.msra.mxu0 %v1878
        %2408 = vmatprep.subr.bf16.mxu0 0
        %2409 = vmatpush1.bf16.msra.mxu0 %v1879
        %2410 = vmatprep.subr.bf16.mxu0 0
        %2411 = vmatpush1.bf16.msra.mxu0 %v1880
        %2412 = vmatprep.subr.bf16.mxu0 0
        %2413 = vmatpush1.bf16.msra.mxu0 %v1881
        %2414 = vmatprep.subr.bf16.mxu0 0
        %2415 = vmatpush1.bf16.msra.mxu0 %v1882
        %2416 = vmatprep.subr.bf16.mxu0 0
        %2417 = vmatpush1.bf16.msra.mxu0 %v1883
        %2418 = vmatprep.subr.bf16.mxu0 0
        %2419 = vmatpush1.bf16.msra.mxu0 %v1884
        %2420 = vmatprep.subr.bf16.mxu0 0
        %2421 = vmatpush1.bf16.msra.mxu0 %v1885
        %2422 = vmatprep.subr.bf16.mxu0 0
        %2423 = vmatpush1.bf16.msra.mxu0 %v1886
        %2424 = vmatprep.subr.bf16.mxu0 0
        %2425 = vmatpush1.bf16.msra.mxu0 %v1887
        %2426 = vmatprep.subr.bf16.mxu0 0
        %2427 = vmatpush1.bf16.msra.mxu0 %v1888
        %2428 = vmatprep.subr.bf16.mxu0 0
        %2429 = vmatpush1.bf16.msra.mxu0 %v1889
        %2430 = vmatprep.subr.bf16.mxu0 0
        %2431 = vmatpush1.bf16.msra.mxu0 %v1890
        %2432 = vmatprep.subr.bf16.mxu0 0
        %2433 = vmatpush1.bf16.msra.mxu0 %v1891
        %2434 = vmatprep.subr.bf16.mxu0 0
        %2435 = vmatpush1.bf16.msra.mxu0 %v1892
        %2436 = vmatprep.subr.bf16.mxu0 0
        %2437 = vmatpush1.bf16.msra.mxu0 %v1893
        %2438 = vmatprep.mubr.bf16.mxu0 %v499
        %2439 = vmatmul.mubr.bf16.gmra.mrb[0].mxu0 %v498
        %v2440 = vpop.f32.mrb[0].mxu0
        %v2441 = vadd.f32 %v2401, %v2440
        %v2442 = vpop.f32.mrb[0].mxu0
        %v2443 = vpop.f32.mrb[0].mxu0
        %v2444 = vpop.f32.mrb[0].mxu0
        %2445 = vdwg.mxu0
        %2446 = vmatprep.subr.bf16.mxu0 0
        %2447 = vmatpush1.bf16.msra.mxu0 %v1894
        %2448 = vmatprep.subr.bf16.mxu0 0
        %2449 = vmatpush1.bf16.msra.mxu0 %v1895
        %2450 = vmatprep.subr.bf16.mxu0 0
        %2451 = vmatpush1.bf16.msra.mxu0 %v1896
        %2452 = vmatprep.subr.bf16.mxu0 0
        %2453 = vmatpush1.bf16.msra.mxu0 %v1897
        %2454 = vmatprep.subr.bf16.mxu0 0
        %2455 = vmatpush1.bf16.msra.mxu0 %v1898
        %2456 = vmatprep.subr.bf16.mxu0 0
        %2457 = vmatpush1.bf16.msra.mxu0 %v1899
        %2458 = vmatprep.subr.bf16.mxu0 0
        %2459 = vmatpush1.bf16.msra.mxu0 %v1900
        %2460 = vmatprep.subr.bf16.mxu0 0
        %2461 = vmatpush1.bf16.msra.mxu0 %v1901
        %2462 = vmatprep.subr.bf16.mxu0 0
        %2463 = vmatpush1.bf16.msra.mxu0 %v1902
        %2464 = vmatprep.subr.bf16.mxu0 0
        %2465 = vmatpush1.bf16.msra.mxu0 %v1903
        %2466 = vmatprep.subr.bf16.mxu0 0
        %2467 = vmatpush1.bf16.msra.mxu0 %v1904
        %2468 = vmatprep.subr.bf16.mxu0 0
        %2469 = vmatpush1.bf16.msra.mxu0 %v1905
        %2470 = vmatprep.subr.bf16.mxu0 0
        %2471 = vmatpush1.bf16.msra.mxu0 %v1906
        %2472 = vmatprep.subr.bf16.mxu0 0
        %2473 = vmatpush1.bf16.msra.mxu0 %v1907
        %2474 = vmatprep.subr.bf16.mxu0 0
        %2475 = vmatpush1.bf16.msra.mxu0 %v1908
        %2476 = vmatprep.subr.bf16.mxu0 0
        %2477 = vmatpush1.bf16.msra.mxu0 %v1909
        %2478 = vmatprep.mubr.bf16.mxu0 %v501
        %2479 = vmatmul.mubr.bf16.gmra.mrb[0].mxu0 %v500
        %v2480 = vpop.f32.mrb[0].mxu0
        %v2481 = vadd.f32 %v2441, %v2480
        %v2482 = vpop.f32.mrb[0].mxu0
        %v2483 = vpop.f32.mrb[0].mxu0
        %v2484 = vpop.f32.mrb[0].mxu0
        %2485 = vdwg.mxu0
        %2486 = vmatprep.subr.bf16.mxu0 0
        %2487 = vmatpush1.bf16.msra.mxu0 %v1910
        %2488 = vmatprep.subr.bf16.mxu0 0
        %2489 = vmatpush1.bf16.msra.mxu0 %v1911
        %2490 = vmatprep.subr.bf16.mxu0 0
        %2491 = vmatpush1.bf16.msra.mxu0 %v1912
        %2492 = vmatprep.subr.bf16.mxu0 0
        %2493 = vmatpush1.bf16.msra.mxu0 %v1913
        %2494 = vmatprep.subr.bf16.mxu0 0
        %2495 = vmatpush1.bf16.msra.mxu0 %v1914
        %2496 = vmatprep.subr.bf16.mxu0 0
        %2497 = vmatpush1.bf16.msra.mxu0 %v1915
        %2498 = vmatprep.subr.bf16.mxu0 0
        %2499 = vmatpush1.bf16.msra.mxu0 %v1916
        %2500 = vmatprep.subr.bf16.mxu0 0
        %2501 = vmatpush1.bf16.msra.mxu0 %v1917
        %2502 = vmatprep.subr.bf16.mxu0 0
        %2503 = vmatpush1.bf16.msra.mxu0 %v1918
        %2504 = vmatprep.subr.bf16.mxu0 0
        %2505 = vmatpush1.bf16.msra.mxu0 %v1919
        %2506 = vmatprep.subr.bf16.mxu0 0
        %2507 = vmatpush1.bf16.msra.mxu0 %v1920
        %2508 = vmatprep.subr.bf16.mxu0 0
        %2509 = vmatpush1.bf16.msra.mxu0 %v1921
        %2510 = vmatprep.subr.bf16.mxu0 0
        %2511 = vmatpush1.bf16.msra.mxu0 %v1922
        %2512 = vmatprep.subr.bf16.mxu0 0
        %2513 = vmatpush1.bf16.msra.mxu0 %v1923
        %2514 = vmatprep.subr.bf16.mxu0 0
        %2515 = vmatpush1.bf16.msra.mxu0 %v1924
        %2516 = vmatprep.subr.bf16.mxu0 0
        %2517 = vmatpush1.bf16.msra.mxu0 %v1925
        %2518 = vmatprep.mubr.bf16.mxu0 %v503
        %2519 = vmatmul.mubr.bf16.gmra.mrb[0].mxu0 %v502
        %v2520 = vpop.f32.mrb[0].mxu0
        %v2521 = vadd.f32 %v2481, %v2520
        %v2522 = vpop.f32.mrb[0].mxu0
        %v2523 = vpop.f32.mrb[0].mxu0
        %v2524 = vpop.f32.mrb[0].mxu0
        %2525 = vdwg.mxu0
        %2526 = vmatprep.subr.bf16.mxu0 0
        %2527 = vmatpush1.bf16.msra.mxu0 %v1926
        %2528 = vmatprep.subr.bf16.mxu0 0
        %2529 = vmatpush1.bf16.msra.mxu0 %v1927
        %2530 = vmatprep.subr.bf16.mxu0 0
        %2531 = vmatpush1.bf16.msra.mxu0 %v1928
        %2532 = vmatprep.subr.bf16.mxu0 0
        %2533 = vmatpush1.bf16.msra.mxu0 %v1929
        %2534 = vmatprep.subr.bf16.mxu0 0
        %2535 = vmatpush1.bf16.msra.mxu0 %v1930
        %2536 = vmatprep.subr.bf16.mxu0 0
        %2537 = vmatpush1.bf16.msra.mxu0 %v1931
        %2538 = vmatprep.subr.bf16.mxu0 0
        %2539 = vmatpush1.bf16.msra.mxu0 %v1932
        %2540 = vmatprep.subr.bf16.mxu0 0
        %2541 = vmatpush1.bf16.msra.mxu0 %v1933
        %2542 = vmatprep.subr.bf16.mxu0 0
        %2543 = vmatpush1.bf16.msra.mxu0 %v1934
        %2544 = vmatprep.subr.bf16.mxu0 0
        %2545 = vmatpush1.bf16.msra.mxu0 %v1935
        %2546 = vmatprep.subr.bf16.mxu0 0
        %2547 = vmatpush1.bf16.msra.mxu0 %v1936
        %2548 = vmatprep.subr.bf16.mxu0 0
        %2549 = vmatpush1.bf16.msra.mxu0 %v1937
        %2550 = vmatprep.subr.bf16.mxu0 0
        %2551 = vmatpush1.bf16.msra.mxu0 %v1938
        %2552 = vmatprep.subr.bf16.mxu0 0
        %2553 = vmatpush1.bf16.msra.mxu0 %v1939
        %2554 = vmatprep.subr.bf16.mxu0 0
        %2555 = vmatpush1.bf16.msra.mxu0 %v1940
        %2556 = vmatprep.subr.bf16.mxu0 0
        %2557 = vmatpush1.bf16.msra.mxu0 %v1941
        %2558 = vmatprep.mubr.bf16.mxu0 %v505
        %2559 = vmatmul.mubr.bf16.gmra.mrb[0].mxu0 %v504
        %v2560 = vpop.f32.mrb[0].mxu0
        %v2561 = vadd.f32 %v2521, %v2560
        %v2562 = vpop.f32.mrb[0].mxu0
        %v2563 = vpop.f32.mrb[0].mxu0
        %v2564 = vpop.f32.mrb[0].mxu0
        %2565 = vdwg.mxu0
        %2566 = vmatprep.subr.bf16.mxu0 0
        %2567 = vmatpush1.bf16.msra.mxu0 %v1942
        %2568 = vmatprep.subr.bf16.mxu0 0
        %2569 = vmatpush1.bf16.msra.mxu0 %v1943
        %2570 = vmatprep.subr.bf16.mxu0 0
        %2571 = vmatpush1.bf16.msra.mxu0 %v1944
        %2572 = vmatprep.subr.bf16.mxu0 0
        %2573 = vmatpush1.bf16.msra.mxu0 %v1945
        %2574 = vmatprep.subr.bf16.mxu0 0
        %2575 = vmatpush1.bf16.msra.mxu0 %v1946
        %2576 = vmatprep.subr.bf16.mxu0 0
        %2577 = vmatpush1.bf16.msra.mxu0 %v1947
        %2578 = vmatprep.subr.bf16.mxu0 0
        %2579 = vmatpush1.bf16.msra.mxu0 %v1948
        %2580 = vmatprep.subr.bf16.mxu0 0
        %2581 = vmatpush1.bf16.msra.mxu0 %v1949
        %2582 = vmatprep.subr.bf16.mxu0 0
        %2583 = vmatpush1.bf16.msra.mxu0 %v1950
        %2584 = vmatprep.subr.bf16.mxu0 0
        %2585 = vmatpush1.bf16.msra.mxu0 %v1951
        %2586 = vmatprep.subr.bf16.mxu0 0
        %2587 = vmatpush1.bf16.msra.mxu0 %v1952
        %2588 = vmatprep.subr.bf16.mxu0 0
        %2589 = vmatpush1.bf16.msra.mxu0 %v1953
        %2590 = vmatprep.subr.bf16.mxu0 0
        %2591 = vmatpush1.bf16.msra.mxu0 %v1954
        %2592 = vmatprep.subr.bf16.mxu0 0
        %2593 = vmatpush1.bf16.msra.mxu0 %v1955
        %2594 = vmatprep.subr.bf16.mxu0 0
        %2595 = vmatpush1.bf16.msra.mxu0 %v1956
        %2596 = vmatprep.subr.bf16.mxu0 0
        %2597 = vmatpush1.bf16.msra.mxu0 %v1957
        %2598 = vmatprep.mubr.bf16.mxu0 %v507
        %2599 = vmatmul.mubr.bf16.gmra.mrb[0].mxu0 %v506
        %v2600 = vpop.f32.mrb[0].mxu0
        %v2601 = vadd.f32 %v2561, %v2600
        %v2602 = vpop.f32.mrb[0].mxu0
        %v2603 = vpop.f32.mrb[0].mxu0
        %v2604 = vpop.f32.mrb[0].mxu0
        %2605 = vdwg.mxu0
        %2606 = vmatprep.subr.bf16.mxu0 0
        %2607 = vmatpush1.bf16.msra.mxu0 %v1958
        %2608 = vmatprep.subr.bf16.mxu0 0
        %2609 = vmatpush1.bf16.msra.mxu0 %v1959
        %2610 = vmatprep.subr.bf16.mxu0 0
        %2611 = vmatpush1.bf16.msra.mxu0 %v1960
        %2612 = vmatprep.subr.bf16.mxu0 0
        %2613 = vmatpush1.bf16.msra.mxu0 %v1961
        %2614 = vmatprep.subr.bf16.mxu0 0
        %2615 = vmatpush1.bf16.msra.mxu0 %v1962
        %2616 = vmatprep.subr.bf16.mxu0 0
        %2617 = vmatpush1.bf16.msra.mxu0 %v1963
        %2618 = vmatprep.subr.bf16.mxu0 0
        %2619 = vmatpush1.bf16.msra.mxu0 %v1964
        %2620 = vmatprep.subr.bf16.mxu0 0
        %2621 = vmatpush1.bf16.msra.mxu0 %v1965
        %2622 = vmatprep.subr.bf16.mxu0 0
        %2623 = vmatpush1.bf16.msra.mxu0 %v1966
        %2624 = vmatprep.subr.bf16.mxu0 0
        %2625 = vmatpush1.bf16.msra.mxu0 %v1967
        %2626 = vmatprep.subr.bf16.mxu0 0
        %2627 = vmatpush1.bf16.msra.mxu0 %v1968
        %2628 = vmatprep.subr.bf16.mxu0 0
        %2629 = vmatpush1.bf16.msra.mxu0 %v1969
        %2630 = vmatprep.subr.bf16.mxu0 0
        %2631 = vmatpush1.bf16.msra.mxu0 %v1970
        %2632 = vmatprep.subr.bf16.mxu0 0
        %2633 = vmatpush1.bf16.msra.mxu0 %v1971
        %2634 = vmatprep.subr.bf16.mxu0 0
        %2635 = vmatpush1.bf16.msra.mxu0 %v1972
        %2636 = vmatprep.subr.bf16.mxu0 0
        %2637 = vmatpush1.bf16.msra.mxu0 %v1973
        %2638 = vmatprep.mubr.bf16.mxu0 %v509
        %2639 = vmatmul.mubr.bf16.gmra.mrb[0].mxu0 %v508
        %v2640 = vpop.f32.mrb[0].mxu0
        %v2641 = vadd.f32 %v2601, %v2640
        %v2642 = vpop.f32.mrb[0].mxu0
        %v2643 = vpop.f32.mrb[0].mxu0
        %v2644 = vpop.f32.mrb[0].mxu0
        %2645 = vdwg.mxu0
        %2646 = vmatprep.subr.bf16.mxu0 0
        %2647 = vmatpush1.bf16.msra.mxu0 %v1974
        %2648 = vmatprep.subr.bf16.mxu0 0
        %2649 = vmatpush1.bf16.msra.mxu0 %v1975
        %2650 = vmatprep.subr.bf16.mxu0 0
        %2651 = vmatpush1.bf16.msra.mxu0 %v1976
        %2652 = vmatprep.subr.bf16.mxu0 0
        %2653 = vmatpush1.bf16.msra.mxu0 %v1977
        %2654 = vmatprep.subr.bf16.mxu0 0
        %2655 = vmatpush1.bf16.msra.mxu0 %v1978
        %2656 = vmatprep.subr.bf16.mxu0 0
        %2657 = vmatpush1.bf16.msra.mxu0 %v1979
        %2658 = vmatprep.subr.bf16.mxu0 0
        %2659 = vmatpush1.bf16.msra.mxu0 %v1980
        %2660 = vmatprep.subr.bf16.mxu0 0
        %2661 = vmatpush1.bf16.msra.mxu0 %v1981
        %2662 = vmatprep.subr.bf16.mxu0 0
        %2663 = vmatpush1.bf16.msra.mxu0 %v1982
        %2664 = vmatprep.subr.bf16.mxu0 0
        %2665 = vmatpush1.bf16.msra.mxu0 %v1983
        %2666 = vmatprep.subr.bf16.mxu0 0
        %2667 = vmatpush1.bf16.msra.mxu0 %v1984
        %2668 = vmatprep.subr.bf16.mxu0 0
        %2669 = vmatpush1.bf16.msra.mxu0 %v1985
        %2670 = vmatprep.subr.bf16.mxu0 0
        %2671 = vmatpush1.bf16.msra.mxu0 %v1986
        %2672 = vmatprep.subr.bf16.mxu0 0
        %2673 = vmatpush1.bf16.msra.mxu0 %v1987
        %2674 = vmatprep.subr.bf16.mxu0 0
        %2675 = vmatpush1.bf16.msra.mxu0 %v1988
        %2676 = vmatprep.subr.bf16.mxu0 0
        %2677 = vmatpush1.bf16.msra.mxu0 %v1989
        %2678 = vmatprep.mubr.bf16.mxu0 %v511
        %2679 = vmatmul.mubr.bf16.gmra.mrb[0].mxu0 %v510
        %v2680 = vpop.f32.mrb[0].mxu0
        %v2681 = vadd.f32 %v2641, %v2680
        %v2682 = vpop.f32.mrb[0].mxu0
        %v2683 = vpop.f32.mrb[0].mxu0
        %v2684 = vpop.f32.mrb[0].mxu0
        %2685 = vdwg.mxu0
        %2686 = vmatprep.subr.bf16.mxu0 0
        %2687 = vmatpush1.bf16.msra.mxu0 %v1990
        %2688 = vmatprep.subr.bf16.mxu0 0
        %2689 = vmatpush1.bf16.msra.mxu0 %v1991
        %2690 = vmatprep.subr.bf16.mxu0 0
        %2691 = vmatpush1.bf16.msra.mxu0 %v1992
        %2692 = vmatprep.subr.bf16.mxu0 0
        %2693 = vmatpush1.bf16.msra.mxu0 %v1993
        %2694 = vmatprep.subr.bf16.mxu0 0
        %2695 = vmatpush1.bf16.msra.mxu0 %v1994
        %2696 = vmatprep.subr.bf16.mxu0 0
        %2697 = vmatpush1.bf16.msra.mxu0 %v1995
        %2698 = vmatprep.subr.bf16.mxu0 0
        %2699 = vmatpush1.bf16.msra.mxu0 %v1996
        %2700 = vmatprep.subr.bf16.mxu0 0
        %2701 = vmatpush1.bf16.msra.mxu0 %v1997
        %2702 = vmatprep.subr.bf16.mxu0 0
        %2703 = vmatpush1.bf16.msra.mxu0 %v1998
        %2704 = vmatprep.subr.bf16.mxu0 0
        %2705 = vmatpush1.bf16.msra.mxu0 %v1999
        %2706 = vmatprep.subr.bf16.mxu0 0
        %2707 = vmatpush1.bf16.msra.mxu0 %v2000
        %2708 = vmatprep.subr.bf16.mxu0 0
        %2709 = vmatpush1.bf16.msra.mxu0 %v2001
        %2710 = vmatprep.subr.bf16.mxu0 0
        %2711 = vmatpush1.bf16.msra.mxu0 %v2002
        %2712 = vmatprep.subr.bf16.mxu0 0
        %2713 = vmatpush1.bf16.msra.mxu0 %v2003
        %2714 = vmatprep.subr.bf16.mxu0 0
        %2715 = vmatpush1.bf16.msra.mxu0 %v2004
        %2716 = vmatprep.subr.bf16.mxu0 0
        %2717 = vmatpush1.bf16.msra.mxu0 %v2005
        %2718 = vmatprep.mubr.bf16.mxu0 %v513
        %2719 = vmatmul.mubr.bf16.gmra.mrb[0].mxu0 %v512
        %v2720 = vpop.f32.mrb[0].mxu0
        %v2721 = vadd.f32 %v2681, %v2720
        %v2722 = vpop.f32.mrb[0].mxu0
        %v2723 = vpop.f32.mrb[0].mxu0
        %v2724 = vpop.f32.mrb[0].mxu0
        %2725 = vdwg.mxu0
        %2726 = vmatprep.subr.bf16.mxu0 0
        %2727 = vmatpush1.bf16.msra.mxu0 %v2006
        %2728 = vmatprep.subr.bf16.mxu0 0
        %2729 = vmatpush1.bf16.msra.mxu0 %v2007
        %2730 = vmatprep.subr.bf16.mxu0 0
        %2731 = vmatpush1.bf16.msra.mxu0 %v2008
        %2732 = vmatprep.subr.bf16.mxu0 0
        %2733 = vmatpush1.bf16.msra.mxu0 %v2009
        %2734 = vmatprep.subr.bf16.mxu0 0
        %2735 = vmatpush1.bf16.msra.mxu0 %v2010
        %2736 = vmatprep.subr.bf16.mxu0 0
        %2737 = vmatpush1.bf16.msra.mxu0 %v2011
        %2738 = vmatprep.subr.bf16.mxu0 0
        %2739 = vmatpush1.bf16.msra.mxu0 %v2012
        %2740 = vmatprep.subr.bf16.mxu0 0
        %2741 = vmatpush1.bf16.msra.mxu0 %v2013
        %2742 = vmatprep.subr.bf16.mxu0 0
        %2743 = vmatpush1.bf16.msra.mxu0 %v2014
        %2744 = vmatprep.subr.bf16.mxu0 0
        %2745 = vmatpush1.bf16.msra.mxu0 %v2015
        %2746 = vmatprep.subr.bf16.mxu0 0
        %2747 = vmatpush1.bf16.msra.mxu0 %v2016
        %2748 = vmatprep.subr.bf16.mxu0 0
        %2749 = vmatpush1.bf16.msra.mxu0 %v2017
        %2750 = vmatprep.subr.bf16.mxu0 0
        %2751 = vmatpush1.bf16.msra.mxu0 %v2018
        %2752 = vmatprep.subr.bf16.mxu0 0
        %2753 = vmatpush1.bf16.msra.mxu0 %v2019
        %2754 = vmatprep.subr.bf16.mxu0 0
        %2755 = vmatpush1.bf16.msra.mxu0 %v2020
        %2756 = vmatprep.subr.bf16.mxu0 0
        %2757 = vmatpush1.bf16.msra.mxu0 %v2021
        %2758 = vmatprep.mubr.bf16.mxu0 %v515
        %2759 = vmatmul.mubr.bf16.gmra.mrb[0].mxu0 %v514
        %v2760 = vpop.f32.mrb[0].mxu0
        %v2761 = vadd.f32 %v2721, %v2760
        %v2762 = vpop.f32.mrb[0].mxu0
        %v2763 = vpop.f32.mrb[0].mxu0
        %v2764 = vpop.f32.mrb[0].mxu0
        %2765 = vdwg.mxu0
        %2766 = vmatprep.subr.bf16.mxu0 0
        %2767 = vmatpush1.bf16.msra.mxu0 %v2022
        %2768 = vmatprep.subr.bf16.mxu0 0
        %2769 = vmatpush1.bf16.msra.mxu0 %v2023
        %2770 = vmatprep.subr.bf16.mxu0 0
        %2771 = vmatpush1.bf16.msra.mxu0 %v2024
        %2772 = vmatprep.subr.bf16.mxu0 0
        %2773 = vmatpush1.bf16.msra.mxu0 %v2025
        %2774 = vmatprep.subr.bf16.mxu0 0
        %2775 = vmatpush1.bf16.msra.mxu0 %v2026
        %2776 = vmatprep.subr.bf16.mxu0 0
        %2777 = vmatpush1.bf16.msra.mxu0 %v2027
        %2778 = vmatprep.subr.bf16.mxu0 0
        %2779 = vmatpush1.bf16.msra.mxu0 %v2028
        %2780 = vmatprep.subr.bf16.mxu0 0
        %2781 = vmatpush1.bf16.msra.mxu0 %v2029
        %2782 = vmatprep.subr.bf16.mxu0 0
        %2783 = vmatpush1.bf16.msra.mxu0 0
        %2784 = vmatprep.subr.bf16.mxu0 0
        %2785 = vmatpush1.bf16.msra.mxu0 0
        %2786 = vmatprep.subr.bf16.mxu0 0
        %2787 = vmatpush1.bf16.msra.mxu0 0
        %2788 = vmatprep.subr.bf16.mxu0 0
        %2789 = vmatpush1.bf16.msra.mxu0 0
        %2790 = vmatprep.subr.bf16.mxu0 0
        %2791 = vmatpush1.bf16.msra.mxu0 0
        %2792 = vmatprep.subr.bf16.mxu0 0
        %2793 = vmatpush1.bf16.msra.mxu0 0
        %2794 = vmatprep.subr.bf16.mxu0 0
        %2795 = vmatpush1.bf16.msra.mxu0 0
        %2796 = vmatprep.subr.bf16.mxu0 0
        %2797 = vmatpush1.bf16.msra.mxu0 0
        %2798 = vmatprep.mubr.bf16.mxu0 0
        %2799 = vmatmul.mubr.bf16.gmra.mrb[0].mxu0 %v516
        %v2800 = vpop.f32.mrb[0].mxu0
        %v2801 = vadd.f32 %v2761, %v2800
        %v2802 = vpop.f32.mrb[0].mxu0
        %v2803 = vpop.f32.mrb[0].mxu0
        %v2804 = vpop.f32.mrb[0].mxu0
        %2805 = vdwg.mxu0
        %v2806 = vadd.f32 %v517, %v2801
        %2807 = vst [vmem:[#allocation2] sm:$0x3] %v2806
        %p2808 = scmp.eq.s32.totalorder %s19, 3
        // Predicated region
        $region53: #{_mlcnn_forward.19} parent=47 // pred_check
          %p2809 = pneg %p2808
        $region54: #{_mlcnn_forward.19} parent=47 // pred_check_branch
          %2811 = sbr.rel (%p2809) target = $region56
        $region55: #{_mlcnn_forward.19} parent=47 // pred_region
          %v2812 = vld [vmem:[#allocation2] sm:$0x3]
          %v2813 = vld [vmem:[%s3] sm:$0x1]
          %v2815 = vlaneseq
          %v2816 = vshrl.u32 %v2815, 7
          %v2817 = vsub.s32 0, %v2816
          %v2818 = vrot.slane %v2813, %v2817
          %v2820 = vadd.f32 %v2812, %v2818
          %v2821 = vld [vmem:[%s4] sm:$0x3]
          %v2822 = vmul.f32 %v2820, %v2821
          %v2823 = vpack.c.bf16 %v2822, %v2822
          %v2824 = vld [vmem:[%s5] sm:$0xf]
          %v2825 = vld [vmem:[%s5 + $0x4] sm:$0xf]
          %v2826 = vld [vmem:[%s5 + $0x8] sm:$0xf]
          %v2827 = vld [vmem:[%s5 + $0xc] sm:$0xf]
          %v2828 = vld [vmem:[%s5 + $0x10] sm:$0xf]
          %v2829 = vld [vmem:[%s5 + $0x14] sm:$0xf]
          %v2830 = vld [vmem:[%s5 + $0x18] sm:$0xf]
          %v2831 = vld [vmem:[%s5 + $0x1c] sm:$0xf]
          %v2832 = vld [vmem:[%s5 + $0x20] sm:$0xf]
          %v2833 = vld [vmem:[%s5 + $0x24] sm:$0xf]
          %v2834 = vld [vmem:[%s5 + $0x28] sm:$0xf]
          %v2835 = vld [vmem:[%s5 + $0x2c] sm:$0xf]
          %v2836 = vld [vmem:[%s5 + $0x30] sm:$0xf]
          %v2837 = vld [vmem:[%s5 + $0x34] sm:$0xf]
          %v2838 = vld [vmem:[%s5 + $0x38] sm:$0xf]
          %v2839 = vld [vmem:[%s5 + $0x3c] sm:$0xf]
          %v2840 = vld [vmem:[%s6] sm:$0x1]
          %v2842 = vlaneseq
          %v2843 = vshrl.u32 %v2842, 7
          %v2844 = vsub.s32 0, %v2843
          %v2845 = vrot.slane %v2840, %v2844
          %v2863 = vunpack.c.l.b16 %v2824
          %v2864 = vunpack.c.l.b16 %v2825
          %v2865 = vunpack.c.l.b16 %v2826
          %v2866 = vunpack.c.l.b16 %v2827
          %v2867 = vunpack.c.l.b16 %v2828
          %v2868 = vunpack.c.l.b16 %v2829
          %v2869 = vunpack.c.l.b16 %v2830
          %v2870 = vunpack.c.l.b16 %v2831
          %v2871 = vunpack.c.l.b16 %v2832
          %v2872 = vunpack.c.l.b16 %v2833
          %v2873 = vunpack.c.l.b16 %v2834
          %v2874 = vunpack.c.l.b16 %v2835
          %v2875 = vunpack.c.l.b16 %v2836
          %v2876 = vunpack.c.l.b16 %v2837
          %v2877 = vunpack.c.l.b16 %v2838
          %v2878 = vunpack.c.l.b16 %v2839
          %v2879 = vpack.c.b16 %v2864, %v2863
          %v2880 = vpack.c.b16 %v2866, %v2865
          %v2881 = vpack.c.b16 %v2868, %v2867
          %v2882 = vpack.c.b16 %v2870, %v2869
          %v2883 = vpack.c.b16 %v2872, %v2871
          %v2884 = vpack.c.b16 %v2874, %v2873
          %v2885 = vpack.c.b16 %v2876, %v2875
          %v2886 = vpack.c.b16 %v2878, %v2877
          %2895 = vmatprep.subr.bf16.mxu0 0
          %2896 = vmatpush1.bf16.msra.mxu0 %v2879
          %2897 = vmatprep.subr.bf16.mxu0 0
          %2898 = vmatpush1.bf16.msra.mxu0 %v2880
          %2899 = vmatprep.subr.bf16.mxu0 0
          %2900 = vmatpush1.bf16.msra.mxu0 %v2881
          %2901 = vmatprep.subr.bf16.mxu0 0
          %2902 = vmatpush1.bf16.msra.mxu0 %v2882
          %2903 = vmatprep.subr.bf16.mxu0 0
          %2904 = vmatpush1.bf16.msra.mxu0 %v2883
          %2905 = vmatprep.subr.bf16.mxu0 0
          %2906 = vmatpush1.bf16.msra.mxu0 %v2884
          %2907 = vmatprep.subr.bf16.mxu0 0
          %2908 = vmatpush1.bf16.msra.mxu0 %v2885
          %2909 = vmatprep.subr.bf16.mxu0 0
          %2910 = vmatpush1.bf16.msra.mxu0 %v2886
          %2911 = vmatprep.subr.bf16.mxu0 0
          %2912 = vmatpush1.bf16.msra.mxu0 0
          %2913 = vmatprep.subr.bf16.mxu0 0
          %2914 = vmatpush1.bf16.msra.mxu0 0
          %2915 = vmatprep.subr.bf16.mxu0 0
          %2916 = vmatpush1.bf16.msra.mxu0 0
          %2917 = vmatprep.subr.bf16.mxu0 0
          %2918 = vmatpush1.bf16.msra.mxu0 0
          %2919 = vmatprep.subr.bf16.mxu0 0
          %2920 = vmatpush1.bf16.msra.mxu0 0
          %2921 = vmatprep.subr.bf16.mxu0 0
          %2922 = vmatpush1.bf16.msra.mxu0 0
          %2923 = vmatprep.subr.bf16.mxu0 0
          %2924 = vmatpush1.bf16.msra.mxu0 0
          %2925 = vmatprep.subr.bf16.mxu0 0
          %2926 = vmatpush1.bf16.msra.mxu0 0
          %2927 = vmatprep.mubr.bf16.mxu0 0
          %2928 = vmatmul.mubr.bf16.gmra.mrb[0].mxu0 %v2823
          %v2929 = vpop.f32.mrb[0].mxu0
          %v2930 = vadd.f32 %v2845, %v2929
          %v2931 = vpop.f32.mrb[0].mxu0
          %v2932 = vpop.f32.mrb[0].mxu0
          %v2933 = vpop.f32.mrb[0].mxu0
          %2934 = vdwg.mxu0
          %vm2935 = vcmask 74752
          %2936 = vst.msk [vmem:[#allocation3] sm:$0x3] %vm2935, %v2930
        $region56: #{_mlcnn_forward.19} parent=47 // pred_fallthru
          _
        // Predicated region
        $region57: #{_mlcnn_forward.19} parent=47 // pred_check
          %p2937 = pneg %p194
        $region58: #{_mlcnn_forward.19} parent=47 // pred_check_branch
          %2939 = sbr.rel (%p2937) target = $region60
        $region59: #{_mlcnn_forward.19} parent=47 // pred_region
          %s2941 = ssub.s32 32, 32
          %2942 = vsyncadd [#allocation4], %s2941
          %s2944 = sshll.u32 [#allocation3], 4
          %s2945 = int_to_ptr.vmem [resolvable:$true] %s2944
          %2947 = dma.vmem_to_hbm [thread:$0]  %s2945, 32, %s7, [#allocation4]
        $region60: #{_mlcnn_forward.19} parent=47 // pred_fallthru
          _
        // Predicated region
        $region61: #{_mlcnn_forward.19} parent=47 // pred_check
          %p2948 = pneg %p194
        $region62: #{_mlcnn_forward.19} parent=47 // pred_check_branch
          %2950 = sbr.rel (%p2948) target = $region64
        $region63: #{_mlcnn_forward.19} parent=47 // pred_region
          %2951 = dma.done [#allocation4], 32
        $region64: #{_mlcnn_forward.19} parent=47 // pred_fallthru
          _
      $region48: #{_mlcnn_forward.19} parent=5 // pred_fallthru
        _
      %p2952 = scmp.le.s32.totalorder 2, %s14
      // Predicated region
      $region65: #{_mlcnn_forward.19} parent=5 // pred_check
        %p2953 = pneg %p2952
      $region66: #{_mlcnn_forward.19} parent=5 // pred_check_branch
        %2955 = sbr.rel (%p2953) target = $region68
      $region67: #{_mlcnn_forward.19} parent=5 // pred_region
        %s2956 = ssub.s32 %s14, 2
      $region68: #{_mlcnn_forward.19} parent=5 // pred_fallthru
        _
    $region6: #{_mlcnn_forward.19} parent=1 // loop_footer
      %s18 = sadd.s32 1, %s14
    $region7: #{_mlcnn_forward.19} parent=1 // loop_footer_branch
      %13 = sbr.rel target = $region3
    $region8: #{_mlcnn_forward.19} parent=1 // loop_exit
      _
    %2957 = vsyncpa [#allocation4], 1
    %s2958 = scalar_lea.sflag [#allocation4], 1
    %2959 = vsyncpa %s2958, 1

</llo_original>
